<compile_context>
chip_gen: v5e
topology: v5e:2x2
jax: 0.10.0
libtpu: 0.0.40
codegen_flags: <defaults>
</compile_context>

<pallas_src>
import functools

import jax
import jax.numpy as jnp
from jax.experimental import pallas as pl
from jax.experimental.pallas import tpu as pltpu


def _video_quantizer_kernel(x_ref, win_ref, cbt_ref, cb_ref, cnh_ref, wout_ref,
                            out_ref, idx_ref, *, num_quantizers, codebook_size,
                            eps):
    """x_ref: (TN, D)        win_ref/wout_ref: (1, D) f32 RMSNorm weights
    cbt_ref: (D, Q*K) f32  block-diagonal transposed codebooks (distance matmul)
    cb_ref:  (Q*K, D) f32  block-diagonal codebooks            (gather matmul)
    cnh_ref: (1, Q*K) f32  precomputed 0.5 * ||c||^2
    out_ref: (TN, D)       idx_ref: (Q, TN) int32."""
    TN, D = x_ref.shape
    Q = num_quantizers
    K = codebook_size
    QK = Q * K

    # ---- input RMSNorm (math in f32 on the VPU) ----
    x = x_ref[...].astype(jnp.float32)
    ms = jnp.mean(x * x, axis=-1, keepdims=True)
    xn = x * jax.lax.rsqrt(ms + eps) * win_ref[...]

    # ---- ONE fused lane-dense distance matmul (block-diagonal codebook^T) ----
    # argmin ||x - c||^2 == argmin (0.5*||c||^2 - x.c); the 2x scale is folded
    # into the precomputed half-norms so there is no per-tile VPU multiply.
    dots = jnp.dot(xn, cbt_ref[...], preferred_element_type=jnp.float32)  # (TN, QK)
    dist = cnh_ref[...] - dots                                            # (TN, QK)

    # iotas hoisted out of the per-quantizer loop (JAX does not CSE broadcasts)
    seg_iota = jax.lax.broadcasted_iota(jnp.int32, (TN, K), 1)
    full_iota = jax.lax.broadcasted_iota(jnp.int32, (TN, QK), 1)

    onehot = jnp.zeros((TN, QK), jnp.float32)
    idx_rows = []
    for i in range(Q):                        # Q is small & static -> unrolled
        seg = dist[:, i * K:(i + 1) * K]                    # (TN, K) static slice
        # first-index argmin via min + tie-break (only min/where -> always lowers)
        seg_min = jnp.min(seg, axis=-1, keepdims=True)
        idx = jnp.min(jnp.where(seg == seg_min, seg_iota, K), axis=-1)    # (TN,)
        idx_rows.append(idx.astype(jnp.int32))
        # fused one-hot over all Q*K lanes (segments are disjoint -> sum == OR)
        onehot = onehot + (full_iota == (idx + i * K)[:, None]).astype(jnp.float32)
    idx_ref[...] = jnp.stack(idx_rows, axis=0)              # one (Q, TN) store

    # ---- ONE fused gather matmul (block-diagonal codebook) -> (TN, D) ----
    quant = jnp.dot(onehot, cb_ref[...], preferred_element_type=jnp.float32)

    # ---- output RMSNorm + single full-width store ----
    ms2 = jnp.mean(quant * quant, axis=-1, keepdims=True)
    out_ref[...] = (quant * jax.lax.rsqrt(ms2 + eps)
                    * wout_ref[...]).astype(out_ref.dtype)


def _round_up(v, m):
    return ((v + m - 1) // m) * m


def video_quantizer_forward(x, input_norm_w, codebooks, output_norm_w, *,
                            eps=1e-6, tile_n=1024):
    """x: (B, T, D).  codebooks: (Q, K, d) with Q*d == D.
    Returns (normed quantized (B, T, D) in x.dtype, indices (B, T, Q) int32)."""
    B, T, D = x.shape
    Q, K, d = codebooks.shape
    assert Q * d == D
    QK = Q * K
    N = B * T

    # --- wrapper-side parameter prep: block-diagonal codebooks + half-norms ---
    cb = codebooks.astype(jnp.float32)                             # (Q, K, d)
    qeye = jnp.eye(Q, dtype=jnp.float32)
    # cb_bd[i*K + k, j*d + c] = cb[i, k, c] * (i == j)   -> (Q*K, D) block-diag
    cb_bd = (cb[:, :, None, :] * qeye[:, None, :, None]).reshape(QK, D)
    cbt_bd = cb_bd.T                                               # (D, Q*K)
    cn_half = 0.5 * jnp.sum(cb * cb, axis=-1).reshape(1, QK)       # (1, Q*K)

    # Gate block-diag fusion on VMEM residency of the two operands.
    # TODO(synk): fall back to a per-quantizer loop kernel if Q*K*D grows past
    # a few MiB (not needed at these shapes).
    if 2 * QK * D * 4 > 8 * 1024 * 1024:
        raise NotImplementedError("block-diagonal codebooks too large for VMEM")

    # Keep x (and the quantized output) in the caller's dtype: the kernel is
    # HBM-bound on those streams, so bf16 in/out halves the traffic.  All math
    # inside the kernel is f32.
    x2 = x.reshape(N, D)
    win = input_norm_w.reshape(1, D).astype(jnp.float32)
    wout = output_norm_w.reshape(1, D).astype(jnp.float32)

    # --- row tiling: always 128-aligned (lane-dense idx store); when N allows,
    # pick a tile giving >= 2 grid steps so v7x's second TensorCore has work. ---
    n128 = _round_up(N, 128)
    tn = min(_round_up(tile_n, 128), max(128, _round_up((n128 + 1) // 2, 128)))
    n_pad = _round_up(n128, tn)
    if n_pad != N:
        # zero rows normalize to zero input; their indices/rows are sliced off
        x2 = jnp.pad(x2, ((0, n_pad - N), (0, 0)))

    grid = (n_pad // tn,)
    kernel = functools.partial(_video_quantizer_kernel,
                               num_quantizers=Q, codebook_size=K, eps=eps)

    out, idx = pl.pallas_call(
        kernel,
        out_shape=(jax.ShapeDtypeStruct((n_pad, D), x.dtype),
                   jax.ShapeDtypeStruct((Q, n_pad), jnp.int32)),
        grid=grid,
        in_specs=[pl.BlockSpec((tn, D), lambda i: (i, 0)),        # x rows (tiled)
                  pl.BlockSpec((1, D), lambda i: (0, 0)),         # input-norm w
                  pl.BlockSpec((D, QK), lambda i: (0, 0)),        # block-diag cb^T (resident)
                  pl.BlockSpec((QK, D), lambda i: (0, 0)),        # block-diag cb   (resident)
                  pl.BlockSpec((1, QK), lambda i: (0, 0)),        # 0.5*||c||^2     (resident)
                  pl.BlockSpec((1, D), lambda i: (0, 0))],        # output-norm w
        out_specs=(pl.BlockSpec((tn, D), lambda i: (i, 0)),
                   pl.BlockSpec((Q, tn), lambda i: (0, i))),
        compiler_params=pltpu.CompilerParams(
            dimension_semantics=("parallel",),     # shards rows across v7x TCs
            vmem_limit_bytes=32 * 1024 * 1024),    # safe on v5e/v6e/v7x
    )(x2, win, cbt_bd, cb_bd, cn_half, wout)

    quantized = out[:N].reshape(B, T, D)
    indices = idx[:, :N].T.reshape(B, T, Q)        # PyTorch returns int64; int32 here
    return quantized, indices


def _reference_forward(x, input_norm_w, codebooks, output_norm_w, *, eps=1e-6):
    """Plain-JAX reference mirroring the PyTorch module."""
    B, T, D = x.shape
    Q, K, d = codebooks.shape

    def rmsnorm(v, w):
        return v * jax.lax.rsqrt(jnp.mean(v * v, axis=-1, keepdims=True) + eps) * w

    xn = rmsnorm(x, input_norm_w)
    xq = xn.reshape(B, T, Q, d)
    idxs, quants = [], []
    for i in range(Q):
        diff = xq[..., i, :][..., None, :] - codebooks[i][None, None, :, :]
        dist = jnp.sqrt(jnp.sum(diff * diff, axis=-1))          # torch.cdist (p=2)
        idx = jnp.argmin(dist, axis=-1)
        idxs.append(idx)
        quants.append(codebooks[i][idx])
    indices = jnp.stack(idxs, axis=-1)
    quant = jnp.concatenate(quants, axis=-1)
    return rmsnorm(quant, output_norm_w), indices


if __name__ == "__main__":
    B, T, D = 2, 8, 32          # batch, time, encoder_vision_hidden_dim
    Q, K = 4, 64                # num_quantizers, codebook_size
    d = D // Q
    eps = 1e-6

    key = jax.random.PRNGKey(0)
    kx, kt, kd = jax.random.split(key, 3)
    x = jax.random.normal(kx, (B, T, D), jnp.float32)
    temporal_cb = jax.random.normal(kt, (Q, K, d), jnp.float32)   # nn.Embedding ~ N(0,1)
    depth_cb = jax.random.normal(kd, (Q, K, d), jnp.float32)
    input_norm_w = jnp.ones((D,), jnp.float32)                    # RMSNorm weights init = 1
    temporal_out_w = jnp.ones((D,), jnp.float32)
    depth_out_w = jnp.ones((D,), jnp.float32)

    # stream_type='temporal'
    q_t, i_t = video_quantizer_forward(x, input_norm_w, temporal_cb, temporal_out_w, eps=eps)
    # stream_type='depth'
    q_d, i_d = video_quantizer_forward(x, input_norm_w, depth_cb, depth_out_w, eps=eps)
    jax.block_until_ready((q_t, i_t, q_d, i_d))

    # correctness check against plain-JAX reference
    rq_t, ri_t = _reference_forward(x, input_norm_w, temporal_cb, temporal_out_w, eps=eps)
    rq_d, ri_d = _reference_forward(x, input_norm_w, depth_cb, depth_out_w, eps=eps)
    assert jnp.array_equal(i_t, ri_t.astype(jnp.int32))
    assert jnp.array_equal(i_d, ri_d.astype(jnp.int32))
    assert jnp.allclose(q_t, rq_t, atol=1e-5, rtol=1e-5)
    assert jnp.allclose(q_d, rq_d, atol=1e-5, rtol=1e-5)

    print("KERNEL_OK")
</pallas_src>

<mosaic_0001>
module attributes {stable_mosaic.version = 11 : i64} {
  func.func @_video_quantizer_kernel(%arg0: i32, %arg1: memref<128x32xf32, #tpu.memory_space<vmem>>, %arg2: memref<1x32xf32, #tpu.memory_space<vmem>>, %arg3: memref<32x256xf32, #tpu.memory_space<vmem>>, %arg4: memref<256x32xf32, #tpu.memory_space<vmem>>, %arg5: memref<1x256xf32, #tpu.memory_space<vmem>>, %arg6: memref<1x32xf32, #tpu.memory_space<vmem>>, %arg7: memref<128x32xf32, #tpu.memory_space<vmem>>, %arg8: memref<4x128xi32, #tpu.memory_space<vmem>>) attributes {dimension_semantics = [#tpu.dimension_semantics<parallel>], iteration_bounds = array<i64: 1>, scalar_prefetch = 0 : i64, scratch_operands = 0 : i64, tpu.core_type = #tpu.core_type<tc>, window_params = [{transform_indices = @transform_0, window_bounds = array<i64: 128, 32>}, {pipeline_mode = #tpu.pipeline_mode<synchronous>, transform_indices = @transform_1, window_bounds = array<i64: 1, 32>}, {pipeline_mode = #tpu.pipeline_mode<synchronous>, transform_indices = @transform_2, window_bounds = array<i64: 32, 256>}, {pipeline_mode = #tpu.pipeline_mode<synchronous>, transform_indices = @transform_3, window_bounds = array<i64: 256, 32>}, {pipeline_mode = #tpu.pipeline_mode<synchronous>, transform_indices = @transform_4, window_bounds = array<i64: 1, 256>}, {pipeline_mode = #tpu.pipeline_mode<synchronous>, transform_indices = @transform_5, window_bounds = array<i64: 1, 32>}, {transform_indices = @transform_6, window_bounds = array<i64: 128, 32>}, {transform_indices = @transform_7, window_bounds = array<i64: 4, 128>}]} {
    %c0 = arith.constant 0 : index
    %c0_0 = arith.constant 0 : index
    %0 = vector.load %arg1[%c0, %c0_0] : memref<128x32xf32, #tpu.memory_space<vmem>>, vector<128x32xf32>
    %1 = arith.mulf %0, %0 : vector<128x32xf32>
    %cst = arith.constant dense<0.000000e+00> : vector<128xf32>
    %2 = vector.multi_reduction <add>, %1, %cst [1] : vector<128x32xf32> to vector<128xf32>
    %3 = vector.shape_cast %2 : vector<128xf32> to vector<128x1xf32>
    %cst_1 = arith.constant 3.200000e+01 : f32
    %4 = vector.broadcast %cst_1 : f32 to vector<128x1xf32>
    %5 = arith.divf %3, %4 : vector<128x1xf32>
    %cst_2 = arith.constant 9.99999997E-7 : f32
    %6 = vector.broadcast %cst_2 : f32 to vector<128x1xf32>
    %7 = arith.addf %5, %6 : vector<128x1xf32>
    %8 = math.rsqrt %7 : vector<128x1xf32>
    %9 = vector.broadcast %8 : vector<128x1xf32> to vector<128x32xf32>
    %10 = arith.mulf %0, %9 : vector<128x32xf32>
    %c0_3 = arith.constant 0 : index
    %c0_4 = arith.constant 0 : index
    %11 = vector.load %arg2[%c0_3, %c0_4] : memref<1x32xf32, #tpu.memory_space<vmem>>, vector<1x32xf32>
    %12 = vector.broadcast %11 : vector<1x32xf32> to vector<128x32xf32>
    %13 = arith.mulf %10, %12 : vector<128x32xf32>
    %c0_5 = arith.constant 0 : index
    %c0_6 = arith.constant 0 : index
    %14 = vector.load %arg3[%c0_5, %c0_6] : memref<32x256xf32, #tpu.memory_space<vmem>>, vector<32x256xf32>
    %cst_7 = arith.constant dense<0.000000e+00> : vector<128x256xf32>
    %15 = tpu.matmul %13, %14, %cst_7 {dimension_numbers = #tpu.dot_dimension_numbers<[1], [0], [0], [1], [0, 0, 1, 1], [], []>} : vector<128x32xf32>, vector<32x256xf32>, vector<128x256xf32> -> vector<128x256xf32>
    %c0_8 = arith.constant 0 : index
    %c0_9 = arith.constant 0 : index
    %16 = vector.load %arg5[%c0_8, %c0_9] : memref<1x256xf32, #tpu.memory_space<vmem>>, vector<1x256xf32>
    %17 = vector.broadcast %16 : vector<1x256xf32> to vector<128x256xf32>
    %18 = arith.subf %17, %15 : vector<128x256xf32>
    %19 = tpu.iota {dimensions = array<i32: 1>} : vector<128x64xi32>
    %20 = tpu.iota {dimensions = array<i32: 1>} : vector<128x256xi32>
    %cst_10 = arith.constant 0.000000e+00 : f32
    %21 = vector.broadcast %cst_10 : f32 to vector<128x256xf32>
    %22 = vector.extract_strided_slice %18 {offsets = [0, 0], sizes = [128, 64], strides = [1, 1]} : vector<128x256xf32> to vector<128x64xf32>
    %cst_11 = arith.constant dense<0x7F800000> : vector<128xf32>
    %23 = vector.multi_reduction <minimumf>, %22, %cst_11 [1] : vector<128x64xf32> to vector<128xf32>
    %24 = vector.shape_cast %23 : vector<128xf32> to vector<128x1xf32>
    %25 = vector.broadcast %24 : vector<128x1xf32> to vector<128x64xf32>
    %26 = arith.cmpf oeq, %22, %25 : vector<128x64xf32>
    %c64_i32 = arith.constant 64 : i32
    %27 = vector.broadcast %c64_i32 : i32 to vector<128x64xi32>
    %28 = arith.select %26, %19, %27 : vector<128x64xi1>, vector<128x64xi32>
    %cst_12 = arith.constant dense<2147483647> : vector<128xi32>
    %29 = vector.multi_reduction <minsi>, %28, %cst_12 [1] : vector<128x64xi32> to vector<128xi32>
    %c0_i32 = arith.constant 0 : i32
    %30 = vector.broadcast %c0_i32 : i32 to vector<128xi32>
    %31 = arith.addi %29, %30 : vector<128xi32>
    %32 = vector.shape_cast %31 : vector<128xi32> to vector<128x1xi32>
    %33 = vector.broadcast %32 : vector<128x1xi32> to vector<128x256xi32>
    %34 = arith.cmpi eq, %20, %33 : vector<128x256xi32>
    %35 = arith.extui %34 : vector<128x256xi1> to vector<128x256xi32>
    %36 = arith.sitofp %35 : vector<128x256xi32> to vector<128x256xf32>
    %37 = arith.addf %21, %36 : vector<128x256xf32>
    %38 = vector.extract_strided_slice %18 {offsets = [0, 64], sizes = [128, 64], strides = [1, 1]} : vector<128x256xf32> to vector<128x64xf32>
    %cst_13 = arith.constant dense<0x7F800000> : vector<128xf32>
    %39 = vector.multi_reduction <minimumf>, %38, %cst_13 [1] : vector<128x64xf32> to vector<128xf32>
    %40 = vector.shape_cast %39 : vector<128xf32> to vector<128x1xf32>
    %41 = vector.broadcast %40 : vector<128x1xf32> to vector<128x64xf32>
    %42 = arith.cmpf oeq, %38, %41 : vector<128x64xf32>
    %c64_i32_14 = arith.constant 64 : i32
    %43 = vector.broadcast %c64_i32_14 : i32 to vector<128x64xi32>
    %44 = arith.select %42, %19, %43 : vector<128x64xi1>, vector<128x64xi32>
    %cst_15 = arith.constant dense<2147483647> : vector<128xi32>
    %45 = vector.multi_reduction <minsi>, %44, %cst_15 [1] : vector<128x64xi32> to vector<128xi32>
    %c64_i32_16 = arith.constant 64 : i32
    %46 = vector.broadcast %c64_i32_16 : i32 to vector<128xi32>
    %47 = arith.addi %45, %46 : vector<128xi32>
    %48 = vector.shape_cast %47 : vector<128xi32> to vector<128x1xi32>
    %49 = vector.broadcast %48 : vector<128x1xi32> to vector<128x256xi32>
    %50 = arith.cmpi eq, %20, %49 : vector<128x256xi32>
    %51 = arith.extui %50 : vector<128x256xi1> to vector<128x256xi32>
    %52 = arith.sitofp %51 : vector<128x256xi32> to vector<128x256xf32>
    %53 = arith.addf %37, %52 : vector<128x256xf32>
    %54 = vector.extract_strided_slice %18 {offsets = [0, 128], sizes = [128, 64], strides = [1, 1]} : vector<128x256xf32> to vector<128x64xf32>
    %cst_17 = arith.constant dense<0x7F800000> : vector<128xf32>
    %55 = vector.multi_reduction <minimumf>, %54, %cst_17 [1] : vector<128x64xf32> to vector<128xf32>
    %56 = vector.shape_cast %55 : vector<128xf32> to vector<128x1xf32>
    %57 = vector.broadcast %56 : vector<128x1xf32> to vector<128x64xf32>
    %58 = arith.cmpf oeq, %54, %57 : vector<128x64xf32>
    %c64_i32_18 = arith.constant 64 : i32
    %59 = vector.broadcast %c64_i32_18 : i32 to vector<128x64xi32>
    %60 = arith.select %58, %19, %59 : vector<128x64xi1>, vector<128x64xi32>
    %cst_19 = arith.constant dense<2147483647> : vector<128xi32>
    %61 = vector.multi_reduction <minsi>, %60, %cst_19 [1] : vector<128x64xi32> to vector<128xi32>
    %c128_i32 = arith.constant 128 : i32
    %62 = vector.broadcast %c128_i32 : i32 to vector<128xi32>
    %63 = arith.addi %61, %62 : vector<128xi32>
    %64 = vector.shape_cast %63 : vector<128xi32> to vector<128x1xi32>
    %65 = vector.broadcast %64 : vector<128x1xi32> to vector<128x256xi32>
    %66 = arith.cmpi eq, %20, %65 : vector<128x256xi32>
    %67 = arith.extui %66 : vector<128x256xi1> to vector<128x256xi32>
    %68 = arith.sitofp %67 : vector<128x256xi32> to vector<128x256xf32>
    %69 = arith.addf %53, %68 : vector<128x256xf32>
    %70 = vector.extract_strided_slice %18 {offsets = [0, 192], sizes = [128, 64], strides = [1, 1]} : vector<128x256xf32> to vector<128x64xf32>
    %cst_20 = arith.constant dense<0x7F800000> : vector<128xf32>
    %71 = vector.multi_reduction <minimumf>, %70, %cst_20 [1] : vector<128x64xf32> to vector<128xf32>
    %72 = vector.shape_cast %71 : vector<128xf32> to vector<128x1xf32>
    %73 = vector.broadcast %72 : vector<128x1xf32> to vector<128x64xf32>
    %74 = arith.cmpf oeq, %70, %73 : vector<128x64xf32>
    %c64_i32_21 = arith.constant 64 : i32
    %75 = vector.broadcast %c64_i32_21 : i32 to vector<128x64xi32>
    %76 = arith.select %74, %19, %75 : vector<128x64xi1>, vector<128x64xi32>
    %cst_22 = arith.constant dense<2147483647> : vector<128xi32>
    %77 = vector.multi_reduction <minsi>, %76, %cst_22 [1] : vector<128x64xi32> to vector<128xi32>
    %c192_i32 = arith.constant 192 : i32
    %78 = vector.broadcast %c192_i32 : i32 to vector<128xi32>
    %79 = arith.addi %77, %78 : vector<128xi32>
    %80 = vector.shape_cast %79 : vector<128xi32> to vector<128x1xi32>
    %81 = vector.broadcast %80 : vector<128x1xi32> to vector<128x256xi32>
    %82 = arith.cmpi eq, %20, %81 : vector<128x256xi32>
    %83 = arith.extui %82 : vector<128x256xi1> to vector<128x256xi32>
    %84 = arith.sitofp %83 : vector<128x256xi32> to vector<128x256xf32>
    %85 = arith.addf %69, %84 : vector<128x256xf32>
    %86 = vector.shape_cast %29 : vector<128xi32> to vector<1x128xi32>
    %87 = vector.shape_cast %45 : vector<128xi32> to vector<1x128xi32>
    %88 = vector.shape_cast %61 : vector<128xi32> to vector<1x128xi32>
    %89 = vector.shape_cast %77 : vector<128xi32> to vector<1x128xi32>
    %90 = tpu.concatenate %86, %87, %88, %89 in 0 : vector<1x128xi32>, vector<1x128xi32>, vector<1x128xi32>, vector<1x128xi32> -> vector<4x128xi32>
    %c0_23 = arith.constant 0 : index
    %c0_24 = arith.constant 0 : index
    %91 = vector.load %arg8[%c0_23, %c0_24] : memref<4x128xi32, #tpu.memory_space<vmem>>, vector<4x128xi32>
    tpu.vector_store %arg8[%c0_23, %c0_24], %90 {strides = array<i32>} : memref<4x128xi32, #tpu.memory_space<vmem>>, vector<4x128xi32>,
    %c0_25 = arith.constant 0 : index
    %c0_26 = arith.constant 0 : index
    %92 = vector.load %arg4[%c0_25, %c0_26] : memref<256x32xf32, #tpu.memory_space<vmem>>, vector<256x32xf32>
    %cst_27 = arith.constant dense<0.000000e+00> : vector<128x32xf32>
    %93 = tpu.matmul %85, %92, %cst_27 {dimension_numbers = #tpu.dot_dimension_numbers<[1], [0], [0], [1], [0, 0, 1, 1], [], []>} : vector<128x256xf32>, vector<256x32xf32>, vector<128x32xf32> -> vector<128x32xf32>
    %94 = arith.mulf %93, %93 : vector<128x32xf32>
    %cst_28 = arith.constant dense<0.000000e+00> : vector<128xf32>
    %95 = vector.multi_reduction <add>, %94, %cst_28 [1] : vector<128x32xf32> to vector<128xf32>
    %96 = vector.shape_cast %95 : vector<128xf32> to vector<128x1xf32>
    %cst_29 = arith.constant 3.200000e+01 : f32
    %97 = vector.broadcast %cst_29 : f32 to vector<128x1xf32>
    %98 = arith.divf %96, %97 : vector<128x1xf32>
    %cst_30 = arith.constant 9.99999997E-7 : f32
    %99 = vector.broadcast %cst_30 : f32 to vector<128x1xf32>
    %100 = arith.addf %98, %99 : vector<128x1xf32>
    %101 = math.rsqrt %100 : vector<128x1xf32>
    %102 = vector.broadcast %101 : vector<128x1xf32> to vector<128x32xf32>
    %103 = arith.mulf %93, %102 : vector<128x32xf32>
    %c0_31 = arith.constant 0 : index
    %c0_32 = arith.constant 0 : index
    %104 = vector.load %arg6[%c0_31, %c0_32] : memref<1x32xf32, #tpu.memory_space<vmem>>, vector<1x32xf32>
    %105 = vector.broadcast %104 : vector<1x32xf32> to vector<128x32xf32>
    %106 = arith.mulf %103, %105 : vector<128x32xf32>
    %c0_33 = arith.constant 0 : index
    %c0_34 = arith.constant 0 : index
    %107 = vector.load %arg7[%c0_33, %c0_34] : memref<128x32xf32, #tpu.memory_space<vmem>>, vector<128x32xf32>
    tpu.vector_store %arg7[%c0_33, %c0_34], %106 {strides = array<i32>} : memref<128x32xf32, #tpu.memory_space<vmem>>, vector<128x32xf32>,
    return
  }
  func.func @transform_0(%arg0: i32) -> (i32, i32) {
    %c0_i32 = arith.constant 0 : i32
    %c0_i32_0 = arith.constant 0 : i32
    return %arg0, %c0_i32 : i32, i32
  }
  func.func @transform_1(%arg0: i32) -> (i32, i32) {
    %c0_i32 = arith.constant 0 : i32
    %c0_i32_0 = arith.constant 0 : i32
    %c0_i32_1 = arith.constant 0 : i32
    return %c0_i32, %c0_i32_0 : i32, i32
  }
  func.func @transform_2(%arg0: i32) -> (i32, i32) {
    %c0_i32 = arith.constant 0 : i32
    %c0_i32_0 = arith.constant 0 : i32
    %c0_i32_1 = arith.constant 0 : i32
    return %c0_i32, %c0_i32_0 : i32, i32
  }
  func.func @transform_3(%arg0: i32) -> (i32, i32) {
    %c0_i32 = arith.constant 0 : i32
    %c0_i32_0 = arith.constant 0 : i32
    %c0_i32_1 = arith.constant 0 : i32
    return %c0_i32, %c0_i32_0 : i32, i32
  }
  func.func @transform_4(%arg0: i32) -> (i32, i32) {
    %c0_i32 = arith.constant 0 : i32
    %c0_i32_0 = arith.constant 0 : i32
    %c0_i32_1 = arith.constant 0 : i32
    return %c0_i32, %c0_i32_0 : i32, i32
  }
  func.func @transform_5(%arg0: i32) -> (i32, i32) {
    %c0_i32 = arith.constant 0 : i32
    %c0_i32_0 = arith.constant 0 : i32
    %c0_i32_1 = arith.constant 0 : i32
    return %c0_i32, %c0_i32_0 : i32, i32
  }
  func.func @transform_6(%arg0: i32) -> (i32, i32) {
    %c0_i32 = arith.constant 0 : i32
    %c0_i32_0 = arith.constant 0 : i32
    return %arg0, %c0_i32 : i32, i32
  }
  func.func @transform_7(%arg0: i32) -> (i32, i32) {
    %c0_i32 = arith.constant 0 : i32
    %c0_i32_0 = arith.constant 0 : i32
    return %c0_i32, %arg0 : i32, i32
  }
}

</mosaic_0001>

<llo_original>
// kernel: tpu_custom_call.1
$region0: #{tpu_custom_call.1}
  #allocation0 [shape = 'u32[]', space=smem, size = 0x4, offset = 0x4, fixed_abs, tag = 'smem constant byte address 0x4 - core index']
  #allocation1 [shape = 'u32[72,128]{1,0:T(1,128)}', space=vmem, size = 0x9000, scoped, tag = 'internal scratch']
  %s0 = inlined_call_operand.vmem [shape: f32[128,32], index: 0, kind: input, shape index: {}]
  %s1 = inlined_call_operand.vmem [shape: f32[1,32], index: 1, kind: input, shape index: {}]
  %s2 = inlined_call_operand.vmem [shape: f32[32,256], index: 2, kind: input, shape index: {}]
  %s3 = inlined_call_operand.vmem [shape: f32[256,32], index: 3, kind: input, shape index: {}]
  %s4 = inlined_call_operand.vmem [shape: f32[1,256], index: 4, kind: input, shape index: {}]
  %s5 = inlined_call_operand.vmem [shape: f32[1,32], index: 5, kind: input, shape index: {}]
  %s6 = inlined_call_operand.vmem [shape: f32[128,32], index: 6, kind: output, shape index: {0}]
  %s7 = inlined_call_operand.hbm [shape: s32[4,128], index: 7, kind: output, shape index: {1}]
  %8 = xla_tuple %s6, %s7
  %s9 = sld [smem:[#allocation0]]
  $region42: #{tpu_custom_call.1} parent=0
    _
  %s11 = ssub.s32 1, %s9
  %s12 = scalar_select 0, %s11, %s9
  $region1: #{tpu_custom_call.1} parent=0
    #allocation2 [shape = 'u8[2048]{0}', space=vmem, size = 0x800, scoped, tag = 'output window, operand 1, single buffered']
    #allocation3 [shape = 's32[1]{0}', space=sflag, size = 0x4, scoped, tag = 'scoped memory for tpu_custom_call.1']
    %13 = vsyncpa [#allocation3], 0
    // Predicated region
    $region2: #{tpu_custom_call.1} parent=1 // pred_check
      _
    $region3: #{tpu_custom_call.1} parent=1 // pred_check_branch
      %15 = sbr.rel (0) target = $region5
    $region4: #{tpu_custom_call.1} parent=1 // pred_region
      _
    $region5: #{tpu_custom_call.1} parent=1 // pred_fallthru
      _
    // Predicated region
    $region6: #{tpu_custom_call.1} parent=1 // pred_check
      _
    $region7: #{tpu_custom_call.1} parent=1 // pred_check_branch
      %17 = sbr.rel (0) target = $region9
    $region8: #{tpu_custom_call.1} parent=1 // pred_region
      _
    $region9: #{tpu_custom_call.1} parent=1 // pred_fallthru
      _
    // Predicated region
    $region10: #{tpu_custom_call.1} parent=1 // pred_check
      _
    $region11: #{tpu_custom_call.1} parent=1 // pred_check_branch
      %19 = sbr.rel (0) target = $region13
    $region12: #{tpu_custom_call.1} parent=1 // pred_region
      _
    $region13: #{tpu_custom_call.1} parent=1 // pred_fallthru
      _
    // Predicated region
    $region14: #{tpu_custom_call.1} parent=1 // pred_check
      _
    $region15: #{tpu_custom_call.1} parent=1 // pred_check_branch
      %21 = sbr.rel (0) target = $region17
    $region16: #{tpu_custom_call.1} parent=1 // pred_region
      _
    $region17: #{tpu_custom_call.1} parent=1 // pred_fallthru
      _
    // Predicated region
    $region18: #{tpu_custom_call.1} parent=1 // pred_check
      _
    $region19: #{tpu_custom_call.1} parent=1 // pred_check_branch
      %23 = sbr.rel (0) target = $region21
    $region20: #{tpu_custom_call.1} parent=1 // pred_region
      _
    $region21: #{tpu_custom_call.1} parent=1 // pred_fallthru
      _
    // Predicated region
    $region22: #{tpu_custom_call.1} parent=1 // pred_check
      _
    $region23: #{tpu_custom_call.1} parent=1 // pred_check_branch
      %25 = sbr.rel (0) target = $region25
    $region24: #{tpu_custom_call.1} parent=1 // pred_region
      _
    $region25: #{tpu_custom_call.1} parent=1 // pred_fallthru
      _
    %v26 = vld [vmem:[%s0] sm:$0xff]
    %v27 = vld [vmem:[%s0 + $0x8] sm:$0xff]
    %v28 = vld [vmem:[%s0 + $0x10] sm:$0xff]
    %v29 = vld [vmem:[%s0 + $0x18] sm:$0xff]
    %v30 = vld [vmem:[%s0 + $0x20] sm:$0xff]
    %v31 = vld [vmem:[%s0 + $0x28] sm:$0xff]
    %v32 = vld [vmem:[%s0 + $0x30] sm:$0xff]
    %v33 = vld [vmem:[%s0 + $0x38] sm:$0xff]
    %v34 = vld [vmem:[%s0 + $0x40] sm:$0xff]
    %v35 = vld [vmem:[%s0 + $0x48] sm:$0xff]
    %v36 = vld [vmem:[%s0 + $0x50] sm:$0xff]
    %v37 = vld [vmem:[%s0 + $0x58] sm:$0xff]
    %v38 = vld [vmem:[%s0 + $0x60] sm:$0xff]
    %v39 = vld [vmem:[%s0 + $0x68] sm:$0xff]
    %v40 = vld [vmem:[%s0 + $0x70] sm:$0xff]
    %v41 = vld [vmem:[%s0 + $0x78] sm:$0xff]
    %v42 = vmul.f32 %v26, %v26
    %v43 = vmul.f32 %v27, %v27
    %v44 = vmul.f32 %v28, %v28
    %v45 = vmul.f32 %v29, %v29
    %v46 = vmul.f32 %v30, %v30
    %v47 = vmul.f32 %v31, %v31
    %v48 = vmul.f32 %v32, %v32
    %v49 = vmul.f32 %v33, %v33
    %v50 = vmul.f32 %v34, %v34
    %v51 = vmul.f32 %v35, %v35
    %v52 = vmul.f32 %v36, %v36
    %v53 = vmul.f32 %v37, %v37
    %v54 = vmul.f32 %v38, %v38
    %v55 = vmul.f32 %v39, %v39
    %v56 = vmul.f32 %v40, %v40
    %v57 = vmul.f32 %v41, %v41
    %vm58 = vcmask 261120
    %v59 = vsel %vm58, %v42, 0.0
    %60 = vadd.xlane.f32.xlu0 %v59
    %v61 = vpop.xlane.xlu0 %60
    %v62 = vsel %vm58, %v43, 0.0
    %63 = vadd.xlane.f32.xlu0 %v62
    %v64 = vpop.xlane.xlu0 %63
    %v65 = vsel %vm58, %v44, 0.0
    %66 = vadd.xlane.f32.xlu0 %v65
    %v67 = vpop.xlane.xlu0 %66
    %v68 = vsel %vm58, %v45, 0.0
    %69 = vadd.xlane.f32.xlu0 %v68
    %v70 = vpop.xlane.xlu0 %69
    %v71 = vsel %vm58, %v46, 0.0
    %72 = vadd.xlane.f32.xlu0 %v71
    %v73 = vpop.xlane.xlu0 %72
    %v74 = vsel %vm58, %v47, 0.0
    %75 = vadd.xlane.f32.xlu0 %v74
    %v76 = vpop.xlane.xlu0 %75
    %v77 = vsel %vm58, %v48, 0.0
    %78 = vadd.xlane.f32.xlu0 %v77
    %v79 = vpop.xlane.xlu0 %78
    %v80 = vsel %vm58, %v49, 0.0
    %81 = vadd.xlane.f32.xlu0 %v80
    %v82 = vpop.xlane.xlu0 %81
    %v83 = vsel %vm58, %v50, 0.0
    %84 = vadd.xlane.f32.xlu0 %v83
    %v85 = vpop.xlane.xlu0 %84
    %v86 = vsel %vm58, %v51, 0.0
    %87 = vadd.xlane.f32.xlu0 %v86
    %v88 = vpop.xlane.xlu0 %87
    %v89 = vsel %vm58, %v52, 0.0
    %90 = vadd.xlane.f32.xlu0 %v89
    %v91 = vpop.xlane.xlu0 %90
    %v92 = vsel %vm58, %v53, 0.0
    %93 = vadd.xlane.f32.xlu0 %v92
    %v94 = vpop.xlane.xlu0 %93
    %v95 = vsel %vm58, %v54, 0.0
    %96 = vadd.xlane.f32.xlu0 %v95
    %v97 = vpop.xlane.xlu0 %96
    %v98 = vsel %vm58, %v55, 0.0
    %99 = vadd.xlane.f32.xlu0 %v98
    %v100 = vpop.xlane.xlu0 %99
    %v101 = vsel %vm58, %v56, 0.0
    %102 = vadd.xlane.f32.xlu0 %v101
    %v103 = vpop.xlane.xlu0 %102
    %v104 = vsel %vm58, %v57, 0.0
    %105 = vadd.xlane.f32.xlu0 %v104
    %v106 = vpop.xlane.xlu0 %105
    %v107 = vrcp.pop 32.0
    %v108 = vmul.f32 32.0, %v107
    %v109 = vsub.f32 1.0, %v108
    %v110 = vmul.f32 %v107, %v109
    %v111 = vadd.f32 %v107, %v110
    %vm112 = vweird.f32 %v107
    %v113 = vsel %vm112, %v107, %v111
    %v114 = vmul.f32 %v61, %v113
    %v115 = vmul.f32 %v64, %v113
    %v116 = vmul.f32 %v67, %v113
    %v117 = vmul.f32 %v70, %v113
    %v118 = vmul.f32 %v73, %v113
    %v119 = vmul.f32 %v76, %v113
    %v120 = vmul.f32 %v79, %v113
    %v121 = vmul.f32 %v82, %v113
    %v122 = vmul.f32 %v85, %v113
    %v123 = vmul.f32 %v88, %v113
    %v124 = vmul.f32 %v91, %v113
    %v125 = vmul.f32 %v94, %v113
    %v126 = vmul.f32 %v97, %v113
    %v127 = vmul.f32 %v100, %v113
    %v128 = vmul.f32 %v103, %v113
    %v129 = vmul.f32 %v106, %v113
    %v130 = vadd.f32 %v114, 1e-06
    %v131 = vadd.f32 %v115, 1e-06
    %v132 = vadd.f32 %v116, 1e-06
    %v133 = vadd.f32 %v117, 1e-06
    %v134 = vadd.f32 %v118, 1e-06
    %v135 = vadd.f32 %v119, 1e-06
    %v136 = vadd.f32 %v120, 1e-06
    %v137 = vadd.f32 %v121, 1e-06
    %v138 = vadd.f32 %v122, 1e-06
    %v139 = vadd.f32 %v123, 1e-06
    %v140 = vadd.f32 %v124, 1e-06
    %v141 = vadd.f32 %v125, 1e-06
    %v142 = vadd.f32 %v126, 1e-06
    %v143 = vadd.f32 %v127, 1e-06
    %v144 = vadd.f32 %v128, 1e-06
    %v145 = vadd.f32 %v129, 1e-06
    %v146 = vrsqrt.pop %v130
    %v147 = vmul.f32 %v146, %v130
    %v148 = vmul.f32 %v147, %v146
    %v149 = vmul.f32 0.5, %v148
    %v150 = vsub.f32 1.5, %v149
    %v151 = vmul.f32 %v146, %v150
    %vm152 = vweird.f32 %v130
    %vm153 = vweird.f32 %v146
    %vm154 = vmor %vm152, %vm153
    %v155 = vsel %vm154, %v146, %v151
    %v156 = vrsqrt.pop %v131
    %v157 = vmul.f32 %v156, %v131
    %v158 = vmul.f32 %v157, %v156
    %v159 = vmul.f32 0.5, %v158
    %v160 = vsub.f32 1.5, %v159
    %v161 = vmul.f32 %v156, %v160
    %vm162 = vweird.f32 %v131
    %vm163 = vweird.f32 %v156
    %vm164 = vmor %vm162, %vm163
    %v165 = vsel %vm164, %v156, %v161
    %v166 = vrsqrt.pop %v132
    %v167 = vmul.f32 %v166, %v132
    %v168 = vmul.f32 %v167, %v166
    %v169 = vmul.f32 0.5, %v168
    %v170 = vsub.f32 1.5, %v169
    %v171 = vmul.f32 %v166, %v170
    %vm172 = vweird.f32 %v132
    %vm173 = vweird.f32 %v166
    %vm174 = vmor %vm172, %vm173
    %v175 = vsel %vm174, %v166, %v171
    %v176 = vrsqrt.pop %v133
    %v177 = vmul.f32 %v176, %v133
    %v178 = vmul.f32 %v177, %v176
    %v179 = vmul.f32 0.5, %v178
    %v180 = vsub.f32 1.5, %v179
    %v181 = vmul.f32 %v176, %v180
    %vm182 = vweird.f32 %v133
    %vm183 = vweird.f32 %v176
    %vm184 = vmor %vm182, %vm183
    %v185 = vsel %vm184, %v176, %v181
    %v186 = vrsqrt.pop %v134
    %v187 = vmul.f32 %v186, %v134
    %v188 = vmul.f32 %v187, %v186
    %v189 = vmul.f32 0.5, %v188
    %v190 = vsub.f32 1.5, %v189
    %v191 = vmul.f32 %v186, %v190
    %vm192 = vweird.f32 %v134
    %vm193 = vweird.f32 %v186
    %vm194 = vmor %vm192, %vm193
    %v195 = vsel %vm194, %v186, %v191
    %v196 = vrsqrt.pop %v135
    %v197 = vmul.f32 %v196, %v135
    %v198 = vmul.f32 %v197, %v196
    %v199 = vmul.f32 0.5, %v198
    %v200 = vsub.f32 1.5, %v199
    %v201 = vmul.f32 %v196, %v200
    %vm202 = vweird.f32 %v135
    %vm203 = vweird.f32 %v196
    %vm204 = vmor %vm202, %vm203
    %v205 = vsel %vm204, %v196, %v201
    %v206 = vrsqrt.pop %v136
    %v207 = vmul.f32 %v206, %v136
    %v208 = vmul.f32 %v207, %v206
    %v209 = vmul.f32 0.5, %v208
    %v210 = vsub.f32 1.5, %v209
    %v211 = vmul.f32 %v206, %v210
    %vm212 = vweird.f32 %v136
    %vm213 = vweird.f32 %v206
    %vm214 = vmor %vm212, %vm213
    %v215 = vsel %vm214, %v206, %v211
    %v216 = vrsqrt.pop %v137
    %v217 = vmul.f32 %v216, %v137
    %v218 = vmul.f32 %v217, %v216
    %v219 = vmul.f32 0.5, %v218
    %v220 = vsub.f32 1.5, %v219
    %v221 = vmul.f32 %v216, %v220
    %vm222 = vweird.f32 %v137
    %vm223 = vweird.f32 %v216
    %vm224 = vmor %vm222, %vm223
    %v225 = vsel %vm224, %v216, %v221
    %v226 = vrsqrt.pop %v138
    %v227 = vmul.f32 %v226, %v138
    %v228 = vmul.f32 %v227, %v226
    %v229 = vmul.f32 0.5, %v228
    %v230 = vsub.f32 1.5, %v229
    %v231 = vmul.f32 %v226, %v230
    %vm232 = vweird.f32 %v138
    %vm233 = vweird.f32 %v226
    %vm234 = vmor %vm232, %vm233
    %v235 = vsel %vm234, %v226, %v231
    %v236 = vrsqrt.pop %v139
    %v237 = vmul.f32 %v236, %v139
    %v238 = vmul.f32 %v237, %v236
    %v239 = vmul.f32 0.5, %v238
    %v240 = vsub.f32 1.5, %v239
    %v241 = vmul.f32 %v236, %v240
    %vm242 = vweird.f32 %v139
    %vm243 = vweird.f32 %v236
    %vm244 = vmor %vm242, %vm243
    %v245 = vsel %vm244, %v236, %v241
    %v246 = vrsqrt.pop %v140
    %v247 = vmul.f32 %v246, %v140
    %v248 = vmul.f32 %v247, %v246
    %v249 = vmul.f32 0.5, %v248
    %v250 = vsub.f32 1.5, %v249
    %v251 = vmul.f32 %v246, %v250
    %vm252 = vweird.f32 %v140
    %vm253 = vweird.f32 %v246
    %vm254 = vmor %vm252, %vm253
    %v255 = vsel %vm254, %v246, %v251
    %v256 = vrsqrt.pop %v141
    %v257 = vmul.f32 %v256, %v141
    %v258 = vmul.f32 %v257, %v256
    %v259 = vmul.f32 0.5, %v258
    %v260 = vsub.f32 1.5, %v259
    %v261 = vmul.f32 %v256, %v260
    %vm262 = vweird.f32 %v141
    %vm263 = vweird.f32 %v256
    %vm264 = vmor %vm262, %vm263
    %v265 = vsel %vm264, %v256, %v261
    %v266 = vrsqrt.pop %v142
    %v267 = vmul.f32 %v266, %v142
    %v268 = vmul.f32 %v267, %v266
    %v269 = vmul.f32 0.5, %v268
    %v270 = vsub.f32 1.5, %v269
    %v271 = vmul.f32 %v266, %v270
    %vm272 = vweird.f32 %v142
    %vm273 = vweird.f32 %v266
    %vm274 = vmor %vm272, %vm273
    %v275 = vsel %vm274, %v266, %v271
    %v276 = vrsqrt.pop %v143
    %v277 = vmul.f32 %v276, %v143
    %v278 = vmul.f32 %v277, %v276
    %v279 = vmul.f32 0.5, %v278
    %v280 = vsub.f32 1.5, %v279
    %v281 = vmul.f32 %v276, %v280
    %vm282 = vweird.f32 %v143
    %vm283 = vweird.f32 %v276
    %vm284 = vmor %vm282, %vm283
    %v285 = vsel %vm284, %v276, %v281
    %v286 = vrsqrt.pop %v144
    %v287 = vmul.f32 %v286, %v144
    %v288 = vmul.f32 %v287, %v286
    %v289 = vmul.f32 0.5, %v288
    %v290 = vsub.f32 1.5, %v289
    %v291 = vmul.f32 %v286, %v290
    %vm292 = vweird.f32 %v144
    %vm293 = vweird.f32 %v286
    %vm294 = vmor %vm292, %vm293
    %v295 = vsel %vm294, %v286, %v291
    %v296 = vrsqrt.pop %v145
    %v297 = vmul.f32 %v296, %v145
    %v298 = vmul.f32 %v297, %v296
    %v299 = vmul.f32 0.5, %v298
    %v300 = vsub.f32 1.5, %v299
    %v301 = vmul.f32 %v296, %v300
    %vm302 = vweird.f32 %v145
    %vm303 = vweird.f32 %v296
    %vm304 = vmor %vm302, %vm303
    %v305 = vsel %vm304, %v296, %v301
    %v306 = vmul.f32 %v26, %v155
    %v307 = vmul.f32 %v27, %v165
    %v308 = vmul.f32 %v28, %v175
    %v309 = vmul.f32 %v29, %v185
    %v310 = vmul.f32 %v30, %v195
    %v311 = vmul.f32 %v31, %v205
    %v312 = vmul.f32 %v32, %v215
    %v313 = vmul.f32 %v33, %v225
    %v314 = vmul.f32 %v34, %v235
    %v315 = vmul.f32 %v35, %v245
    %v316 = vmul.f32 %v36, %v255
    %v317 = vmul.f32 %v37, %v265
    %v318 = vmul.f32 %v38, %v275
    %v319 = vmul.f32 %v39, %v285
    %v320 = vmul.f32 %v40, %v295
    %v321 = vmul.f32 %v41, %v305
    %v322 = vld [vmem:[%s1] sm:$0x1]
    %v324 = vperm.slane %v322, 0
    %v326 = vmul.f32 %v306, %v324
    %v327 = vmul.f32 %v307, %v324
    %v328 = vmul.f32 %v308, %v324
    %v329 = vmul.f32 %v309, %v324
    %v330 = vmul.f32 %v310, %v324
    %v331 = vmul.f32 %v311, %v324
    %v332 = vmul.f32 %v312, %v324
    %v333 = vmul.f32 %v313, %v324
    %v334 = vmul.f32 %v314, %v324
    %v335 = vmul.f32 %v315, %v324
    %v336 = vmul.f32 %v316, %v324
    %v337 = vmul.f32 %v317, %v324
    %v338 = vmul.f32 %v318, %v324
    %v339 = vmul.f32 %v319, %v324
    %v340 = vmul.f32 %v320, %v324
    %v341 = vmul.f32 %v321, %v324
    %v342 = vld [vmem:[%s2] sm:$0xff]
    %v343 = vld [vmem:[%s2 + $0x8] sm:$0xff]
    %v344 = vld [vmem:[%s2 + $0x10] sm:$0xff]
    %v345 = vld [vmem:[%s2 + $0x18] sm:$0xff]
    %v346 = vld [vmem:[%s2 + $0x20] sm:$0xff]
    %v347 = vld [vmem:[%s2 + $0x28] sm:$0xff]
    %v348 = vld [vmem:[%s2 + $0x30] sm:$0xff]
    %v349 = vld [vmem:[%s2 + $0x38] sm:$0xff]
    %v351 = vsel %vm58, %v326, 0
    %v354 = vsel %vm58, %v327, 0
    %v357 = vsel %vm58, %v328, 0
    %v360 = vsel %vm58, %v329, 0
    %v363 = vsel %vm58, %v330, 0
    %v366 = vsel %vm58, %v331, 0
    %v369 = vsel %vm58, %v332, 0
    %v372 = vsel %vm58, %v333, 0
    %v375 = vsel %vm58, %v334, 0
    %v378 = vsel %vm58, %v335, 0
    %v381 = vsel %vm58, %v336, 0
    %v384 = vsel %vm58, %v337, 0
    %v387 = vsel %vm58, %v338, 0
    %v390 = vsel %vm58, %v339, 0
    %v393 = vsel %vm58, %v340, 0
    %v396 = vsel %vm58, %v341, 0
    %398 = vmatpush.msra.mxu0 0.0
    %399 = vmatpush.msra.mxu0 0.0
    %400 = vmatpush.msra.mxu0 0.0
    %401 = vmatpush.msra.mxu0 0.0
    %402 = vmatpush.msra.mxu0 0.0
    %403 = vmatpush.msra.mxu0 0.0
    %404 = vmatpush.msra.mxu0 0.0
    %405 = vmatpush.msra.mxu0 0.0
    %406 = vmatpush.msra.mxu0 0.0
    %407 = vmatpush.msra.mxu0 0.0
    %408 = vmatpush.msra.mxu0 0.0
    %409 = vmatpush.msra.mxu0 0.0
    %410 = vmatpush.msra.mxu0 %v348
    %411 = vmatpush.msra.mxu0 %v346
    %412 = vmatpush.msra.mxu0 %v344
    %413 = vmatpush.msra.mxu0 %v342
    %414 = vmatmul.f32.gmra.mxu0 %v351
    %v415 = vpop.f32.mrf.mxu0
    %v416 = vadd.f32 0.0, %v415
    %417 = vmatmul.f32.gmra.mxu0 %v354
    %v418 = vpop.f32.mrf.mxu0
    %v419 = vadd.f32 0.0, %v418
    %420 = vmatmul.f32.gmra.mxu0 %v357
    %v421 = vpop.f32.mrf.mxu0
    %v422 = vadd.f32 0.0, %v421
    %423 = vmatmul.f32.gmra.mxu0 %v360
    %v424 = vpop.f32.mrf.mxu0
    %v425 = vadd.f32 0.0, %v424
    %426 = vmatmul.f32.gmra.mxu0 %v363
    %v427 = vpop.f32.mrf.mxu0
    %v428 = vadd.f32 0.0, %v427
    %429 = vmatmul.f32.gmra.mxu0 %v366
    %v430 = vpop.f32.mrf.mxu0
    %v431 = vadd.f32 0.0, %v430
    %432 = vmatmul.f32.gmra.mxu0 %v369
    %v433 = vpop.f32.mrf.mxu0
    %v434 = vadd.f32 0.0, %v433
    %435 = vmatmul.f32.gmra.mxu0 %v372
    %v436 = vpop.f32.mrf.mxu0
    %v437 = vadd.f32 0.0, %v436
    %438 = vmatmul.f32.gmra.mxu0 %v375
    %v439 = vpop.f32.mrf.mxu0
    %v440 = vadd.f32 0.0, %v439
    %441 = vmatmul.f32.gmra.mxu0 %v378
    %v442 = vpop.f32.mrf.mxu0
    %v443 = vadd.f32 0.0, %v442
    %444 = vmatmul.f32.gmra.mxu0 %v381
    %v445 = vpop.f32.mrf.mxu0
    %v446 = vadd.f32 0.0, %v445
    %447 = vmatmul.f32.gmra.mxu0 %v384
    %v448 = vpop.f32.mrf.mxu0
    %v449 = vadd.f32 0.0, %v448
    %450 = vmatmul.f32.gmra.mxu0 %v387
    %v451 = vpop.f32.mrf.mxu0
    %v452 = vadd.f32 0.0, %v451
    %453 = vmatmul.f32.gmra.mxu0 %v390
    %v454 = vpop.f32.mrf.mxu0
    %v455 = vadd.f32 0.0, %v454
    %456 = vmatmul.f32.gmra.mxu0 %v393
    %v457 = vpop.f32.mrf.mxu0
    %v458 = vadd.f32 0.0, %v457
    %459 = vmatmul.f32.gmra.mxu0 %v396
    %v460 = vpop.f32.mrf.mxu0
    %v461 = vadd.f32 0.0, %v460
    %462 = vdwg.mxu0
    %463 = vmatpush.msra.mxu0 0.0
    %464 = vmatpush.msra.mxu0 0.0
    %465 = vmatpush.msra.mxu0 0.0
    %466 = vmatpush.msra.mxu0 0.0
    %467 = vmatpush.msra.mxu0 0.0
    %468 = vmatpush.msra.mxu0 0.0
    %469 = vmatpush.msra.mxu0 0.0
    %470 = vmatpush.msra.mxu0 0.0
    %471 = vmatpush.msra.mxu0 0.0
    %472 = vmatpush.msra.mxu0 0.0
    %473 = vmatpush.msra.mxu0 0.0
    %474 = vmatpush.msra.mxu0 0.0
    %475 = vmatpush.msra.mxu0 %v349
    %476 = vmatpush.msra.mxu0 %v347
    %477 = vmatpush.msra.mxu0 %v345
    %478 = vmatpush.msra.mxu0 %v343
    %479 = vmatmul.f32.gmra.mxu0 %v351
    %v480 = vpop.f32.mrf.mxu0
    %v481 = vadd.f32 0.0, %v480
    %482 = vmatmul.f32.gmra.mxu0 %v354
    %v483 = vpop.f32.mrf.mxu0
    %v484 = vadd.f32 0.0, %v483
    %485 = vmatmul.f32.gmra.mxu0 %v357
    %v486 = vpop.f32.mrf.mxu0
    %v487 = vadd.f32 0.0, %v486
    %488 = vmatmul.f32.gmra.mxu0 %v360
    %v489 = vpop.f32.mrf.mxu0
    %v490 = vadd.f32 0.0, %v489
    %491 = vmatmul.f32.gmra.mxu0 %v363
    %v492 = vpop.f32.mrf.mxu0
    %v493 = vadd.f32 0.0, %v492
    %494 = vmatmul.f32.gmra.mxu0 %v366
    %v495 = vpop.f32.mrf.mxu0
    %v496 = vadd.f32 0.0, %v495
    %497 = vmatmul.f32.gmra.mxu0 %v369
    %v498 = vpop.f32.mrf.mxu0
    %v499 = vadd.f32 0.0, %v498
    %500 = vmatmul.f32.gmra.mxu0 %v372
    %v501 = vpop.f32.mrf.mxu0
    %v502 = vadd.f32 0.0, %v501
    %503 = vmatmul.f32.gmra.mxu0 %v375
    %v504 = vpop.f32.mrf.mxu0
    %v505 = vadd.f32 0.0, %v504
    %506 = vmatmul.f32.gmra.mxu0 %v378
    %v507 = vpop.f32.mrf.mxu0
    %v508 = vadd.f32 0.0, %v507
    %509 = vmatmul.f32.gmra.mxu0 %v381
    %v510 = vpop.f32.mrf.mxu0
    %v511 = vadd.f32 0.0, %v510
    %512 = vmatmul.f32.gmra.mxu0 %v384
    %v513 = vpop.f32.mrf.mxu0
    %v514 = vadd.f32 0.0, %v513
    %515 = vmatmul.f32.gmra.mxu0 %v387
    %v516 = vpop.f32.mrf.mxu0
    %v517 = vadd.f32 0.0, %v516
    %518 = vmatmul.f32.gmra.mxu0 %v390
    %v519 = vpop.f32.mrf.mxu0
    %v520 = vadd.f32 0.0, %v519
    %521 = vmatmul.f32.gmra.mxu0 %v393
    %v522 = vpop.f32.mrf.mxu0
    %v523 = vadd.f32 0.0, %v522
    %524 = vmatmul.f32.gmra.mxu0 %v396
    %v525 = vpop.f32.mrf.mxu0
    %v526 = vadd.f32 0.0, %v525
    %527 = vdwg.mxu0
    %v528 = vld [vmem:[%s4] sm:$0x3]
    %v530 = vperm.slane %v528, 0
    %v531 = vperm.slane %v528, 1
    %v534 = vsub.f32 %v530, %v416
    %v535 = vsub.f32 %v531, %v481
    %v536 = vsub.f32 %v530, %v419
    %v537 = vsub.f32 %v531, %v484
    %v538 = vsub.f32 %v530, %v422
    %v539 = vsub.f32 %v531, %v487
    %v540 = vsub.f32 %v530, %v425
    %v541 = vsub.f32 %v531, %v490
    %v542 = vsub.f32 %v530, %v428
    %v543 = vsub.f32 %v531, %v493
    %v544 = vsub.f32 %v530, %v431
    %v545 = vsub.f32 %v531, %v496
    %v546 = vsub.f32 %v530, %v434
    %v547 = vsub.f32 %v531, %v499
    %v548 = vsub.f32 %v530, %v437
    %v549 = vsub.f32 %v531, %v502
    %v550 = vsub.f32 %v530, %v440
    %v551 = vsub.f32 %v531, %v505
    %v552 = vsub.f32 %v530, %v443
    %v553 = vsub.f32 %v531, %v508
    %v554 = vsub.f32 %v530, %v446
    %v555 = vsub.f32 %v531, %v511
    %v556 = vsub.f32 %v530, %v449
    %v557 = vsub.f32 %v531, %v514
    %v558 = vsub.f32 %v530, %v452
    %v559 = vsub.f32 %v531, %v517
    %v560 = vsub.f32 %v530, %v455
    %v561 = vsub.f32 %v531, %v520
    %v562 = vsub.f32 %v530, %v458
    %v563 = vsub.f32 %v531, %v523
    %v564 = vsub.f32 %v530, %v461
    %v565 = vsub.f32 %v531, %v526
    %v566 = vlaneseq
    %v567 = vand.u32 %v566, 127
    %v568 = vadd.s32 %v567, 128
    %vm569 = vcmask 523264
    %v570 = vsel %vm569, %v534, inf
    %571 = vmin.xlane.f32.xlu0 %v570
    %v572 = vpop.xlane.xlu0 %571
    %v573 = vsel %vm569, %v536, inf
    %574 = vmin.xlane.f32.xlu0 %v573
    %v575 = vpop.xlane.xlu0 %574
    %v576 = vsel %vm569, %v538, inf
    %577 = vmin.xlane.f32.xlu0 %v576
    %v578 = vpop.xlane.xlu0 %577
    %v579 = vsel %vm569, %v540, inf
    %580 = vmin.xlane.f32.xlu0 %v579
    %v581 = vpop.xlane.xlu0 %580
    %v582 = vsel %vm569, %v542, inf
    %583 = vmin.xlane.f32.xlu0 %v582
    %v584 = vpop.xlane.xlu0 %583
    %v585 = vsel %vm569, %v544, inf
    %586 = vmin.xlane.f32.xlu0 %v585
    %v587 = vpop.xlane.xlu0 %586
    %v588 = vsel %vm569, %v546, inf
    %589 = vmin.xlane.f32.xlu0 %v588
    %v590 = vpop.xlane.xlu0 %589
    %v591 = vsel %vm569, %v548, inf
    %592 = vmin.xlane.f32.xlu0 %v591
    %v593 = vpop.xlane.xlu0 %592
    %v594 = vsel %vm569, %v550, inf
    %595 = vmin.xlane.f32.xlu0 %v594
    %v596 = vpop.xlane.xlu0 %595
    %v597 = vsel %vm569, %v552, inf
    %598 = vmin.xlane.f32.xlu0 %v597
    %v599 = vpop.xlane.xlu0 %598
    %v600 = vsel %vm569, %v554, inf
    %601 = vmin.xlane.f32.xlu0 %v600
    %v602 = vpop.xlane.xlu0 %601
    %v603 = vsel %vm569, %v556, inf
    %604 = vmin.xlane.f32.xlu0 %v603
    %v605 = vpop.xlane.xlu0 %604
    %v606 = vsel %vm569, %v558, inf
    %607 = vmin.xlane.f32.xlu0 %v606
    %v608 = vpop.xlane.xlu0 %607
    %v609 = vsel %vm569, %v560, inf
    %610 = vmin.xlane.f32.xlu0 %v609
    %v611 = vpop.xlane.xlu0 %610
    %v612 = vsel %vm569, %v562, inf
    %613 = vmin.xlane.f32.xlu0 %v612
    %v614 = vpop.xlane.xlu0 %613
    %v615 = vsel %vm569, %v564, inf
    %616 = vmin.xlane.f32.xlu0 %v615
    %v617 = vpop.xlane.xlu0 %616
    %vm618 = vcmp.eq.f32.partialorder %v534, %v572
    %vm619 = vcmp.eq.f32.partialorder %v536, %v575
    %vm620 = vcmp.eq.f32.partialorder %v538, %v578
    %vm621 = vcmp.eq.f32.partialorder %v540, %v581
    %vm622 = vcmp.eq.f32.partialorder %v542, %v584
    %vm623 = vcmp.eq.f32.partialorder %v544, %v587
    %vm624 = vcmp.eq.f32.partialorder %v546, %v590
    %vm625 = vcmp.eq.f32.partialorder %v548, %v593
    %vm626 = vcmp.eq.f32.partialorder %v550, %v596
    %vm627 = vcmp.eq.f32.partialorder %v552, %v599
    %vm628 = vcmp.eq.f32.partialorder %v554, %v602
    %vm629 = vcmp.eq.f32.partialorder %v556, %v605
    %vm630 = vcmp.eq.f32.partialorder %v558, %v608
    %vm631 = vcmp.eq.f32.partialorder %v560, %v611
    %vm632 = vcmp.eq.f32.partialorder %v562, %v614
    %vm633 = vcmp.eq.f32.partialorder %v564, %v617
    %v634 = vsel %vm618, %v567, 64
    %v635 = vsel %vm619, %v567, 64
    %v636 = vsel %vm620, %v567, 64
    %v637 = vsel %vm621, %v567, 64
    %v638 = vsel %vm622, %v567, 64
    %v639 = vsel %vm623, %v567, 64
    %v640 = vsel %vm624, %v567, 64
    %v641 = vsel %vm625, %v567, 64
    %v642 = vsel %vm626, %v567, 64
    %v643 = vsel %vm627, %v567, 64
    %v644 = vsel %vm628, %v567, 64
    %v645 = vsel %vm629, %v567, 64
    %v646 = vsel %vm630, %v567, 64
    %v647 = vsel %vm631, %v567, 64
    %v648 = vsel %vm632, %v567, 64
    %v649 = vsel %vm633, %v567, 64
    %v650 = vsel %vm569, %v634, 2147483647
    %v651 = vand.u32 %v650, 65535
    %v652 = vshra.s32 %v650, 16
    %v653 = vcvt.s32.f32 %v651
    %v654 = vcvt.s32.f32 %v652
    %655 = vmin.xlane.f32.xlu0 %v654
    %v656 = vpop.xlane.xlu0 %655
    %vm657 = vcmp.eq.f32.partialorder %v654, %v656
    %v658 = vsel %vm657, %v653, inf
    %659 = vmin.xlane.f32.xlu0 %v658
    %v660 = vpop.xlane.xlu0 %659
    %v661 = vcvt.f32.s32 %v660
    %v662 = vcvt.f32.s32 %v656
    %v663 = vshll.u32 %v662, 16
    %v664 = vadd.s32 %v663, %v661
    %v665 = vsel %vm569, %v635, 2147483647
    %v666 = vand.u32 %v665, 65535
    %v667 = vshra.s32 %v665, 16
    %v668 = vcvt.s32.f32 %v666
    %v669 = vcvt.s32.f32 %v667
    %670 = vmin.xlane.f32.xlu0 %v669
    %v671 = vpop.xlane.xlu0 %670
    %vm672 = vcmp.eq.f32.partialorder %v669, %v671
    %v673 = vsel %vm672, %v668, inf
    %674 = vmin.xlane.f32.xlu0 %v673
    %v675 = vpop.xlane.xlu0 %674
    %v676 = vcvt.f32.s32 %v675
    %v677 = vcvt.f32.s32 %v671
    %v678 = vshll.u32 %v677, 16
    %v679 = vadd.s32 %v678, %v676
    %v680 = vsel %vm569, %v636, 2147483647
    %v681 = vand.u32 %v680, 65535
    %v682 = vshra.s32 %v680, 16
    %v683 = vcvt.s32.f32 %v681
    %v684 = vcvt.s32.f32 %v682
    %685 = vmin.xlane.f32.xlu0 %v684
    %v686 = vpop.xlane.xlu0 %685
    %vm687 = vcmp.eq.f32.partialorder %v684, %v686
    %v688 = vsel %vm687, %v683, inf
    %689 = vmin.xlane.f32.xlu0 %v688
    %v690 = vpop.xlane.xlu0 %689
    %v691 = vcvt.f32.s32 %v690
    %v692 = vcvt.f32.s32 %v686
    %v693 = vshll.u32 %v692, 16
    %v694 = vadd.s32 %v693, %v691
    %v695 = vsel %vm569, %v637, 2147483647
    %v696 = vand.u32 %v695, 65535
    %v697 = vshra.s32 %v695, 16
    %v698 = vcvt.s32.f32 %v696
    %v699 = vcvt.s32.f32 %v697
    %700 = vmin.xlane.f32.xlu0 %v699
    %v701 = vpop.xlane.xlu0 %700
    %vm702 = vcmp.eq.f32.partialorder %v699, %v701
    %v703 = vsel %vm702, %v698, inf
    %704 = vmin.xlane.f32.xlu0 %v703
    %v705 = vpop.xlane.xlu0 %704
    %v706 = vcvt.f32.s32 %v705
    %v707 = vcvt.f32.s32 %v701
    %v708 = vshll.u32 %v707, 16
    %v709 = vadd.s32 %v708, %v706
    %v710 = vsel %vm569, %v638, 2147483647
    %v711 = vand.u32 %v710, 65535
    %v712 = vshra.s32 %v710, 16
    %v713 = vcvt.s32.f32 %v711
    %v714 = vcvt.s32.f32 %v712
    %715 = vmin.xlane.f32.xlu0 %v714
    %v716 = vpop.xlane.xlu0 %715
    %vm717 = vcmp.eq.f32.partialorder %v714, %v716
    %v718 = vsel %vm717, %v713, inf
    %719 = vmin.xlane.f32.xlu0 %v718
    %v720 = vpop.xlane.xlu0 %719
    %v721 = vcvt.f32.s32 %v720
    %v722 = vcvt.f32.s32 %v716
    %v723 = vshll.u32 %v722, 16
    %v724 = vadd.s32 %v723, %v721
    %v725 = vsel %vm569, %v639, 2147483647
    %v726 = vand.u32 %v725, 65535
    %v727 = vshra.s32 %v725, 16
    %v728 = vcvt.s32.f32 %v726
    %v729 = vcvt.s32.f32 %v727
    %730 = vmin.xlane.f32.xlu0 %v729
    %v731 = vpop.xlane.xlu0 %730
    %vm732 = vcmp.eq.f32.partialorder %v729, %v731
    %v733 = vsel %vm732, %v728, inf
    %734 = vmin.xlane.f32.xlu0 %v733
    %v735 = vpop.xlane.xlu0 %734
    %v736 = vcvt.f32.s32 %v735
    %v737 = vcvt.f32.s32 %v731
    %v738 = vshll.u32 %v737, 16
    %v739 = vadd.s32 %v738, %v736
    %v740 = vsel %vm569, %v640, 2147483647
    %v741 = vand.u32 %v740, 65535
    %v742 = vshra.s32 %v740, 16
    %v743 = vcvt.s32.f32 %v741
    %v744 = vcvt.s32.f32 %v742
    %745 = vmin.xlane.f32.xlu0 %v744
    %v746 = vpop.xlane.xlu0 %745
    %vm747 = vcmp.eq.f32.partialorder %v744, %v746
    %v748 = vsel %vm747, %v743, inf
    %749 = vmin.xlane.f32.xlu0 %v748
    %v750 = vpop.xlane.xlu0 %749
    %v751 = vcvt.f32.s32 %v750
    %v752 = vcvt.f32.s32 %v746
    %v753 = vshll.u32 %v752, 16
    %v754 = vadd.s32 %v753, %v751
    %v755 = vsel %vm569, %v641, 2147483647
    %v756 = vand.u32 %v755, 65535
    %v757 = vshra.s32 %v755, 16
    %v758 = vcvt.s32.f32 %v756
    %v759 = vcvt.s32.f32 %v757
    %760 = vmin.xlane.f32.xlu0 %v759
    %v761 = vpop.xlane.xlu0 %760
    %vm762 = vcmp.eq.f32.partialorder %v759, %v761
    %v763 = vsel %vm762, %v758, inf
    %764 = vmin.xlane.f32.xlu0 %v763
    %v765 = vpop.xlane.xlu0 %764
    %v766 = vcvt.f32.s32 %v765
    %v767 = vcvt.f32.s32 %v761
    %v768 = vshll.u32 %v767, 16
    %v769 = vadd.s32 %v768, %v766
    %v770 = vsel %vm569, %v642, 2147483647
    %v771 = vand.u32 %v770, 65535
    %v772 = vshra.s32 %v770, 16
    %v773 = vcvt.s32.f32 %v771
    %v774 = vcvt.s32.f32 %v772
    %775 = vmin.xlane.f32.xlu0 %v774
    %v776 = vpop.xlane.xlu0 %775
    %vm777 = vcmp.eq.f32.partialorder %v774, %v776
    %v778 = vsel %vm777, %v773, inf
    %779 = vmin.xlane.f32.xlu0 %v778
    %v780 = vpop.xlane.xlu0 %779
    %v781 = vcvt.f32.s32 %v780
    %v782 = vcvt.f32.s32 %v776
    %v783 = vshll.u32 %v782, 16
    %v784 = vadd.s32 %v783, %v781
    %v785 = vsel %vm569, %v643, 2147483647
    %v786 = vand.u32 %v785, 65535
    %v787 = vshra.s32 %v785, 16
    %v788 = vcvt.s32.f32 %v786
    %v789 = vcvt.s32.f32 %v787
    %790 = vmin.xlane.f32.xlu0 %v789
    %v791 = vpop.xlane.xlu0 %790
    %vm792 = vcmp.eq.f32.partialorder %v789, %v791
    %v793 = vsel %vm792, %v788, inf
    %794 = vmin.xlane.f32.xlu0 %v793
    %v795 = vpop.xlane.xlu0 %794
    %v796 = vcvt.f32.s32 %v795
    %v797 = vcvt.f32.s32 %v791
    %v798 = vshll.u32 %v797, 16
    %v799 = vadd.s32 %v798, %v796
    %v800 = vsel %vm569, %v644, 2147483647
    %v801 = vand.u32 %v800, 65535
    %v802 = vshra.s32 %v800, 16
    %v803 = vcvt.s32.f32 %v801
    %v804 = vcvt.s32.f32 %v802
    %805 = vmin.xlane.f32.xlu0 %v804
    %v806 = vpop.xlane.xlu0 %805
    %vm807 = vcmp.eq.f32.partialorder %v804, %v806
    %v808 = vsel %vm807, %v803, inf
    %809 = vmin.xlane.f32.xlu0 %v808
    %v810 = vpop.xlane.xlu0 %809
    %v811 = vcvt.f32.s32 %v810
    %v812 = vcvt.f32.s32 %v806
    %v813 = vshll.u32 %v812, 16
    %v814 = vadd.s32 %v813, %v811
    %v815 = vsel %vm569, %v645, 2147483647
    %v816 = vand.u32 %v815, 65535
    %v817 = vshra.s32 %v815, 16
    %v818 = vcvt.s32.f32 %v816
    %v819 = vcvt.s32.f32 %v817
    %820 = vmin.xlane.f32.xlu0 %v819
    %v821 = vpop.xlane.xlu0 %820
    %vm822 = vcmp.eq.f32.partialorder %v819, %v821
    %v823 = vsel %vm822, %v818, inf
    %824 = vmin.xlane.f32.xlu0 %v823
    %v825 = vpop.xlane.xlu0 %824
    %v826 = vcvt.f32.s32 %v825
    %v827 = vcvt.f32.s32 %v821
    %v828 = vshll.u32 %v827, 16
    %v829 = vadd.s32 %v828, %v826
    %v830 = vsel %vm569, %v646, 2147483647
    %v831 = vand.u32 %v830, 65535
    %v832 = vshra.s32 %v830, 16
    %v833 = vcvt.s32.f32 %v831
    %v834 = vcvt.s32.f32 %v832
    %835 = vmin.xlane.f32.xlu0 %v834
    %v836 = vpop.xlane.xlu0 %835
    %vm837 = vcmp.eq.f32.partialorder %v834, %v836
    %v838 = vsel %vm837, %v833, inf
    %839 = vmin.xlane.f32.xlu0 %v838
    %v840 = vpop.xlane.xlu0 %839
    %v841 = vcvt.f32.s32 %v840
    %v842 = vcvt.f32.s32 %v836
    %v843 = vshll.u32 %v842, 16
    %v844 = vadd.s32 %v843, %v841
    %v845 = vsel %vm569, %v647, 2147483647
    %v846 = vand.u32 %v845, 65535
    %v847 = vshra.s32 %v845, 16
    %v848 = vcvt.s32.f32 %v846
    %v849 = vcvt.s32.f32 %v847
    %850 = vmin.xlane.f32.xlu0 %v849
    %v851 = vpop.xlane.xlu0 %850
    %vm852 = vcmp.eq.f32.partialorder %v849, %v851
    %v853 = vsel %vm852, %v848, inf
    %854 = vmin.xlane.f32.xlu0 %v853
    %v855 = vpop.xlane.xlu0 %854
    %v856 = vcvt.f32.s32 %v855
    %v857 = vcvt.f32.s32 %v851
    %v858 = vshll.u32 %v857, 16
    %v859 = vadd.s32 %v858, %v856
    %v860 = vsel %vm569, %v648, 2147483647
    %v861 = vand.u32 %v860, 65535
    %v862 = vshra.s32 %v860, 16
    %v863 = vcvt.s32.f32 %v861
    %v864 = vcvt.s32.f32 %v862
    %865 = vmin.xlane.f32.xlu0 %v864
    %v866 = vpop.xlane.xlu0 %865
    %vm867 = vcmp.eq.f32.partialorder %v864, %v866
    %v868 = vsel %vm867, %v863, inf
    %869 = vmin.xlane.f32.xlu0 %v868
    %v870 = vpop.xlane.xlu0 %869
    %v871 = vcvt.f32.s32 %v870
    %v872 = vcvt.f32.s32 %v866
    %v873 = vshll.u32 %v872, 16
    %v874 = vadd.s32 %v873, %v871
    %v875 = vsel %vm569, %v649, 2147483647
    %v876 = vand.u32 %v875, 65535
    %v877 = vshra.s32 %v875, 16
    %v878 = vcvt.s32.f32 %v876
    %v879 = vcvt.s32.f32 %v877
    %880 = vmin.xlane.f32.xlu0 %v879
    %v881 = vpop.xlane.xlu0 %880
    %vm882 = vcmp.eq.f32.partialorder %v879, %v881
    %v883 = vsel %vm882, %v878, inf
    %884 = vmin.xlane.f32.xlu0 %v883
    %v885 = vpop.xlane.xlu0 %884
    %v886 = vcvt.f32.s32 %v885
    %v887 = vcvt.f32.s32 %v881
    %v888 = vshll.u32 %v887, 16
    %v889 = vadd.s32 %v888, %v886
    %vm890 = vcmp.eq.s32.totalorder %v567, %v664
    %vm891 = vcmp.eq.s32.totalorder %v568, %v664
    %vm892 = vcmp.eq.s32.totalorder %v567, %v679
    %vm893 = vcmp.eq.s32.totalorder %v568, %v679
    %vm894 = vcmp.eq.s32.totalorder %v567, %v694
    %vm895 = vcmp.eq.s32.totalorder %v568, %v694
    %vm896 = vcmp.eq.s32.totalorder %v567, %v709
    %vm897 = vcmp.eq.s32.totalorder %v568, %v709
    %vm898 = vcmp.eq.s32.totalorder %v567, %v724
    %vm899 = vcmp.eq.s32.totalorder %v568, %v724
    %vm900 = vcmp.eq.s32.totalorder %v567, %v739
    %vm901 = vcmp.eq.s32.totalorder %v568, %v739
    %vm902 = vcmp.eq.s32.totalorder %v567, %v754
    %vm903 = vcmp.eq.s32.totalorder %v568, %v754
    %vm904 = vcmp.eq.s32.totalorder %v567, %v769
    %vm905 = vcmp.eq.s32.totalorder %v568, %v769
    %vm906 = vcmp.eq.s32.totalorder %v567, %v784
    %vm907 = vcmp.eq.s32.totalorder %v568, %v784
    %vm908 = vcmp.eq.s32.totalorder %v567, %v799
    %vm909 = vcmp.eq.s32.totalorder %v568, %v799
    %vm910 = vcmp.eq.s32.totalorder %v567, %v814
    %vm911 = vcmp.eq.s32.totalorder %v568, %v814
    %vm912 = vcmp.eq.s32.totalorder %v567, %v829
    %vm913 = vcmp.eq.s32.totalorder %v568, %v829
    %vm914 = vcmp.eq.s32.totalorder %v567, %v844
    %vm915 = vcmp.eq.s32.totalorder %v568, %v844
    %vm916 = vcmp.eq.s32.totalorder %v567, %v859
    %vm917 = vcmp.eq.s32.totalorder %v568, %v859
    %vm918 = vcmp.eq.s32.totalorder %v567, %v874
    %vm919 = vcmp.eq.s32.totalorder %v568, %v874
    %vm920 = vcmp.eq.s32.totalorder %v567, %v889
    %vm921 = vcmp.eq.s32.totalorder %v568, %v889
    %v922 = vsel %vm890, 1, 0
    %v923 = vsel %vm891, 1, 0
    %v924 = vsel %vm892, 1, 0
    %v925 = vsel %vm893, 1, 0
    %v926 = vsel %vm894, 1, 0
    %v927 = vsel %vm895, 1, 0
    %v928 = vsel %vm896, 1, 0
    %v929 = vsel %vm897, 1, 0
    %v930 = vsel %vm898, 1, 0
    %v931 = vsel %vm899, 1, 0
    %v932 = vsel %vm900, 1, 0
    %v933 = vsel %vm901, 1, 0
    %v934 = vsel %vm902, 1, 0
    %v935 = vsel %vm903, 1, 0
    %v936 = vsel %vm904, 1, 0
    %v937 = vsel %vm905, 1, 0
    %v938 = vsel %vm906, 1, 0
    %v939 = vsel %vm907, 1, 0
    %v940 = vsel %vm908, 1, 0
    %v941 = vsel %vm909, 1, 0
    %v942 = vsel %vm910, 1, 0
    %v943 = vsel %vm911, 1, 0
    %v944 = vsel %vm912, 1, 0
    %v945 = vsel %vm913, 1, 0
    %v946 = vsel %vm914, 1, 0
    %v947 = vsel %vm915, 1, 0
    %v948 = vsel %vm916, 1, 0
    %v949 = vsel %vm917, 1, 0
    %v950 = vsel %vm918, 1, 0
    %v951 = vsel %vm919, 1, 0
    %v952 = vsel %vm920, 1, 0
    %v953 = vsel %vm921, 1, 0
    %v954 = vcvt.s32.f32 %v922
    %v955 = vcvt.s32.f32 %v923
    %v956 = vcvt.s32.f32 %v924
    %v957 = vcvt.s32.f32 %v925
    %v958 = vcvt.s32.f32 %v926
    %v959 = vcvt.s32.f32 %v927
    %v960 = vcvt.s32.f32 %v928
    %v961 = vcvt.s32.f32 %v929
    %v962 = vcvt.s32.f32 %v930
    %v963 = vcvt.s32.f32 %v931
    %v964 = vcvt.s32.f32 %v932
    %v965 = vcvt.s32.f32 %v933
    %v966 = vcvt.s32.f32 %v934
    %v967 = vcvt.s32.f32 %v935
    %v968 = vcvt.s32.f32 %v936
    %v969 = vcvt.s32.f32 %v937
    %v970 = vcvt.s32.f32 %v938
    %v971 = vcvt.s32.f32 %v939
    %v972 = vcvt.s32.f32 %v940
    %v973 = vcvt.s32.f32 %v941
    %v974 = vcvt.s32.f32 %v942
    %v975 = vcvt.s32.f32 %v943
    %v976 = vcvt.s32.f32 %v944
    %v977 = vcvt.s32.f32 %v945
    %v978 = vcvt.s32.f32 %v946
    %v979 = vcvt.s32.f32 %v947
    %v980 = vcvt.s32.f32 %v948
    %v981 = vcvt.s32.f32 %v949
    %v982 = vcvt.s32.f32 %v950
    %v983 = vcvt.s32.f32 %v951
    %v984 = vcvt.s32.f32 %v952
    %v985 = vcvt.s32.f32 %v953
    %v986 = vadd.f32 %v954, 0.0
    %v987 = vadd.f32 %v955, 0.0
    %v988 = vadd.f32 %v956, 0.0
    %v989 = vadd.f32 %v957, 0.0
    %v990 = vadd.f32 %v958, 0.0
    %v991 = vadd.f32 %v959, 0.0
    %v992 = vadd.f32 %v960, 0.0
    %v993 = vadd.f32 %v961, 0.0
    %v994 = vadd.f32 %v962, 0.0
    %v995 = vadd.f32 %v963, 0.0
    %v996 = vadd.f32 %v964, 0.0
    %v997 = vadd.f32 %v965, 0.0
    %v998 = vadd.f32 %v966, 0.0
    %v999 = vadd.f32 %v967, 0.0
    %v1000 = vadd.f32 %v968, 0.0
    %v1001 = vadd.f32 %v969, 0.0
    %v1002 = vadd.f32 %v970, 0.0
    %v1003 = vadd.f32 %v971, 0.0
    %v1004 = vadd.f32 %v972, 0.0
    %v1005 = vadd.f32 %v973, 0.0
    %v1006 = vadd.f32 %v974, 0.0
    %v1007 = vadd.f32 %v975, 0.0
    %v1008 = vadd.f32 %v976, 0.0
    %v1009 = vadd.f32 %v977, 0.0
    %v1010 = vadd.f32 %v978, 0.0
    %v1011 = vadd.f32 %v979, 0.0
    %v1012 = vadd.f32 %v980, 0.0
    %v1013 = vadd.f32 %v981, 0.0
    %v1014 = vadd.f32 %v982, 0.0
    %v1015 = vadd.f32 %v983, 0.0
    %v1016 = vadd.f32 %v984, 0.0
    %v1017 = vadd.f32 %v985, 0.0
    %vm1018 = vcmask 1048064
    %v1019 = vsel %vm1018, %v534, inf
    %1020 = vmin.xlane.f32.xlu0 %v1019
    %v1021 = vpop.xlane.xlu0 %1020
    %v1022 = vsel %vm1018, %v536, inf
    %1023 = vmin.xlane.f32.xlu0 %v1022
    %v1024 = vpop.xlane.xlu0 %1023
    %v1025 = vsel %vm1018, %v538, inf
    %1026 = vmin.xlane.f32.xlu0 %v1025
    %v1027 = vpop.xlane.xlu0 %1026
    %v1028 = vsel %vm1018, %v540, inf
    %1029 = vmin.xlane.f32.xlu0 %v1028
    %v1030 = vpop.xlane.xlu0 %1029
    %v1031 = vsel %vm1018, %v542, inf
    %1032 = vmin.xlane.f32.xlu0 %v1031
    %v1033 = vpop.xlane.xlu0 %1032
    %v1034 = vsel %vm1018, %v544, inf
    %1035 = vmin.xlane.f32.xlu0 %v1034
    %v1036 = vpop.xlane.xlu0 %1035
    %v1037 = vsel %vm1018, %v546, inf
    %1038 = vmin.xlane.f32.xlu0 %v1037
    %v1039 = vpop.xlane.xlu0 %1038
    %v1040 = vsel %vm1018, %v548, inf
    %1041 = vmin.xlane.f32.xlu0 %v1040
    %v1042 = vpop.xlane.xlu0 %1041
    %v1043 = vsel %vm1018, %v550, inf
    %1044 = vmin.xlane.f32.xlu0 %v1043
    %v1045 = vpop.xlane.xlu0 %1044
    %v1046 = vsel %vm1018, %v552, inf
    %1047 = vmin.xlane.f32.xlu0 %v1046
    %v1048 = vpop.xlane.xlu0 %1047
    %v1049 = vsel %vm1018, %v554, inf
    %1050 = vmin.xlane.f32.xlu0 %v1049
    %v1051 = vpop.xlane.xlu0 %1050
    %v1052 = vsel %vm1018, %v556, inf
    %1053 = vmin.xlane.f32.xlu0 %v1052
    %v1054 = vpop.xlane.xlu0 %1053
    %v1055 = vsel %vm1018, %v558, inf
    %1056 = vmin.xlane.f32.xlu0 %v1055
    %v1057 = vpop.xlane.xlu0 %1056
    %v1058 = vsel %vm1018, %v560, inf
    %1059 = vmin.xlane.f32.xlu0 %v1058
    %v1060 = vpop.xlane.xlu0 %1059
    %v1061 = vsel %vm1018, %v562, inf
    %1062 = vmin.xlane.f32.xlu0 %v1061
    %v1063 = vpop.xlane.xlu0 %1062
    %v1064 = vsel %vm1018, %v564, inf
    %1065 = vmin.xlane.f32.xlu0 %v1064
    %v1066 = vpop.xlane.xlu0 %1065
    %vm1067 = vcmp.eq.f32.partialorder %v534, %v1021
    %vm1068 = vcmp.eq.f32.partialorder %v536, %v1024
    %vm1069 = vcmp.eq.f32.partialorder %v538, %v1027
    %vm1070 = vcmp.eq.f32.partialorder %v540, %v1030
    %vm1071 = vcmp.eq.f32.partialorder %v542, %v1033
    %vm1072 = vcmp.eq.f32.partialorder %v544, %v1036
    %vm1073 = vcmp.eq.f32.partialorder %v546, %v1039
    %vm1074 = vcmp.eq.f32.partialorder %v548, %v1042
    %vm1075 = vcmp.eq.f32.partialorder %v550, %v1045
    %vm1076 = vcmp.eq.f32.partialorder %v552, %v1048
    %vm1077 = vcmp.eq.f32.partialorder %v554, %v1051
    %vm1078 = vcmp.eq.f32.partialorder %v556, %v1054
    %vm1079 = vcmp.eq.f32.partialorder %v558, %v1057
    %vm1080 = vcmp.eq.f32.partialorder %v560, %v1060
    %vm1081 = vcmp.eq.f32.partialorder %v562, %v1063
    %vm1082 = vcmp.eq.f32.partialorder %v564, %v1066
    %1083 = vrot.lane.b32.xlu0 %v567, 64
    %v1084 = vpop.permute.xlu0 %1083
    %v1085 = vsel %vm1067, %v1084, 64
    %v1086 = vsel %vm1068, %v1084, 64
    %v1087 = vsel %vm1069, %v1084, 64
    %v1088 = vsel %vm1070, %v1084, 64
    %v1089 = vsel %vm1071, %v1084, 64
    %v1090 = vsel %vm1072, %v1084, 64
    %v1091 = vsel %vm1073, %v1084, 64
    %v1092 = vsel %vm1074, %v1084, 64
    %v1093 = vsel %vm1075, %v1084, 64
    %v1094 = vsel %vm1076, %v1084, 64
    %v1095 = vsel %vm1077, %v1084, 64
    %v1096 = vsel %vm1078, %v1084, 64
    %v1097 = vsel %vm1079, %v1084, 64
    %v1098 = vsel %vm1080, %v1084, 64
    %v1099 = vsel %vm1081, %v1084, 64
    %v1100 = vsel %vm1082, %v1084, 64
    %v1101 = vsel %vm1018, %v1085, 2147483647
    %v1102 = vand.u32 %v1101, 65535
    %v1103 = vshra.s32 %v1101, 16
    %v1104 = vcvt.s32.f32 %v1102
    %v1105 = vcvt.s32.f32 %v1103
    %1106 = vmin.xlane.f32.xlu0 %v1105
    %v1107 = vpop.xlane.xlu0 %1106
    %vm1108 = vcmp.eq.f32.partialorder %v1105, %v1107
    %v1109 = vsel %vm1108, %v1104, inf
    %1110 = vmin.xlane.f32.xlu0 %v1109
    %v1111 = vpop.xlane.xlu0 %1110
    %v1112 = vcvt.f32.s32 %v1111
    %v1113 = vcvt.f32.s32 %v1107
    %v1114 = vshll.u32 %v1113, 16
    %v1115 = vadd.s32 %v1114, %v1112
    %v1116 = vsel %vm1018, %v1086, 2147483647
    %v1117 = vand.u32 %v1116, 65535
    %v1118 = vshra.s32 %v1116, 16
    %v1119 = vcvt.s32.f32 %v1117
    %v1120 = vcvt.s32.f32 %v1118
    %1121 = vmin.xlane.f32.xlu0 %v1120
    %v1122 = vpop.xlane.xlu0 %1121
    %vm1123 = vcmp.eq.f32.partialorder %v1120, %v1122
    %v1124 = vsel %vm1123, %v1119, inf
    %1125 = vmin.xlane.f32.xlu0 %v1124
    %v1126 = vpop.xlane.xlu0 %1125
    %v1127 = vcvt.f32.s32 %v1126
    %v1128 = vcvt.f32.s32 %v1122
    %v1129 = vshll.u32 %v1128, 16
    %v1130 = vadd.s32 %v1129, %v1127
    %v1131 = vsel %vm1018, %v1087, 2147483647
    %v1132 = vand.u32 %v1131, 65535
    %v1133 = vshra.s32 %v1131, 16
    %v1134 = vcvt.s32.f32 %v1132
    %v1135 = vcvt.s32.f32 %v1133
    %1136 = vmin.xlane.f32.xlu0 %v1135
    %v1137 = vpop.xlane.xlu0 %1136
    %vm1138 = vcmp.eq.f32.partialorder %v1135, %v1137
    %v1139 = vsel %vm1138, %v1134, inf
    %1140 = vmin.xlane.f32.xlu0 %v1139
    %v1141 = vpop.xlane.xlu0 %1140
    %v1142 = vcvt.f32.s32 %v1141
    %v1143 = vcvt.f32.s32 %v1137
    %v1144 = vshll.u32 %v1143, 16
    %v1145 = vadd.s32 %v1144, %v1142
    %v1146 = vsel %vm1018, %v1088, 2147483647
    %v1147 = vand.u32 %v1146, 65535
    %v1148 = vshra.s32 %v1146, 16
    %v1149 = vcvt.s32.f32 %v1147
    %v1150 = vcvt.s32.f32 %v1148
    %1151 = vmin.xlane.f32.xlu0 %v1150
    %v1152 = vpop.xlane.xlu0 %1151
    %vm1153 = vcmp.eq.f32.partialorder %v1150, %v1152
    %v1154 = vsel %vm1153, %v1149, inf
    %1155 = vmin.xlane.f32.xlu0 %v1154
    %v1156 = vpop.xlane.xlu0 %1155
    %v1157 = vcvt.f32.s32 %v1156
    %v1158 = vcvt.f32.s32 %v1152
    %v1159 = vshll.u32 %v1158, 16
    %v1160 = vadd.s32 %v1159, %v1157
    %v1161 = vsel %vm1018, %v1089, 2147483647
    %v1162 = vand.u32 %v1161, 65535
    %v1163 = vshra.s32 %v1161, 16
    %v1164 = vcvt.s32.f32 %v1162
    %v1165 = vcvt.s32.f32 %v1163
    %1166 = vmin.xlane.f32.xlu0 %v1165
    %v1167 = vpop.xlane.xlu0 %1166
    %vm1168 = vcmp.eq.f32.partialorder %v1165, %v1167
    %v1169 = vsel %vm1168, %v1164, inf
    %1170 = vmin.xlane.f32.xlu0 %v1169
    %v1171 = vpop.xlane.xlu0 %1170
    %v1172 = vcvt.f32.s32 %v1171
    %v1173 = vcvt.f32.s32 %v1167
    %v1174 = vshll.u32 %v1173, 16
    %v1175 = vadd.s32 %v1174, %v1172
    %v1176 = vsel %vm1018, %v1090, 2147483647
    %v1177 = vand.u32 %v1176, 65535
    %v1178 = vshra.s32 %v1176, 16
    %v1179 = vcvt.s32.f32 %v1177
    %v1180 = vcvt.s32.f32 %v1178
    %1181 = vmin.xlane.f32.xlu0 %v1180
    %v1182 = vpop.xlane.xlu0 %1181
    %vm1183 = vcmp.eq.f32.partialorder %v1180, %v1182
    %v1184 = vsel %vm1183, %v1179, inf
    %1185 = vmin.xlane.f32.xlu0 %v1184
    %v1186 = vpop.xlane.xlu0 %1185
    %v1187 = vcvt.f32.s32 %v1186
    %v1188 = vcvt.f32.s32 %v1182
    %v1189 = vshll.u32 %v1188, 16
    %v1190 = vadd.s32 %v1189, %v1187
    %v1191 = vsel %vm1018, %v1091, 2147483647
    %v1192 = vand.u32 %v1191, 65535
    %v1193 = vshra.s32 %v1191, 16
    %v1194 = vcvt.s32.f32 %v1192
    %v1195 = vcvt.s32.f32 %v1193
    %1196 = vmin.xlane.f32.xlu0 %v1195
    %v1197 = vpop.xlane.xlu0 %1196
    %vm1198 = vcmp.eq.f32.partialorder %v1195, %v1197
    %v1199 = vsel %vm1198, %v1194, inf
    %1200 = vmin.xlane.f32.xlu0 %v1199
    %v1201 = vpop.xlane.xlu0 %1200
    %v1202 = vcvt.f32.s32 %v1201
    %v1203 = vcvt.f32.s32 %v1197
    %v1204 = vshll.u32 %v1203, 16
    %v1205 = vadd.s32 %v1204, %v1202
    %v1206 = vsel %vm1018, %v1092, 2147483647
    %v1207 = vand.u32 %v1206, 65535
    %v1208 = vshra.s32 %v1206, 16
    %v1209 = vcvt.s32.f32 %v1207
    %v1210 = vcvt.s32.f32 %v1208
    %1211 = vmin.xlane.f32.xlu0 %v1210
    %v1212 = vpop.xlane.xlu0 %1211
    %vm1213 = vcmp.eq.f32.partialorder %v1210, %v1212
    %v1214 = vsel %vm1213, %v1209, inf
    %1215 = vmin.xlane.f32.xlu0 %v1214
    %v1216 = vpop.xlane.xlu0 %1215
    %v1217 = vcvt.f32.s32 %v1216
    %v1218 = vcvt.f32.s32 %v1212
    %v1219 = vshll.u32 %v1218, 16
    %v1220 = vadd.s32 %v1219, %v1217
    %v1221 = vsel %vm1018, %v1093, 2147483647
    %v1222 = vand.u32 %v1221, 65535
    %v1223 = vshra.s32 %v1221, 16
    %v1224 = vcvt.s32.f32 %v1222
    %v1225 = vcvt.s32.f32 %v1223
    %1226 = vmin.xlane.f32.xlu0 %v1225
    %v1227 = vpop.xlane.xlu0 %1226
    %vm1228 = vcmp.eq.f32.partialorder %v1225, %v1227
    %v1229 = vsel %vm1228, %v1224, inf
    %1230 = vmin.xlane.f32.xlu0 %v1229
    %v1231 = vpop.xlane.xlu0 %1230
    %v1232 = vcvt.f32.s32 %v1231
    %v1233 = vcvt.f32.s32 %v1227
    %v1234 = vshll.u32 %v1233, 16
    %v1235 = vadd.s32 %v1234, %v1232
    %v1236 = vsel %vm1018, %v1094, 2147483647
    %v1237 = vand.u32 %v1236, 65535
    %v1238 = vshra.s32 %v1236, 16
    %v1239 = vcvt.s32.f32 %v1237
    %v1240 = vcvt.s32.f32 %v1238
    %1241 = vmin.xlane.f32.xlu0 %v1240
    %v1242 = vpop.xlane.xlu0 %1241
    %vm1243 = vcmp.eq.f32.partialorder %v1240, %v1242
    %v1244 = vsel %vm1243, %v1239, inf
    %1245 = vmin.xlane.f32.xlu0 %v1244
    %v1246 = vpop.xlane.xlu0 %1245
    %v1247 = vcvt.f32.s32 %v1246
    %v1248 = vcvt.f32.s32 %v1242
    %v1249 = vshll.u32 %v1248, 16
    %v1250 = vadd.s32 %v1249, %v1247
    %v1251 = vsel %vm1018, %v1095, 2147483647
    %v1252 = vand.u32 %v1251, 65535
    %v1253 = vshra.s32 %v1251, 16
    %v1254 = vcvt.s32.f32 %v1252
    %v1255 = vcvt.s32.f32 %v1253
    %1256 = vmin.xlane.f32.xlu0 %v1255
    %v1257 = vpop.xlane.xlu0 %1256
    %vm1258 = vcmp.eq.f32.partialorder %v1255, %v1257
    %v1259 = vsel %vm1258, %v1254, inf
    %1260 = vmin.xlane.f32.xlu0 %v1259
    %v1261 = vpop.xlane.xlu0 %1260
    %v1262 = vcvt.f32.s32 %v1261
    %v1263 = vcvt.f32.s32 %v1257
    %v1264 = vshll.u32 %v1263, 16
    %v1265 = vadd.s32 %v1264, %v1262
    %v1266 = vsel %vm1018, %v1096, 2147483647
    %v1267 = vand.u32 %v1266, 65535
    %v1268 = vshra.s32 %v1266, 16
    %v1269 = vcvt.s32.f32 %v1267
    %v1270 = vcvt.s32.f32 %v1268
    %1271 = vmin.xlane.f32.xlu0 %v1270
    %v1272 = vpop.xlane.xlu0 %1271
    %vm1273 = vcmp.eq.f32.partialorder %v1270, %v1272
    %v1274 = vsel %vm1273, %v1269, inf
    %1275 = vmin.xlane.f32.xlu0 %v1274
    %v1276 = vpop.xlane.xlu0 %1275
    %v1277 = vcvt.f32.s32 %v1276
    %v1278 = vcvt.f32.s32 %v1272
    %v1279 = vshll.u32 %v1278, 16
    %v1280 = vadd.s32 %v1279, %v1277
    %v1281 = vsel %vm1018, %v1097, 2147483647
    %v1282 = vand.u32 %v1281, 65535
    %v1283 = vshra.s32 %v1281, 16
    %v1284 = vcvt.s32.f32 %v1282
    %v1285 = vcvt.s32.f32 %v1283
    %1286 = vmin.xlane.f32.xlu0 %v1285
    %v1287 = vpop.xlane.xlu0 %1286
    %vm1288 = vcmp.eq.f32.partialorder %v1285, %v1287
    %v1289 = vsel %vm1288, %v1284, inf
    %1290 = vmin.xlane.f32.xlu0 %v1289
    %v1291 = vpop.xlane.xlu0 %1290
    %v1292 = vcvt.f32.s32 %v1291
    %v1293 = vcvt.f32.s32 %v1287
    %v1294 = vshll.u32 %v1293, 16
    %v1295 = vadd.s32 %v1294, %v1292
    %v1296 = vsel %vm1018, %v1098, 2147483647
    %v1297 = vand.u32 %v1296, 65535
    %v1298 = vshra.s32 %v1296, 16
    %v1299 = vcvt.s32.f32 %v1297
    %v1300 = vcvt.s32.f32 %v1298
    %1301 = vmin.xlane.f32.xlu0 %v1300
    %v1302 = vpop.xlane.xlu0 %1301
    %vm1303 = vcmp.eq.f32.partialorder %v1300, %v1302
    %v1304 = vsel %vm1303, %v1299, inf
    %1305 = vmin.xlane.f32.xlu0 %v1304
    %v1306 = vpop.xlane.xlu0 %1305
    %v1307 = vcvt.f32.s32 %v1306
    %v1308 = vcvt.f32.s32 %v1302
    %v1309 = vshll.u32 %v1308, 16
    %v1310 = vadd.s32 %v1309, %v1307
    %v1311 = vsel %vm1018, %v1099, 2147483647
    %v1312 = vand.u32 %v1311, 65535
    %v1313 = vshra.s32 %v1311, 16
    %v1314 = vcvt.s32.f32 %v1312
    %v1315 = vcvt.s32.f32 %v1313
    %1316 = vmin.xlane.f32.xlu0 %v1315
    %v1317 = vpop.xlane.xlu0 %1316
    %vm1318 = vcmp.eq.f32.partialorder %v1315, %v1317
    %v1319 = vsel %vm1318, %v1314, inf
    %1320 = vmin.xlane.f32.xlu0 %v1319
    %v1321 = vpop.xlane.xlu0 %1320
    %v1322 = vcvt.f32.s32 %v1321
    %v1323 = vcvt.f32.s32 %v1317
    %v1324 = vshll.u32 %v1323, 16
    %v1325 = vadd.s32 %v1324, %v1322
    %v1326 = vsel %vm1018, %v1100, 2147483647
    %v1327 = vand.u32 %v1326, 65535
    %v1328 = vshra.s32 %v1326, 16
    %v1329 = vcvt.s32.f32 %v1327
    %v1330 = vcvt.s32.f32 %v1328
    %1331 = vmin.xlane.f32.xlu0 %v1330
    %v1332 = vpop.xlane.xlu0 %1331
    %vm1333 = vcmp.eq.f32.partialorder %v1330, %v1332
    %v1334 = vsel %vm1333, %v1329, inf
    %1335 = vmin.xlane.f32.xlu0 %v1334
    %v1336 = vpop.xlane.xlu0 %1335
    %v1337 = vcvt.f32.s32 %v1336
    %v1338 = vcvt.f32.s32 %v1332
    %v1339 = vshll.u32 %v1338, 16
    %v1340 = vadd.s32 %v1339, %v1337
    %v1341 = vadd.s32 %v1115, 64
    %v1342 = vadd.s32 %v1130, 64
    %v1343 = vadd.s32 %v1145, 64
    %v1344 = vadd.s32 %v1160, 64
    %v1345 = vadd.s32 %v1175, 64
    %v1346 = vadd.s32 %v1190, 64
    %v1347 = vadd.s32 %v1205, 64
    %v1348 = vadd.s32 %v1220, 64
    %v1349 = vadd.s32 %v1235, 64
    %v1350 = vadd.s32 %v1250, 64
    %v1351 = vadd.s32 %v1265, 64
    %v1352 = vadd.s32 %v1280, 64
    %v1353 = vadd.s32 %v1295, 64
    %v1354 = vadd.s32 %v1310, 64
    %v1355 = vadd.s32 %v1325, 64
    %v1356 = vadd.s32 %v1340, 64
    %vm1357 = vcmp.eq.s32.totalorder %v567, %v1341
    %vm1358 = vcmp.eq.s32.totalorder %v568, %v1341
    %vm1359 = vcmp.eq.s32.totalorder %v567, %v1342
    %vm1360 = vcmp.eq.s32.totalorder %v568, %v1342
    %vm1361 = vcmp.eq.s32.totalorder %v567, %v1343
    %vm1362 = vcmp.eq.s32.totalorder %v568, %v1343
    %vm1363 = vcmp.eq.s32.totalorder %v567, %v1344
    %vm1364 = vcmp.eq.s32.totalorder %v568, %v1344
    %vm1365 = vcmp.eq.s32.totalorder %v567, %v1345
    %vm1366 = vcmp.eq.s32.totalorder %v568, %v1345
    %vm1367 = vcmp.eq.s32.totalorder %v567, %v1346
    %vm1368 = vcmp.eq.s32.totalorder %v568, %v1346
    %vm1369 = vcmp.eq.s32.totalorder %v567, %v1347
    %vm1370 = vcmp.eq.s32.totalorder %v568, %v1347
    %vm1371 = vcmp.eq.s32.totalorder %v567, %v1348
    %vm1372 = vcmp.eq.s32.totalorder %v568, %v1348
    %vm1373 = vcmp.eq.s32.totalorder %v567, %v1349
    %vm1374 = vcmp.eq.s32.totalorder %v568, %v1349
    %vm1375 = vcmp.eq.s32.totalorder %v567, %v1350
    %vm1376 = vcmp.eq.s32.totalorder %v568, %v1350
    %vm1377 = vcmp.eq.s32.totalorder %v567, %v1351
    %vm1378 = vcmp.eq.s32.totalorder %v568, %v1351
    %vm1379 = vcmp.eq.s32.totalorder %v567, %v1352
    %vm1380 = vcmp.eq.s32.totalorder %v568, %v1352
    %vm1381 = vcmp.eq.s32.totalorder %v567, %v1353
    %vm1382 = vcmp.eq.s32.totalorder %v568, %v1353
    %vm1383 = vcmp.eq.s32.totalorder %v567, %v1354
    %vm1384 = vcmp.eq.s32.totalorder %v568, %v1354
    %vm1385 = vcmp.eq.s32.totalorder %v567, %v1355
    %vm1386 = vcmp.eq.s32.totalorder %v568, %v1355
    %vm1387 = vcmp.eq.s32.totalorder %v567, %v1356
    %vm1388 = vcmp.eq.s32.totalorder %v568, %v1356
    %v1389 = vsel %vm1357, 1, 0
    %v1390 = vsel %vm1358, 1, 0
    %v1391 = vsel %vm1359, 1, 0
    %v1392 = vsel %vm1360, 1, 0
    %v1393 = vsel %vm1361, 1, 0
    %v1394 = vsel %vm1362, 1, 0
    %v1395 = vsel %vm1363, 1, 0
    %v1396 = vsel %vm1364, 1, 0
    %v1397 = vsel %vm1365, 1, 0
    %v1398 = vsel %vm1366, 1, 0
    %v1399 = vsel %vm1367, 1, 0
    %v1400 = vsel %vm1368, 1, 0
    %v1401 = vsel %vm1369, 1, 0
    %v1402 = vsel %vm1370, 1, 0
    %v1403 = vsel %vm1371, 1, 0
    %v1404 = vsel %vm1372, 1, 0
    %v1405 = vsel %vm1373, 1, 0
    %v1406 = vsel %vm1374, 1, 0
    %v1407 = vsel %vm1375, 1, 0
    %v1408 = vsel %vm1376, 1, 0
    %v1409 = vsel %vm1377, 1, 0
    %v1410 = vsel %vm1378, 1, 0
    %v1411 = vsel %vm1379, 1, 0
    %v1412 = vsel %vm1380, 1, 0
    %v1413 = vsel %vm1381, 1, 0
    %v1414 = vsel %vm1382, 1, 0
    %v1415 = vsel %vm1383, 1, 0
    %v1416 = vsel %vm1384, 1, 0
    %v1417 = vsel %vm1385, 1, 0
    %v1418 = vsel %vm1386, 1, 0
    %v1419 = vsel %vm1387, 1, 0
    %v1420 = vsel %vm1388, 1, 0
    %v1421 = vcvt.s32.f32 %v1389
    %v1422 = vcvt.s32.f32 %v1390
    %v1423 = vcvt.s32.f32 %v1391
    %v1424 = vcvt.s32.f32 %v1392
    %v1425 = vcvt.s32.f32 %v1393
    %v1426 = vcvt.s32.f32 %v1394
    %v1427 = vcvt.s32.f32 %v1395
    %v1428 = vcvt.s32.f32 %v1396
    %v1429 = vcvt.s32.f32 %v1397
    %v1430 = vcvt.s32.f32 %v1398
    %v1431 = vcvt.s32.f32 %v1399
    %v1432 = vcvt.s32.f32 %v1400
    %v1433 = vcvt.s32.f32 %v1401
    %v1434 = vcvt.s32.f32 %v1402
    %v1435 = vcvt.s32.f32 %v1403
    %v1436 = vcvt.s32.f32 %v1404
    %v1437 = vcvt.s32.f32 %v1405
    %v1438 = vcvt.s32.f32 %v1406
    %v1439 = vcvt.s32.f32 %v1407
    %v1440 = vcvt.s32.f32 %v1408
    %v1441 = vcvt.s32.f32 %v1409
    %v1442 = vcvt.s32.f32 %v1410
    %v1443 = vcvt.s32.f32 %v1411
    %v1444 = vcvt.s32.f32 %v1412
    %v1445 = vcvt.s32.f32 %v1413
    %v1446 = vcvt.s32.f32 %v1414
    %v1447 = vcvt.s32.f32 %v1415
    %v1448 = vcvt.s32.f32 %v1416
    %v1449 = vcvt.s32.f32 %v1417
    %v1450 = vcvt.s32.f32 %v1418
    %v1451 = vcvt.s32.f32 %v1419
    %v1452 = vcvt.s32.f32 %v1420
    %v1453 = vadd.f32 %v986, %v1421
    %v1454 = vadd.f32 %v987, %v1422
    %v1455 = vadd.f32 %v988, %v1423
    %v1456 = vadd.f32 %v989, %v1424
    %v1457 = vadd.f32 %v990, %v1425
    %v1458 = vadd.f32 %v991, %v1426
    %v1459 = vadd.f32 %v992, %v1427
    %v1460 = vadd.f32 %v993, %v1428
    %v1461 = vadd.f32 %v994, %v1429
    %v1462 = vadd.f32 %v995, %v1430
    %v1463 = vadd.f32 %v996, %v1431
    %v1464 = vadd.f32 %v997, %v1432
    %v1465 = vadd.f32 %v998, %v1433
    %v1466 = vadd.f32 %v999, %v1434
    %v1467 = vadd.f32 %v1000, %v1435
    %v1468 = vadd.f32 %v1001, %v1436
    %v1469 = vadd.f32 %v1002, %v1437
    %v1470 = vadd.f32 %v1003, %v1438
    %v1471 = vadd.f32 %v1004, %v1439
    %v1472 = vadd.f32 %v1005, %v1440
    %v1473 = vadd.f32 %v1006, %v1441
    %v1474 = vadd.f32 %v1007, %v1442
    %v1475 = vadd.f32 %v1008, %v1443
    %v1476 = vadd.f32 %v1009, %v1444
    %v1477 = vadd.f32 %v1010, %v1445
    %v1478 = vadd.f32 %v1011, %v1446
    %v1479 = vadd.f32 %v1012, %v1447
    %v1480 = vadd.f32 %v1013, %v1448
    %v1481 = vadd.f32 %v1014, %v1449
    %v1482 = vadd.f32 %v1015, %v1450
    %v1483 = vadd.f32 %v1016, %v1451
    %v1484 = vadd.f32 %v1017, %v1452
    %v1485 = vsel %vm569, %v535, inf
    %1486 = vmin.xlane.f32.xlu0 %v1485
    %v1487 = vpop.xlane.xlu0 %1486
    %v1488 = vsel %vm569, %v537, inf
    %1489 = vmin.xlane.f32.xlu0 %v1488
    %v1490 = vpop.xlane.xlu0 %1489
    %v1491 = vsel %vm569, %v539, inf
    %1492 = vmin.xlane.f32.xlu0 %v1491
    %v1493 = vpop.xlane.xlu0 %1492
    %v1494 = vsel %vm569, %v541, inf
    %1495 = vmin.xlane.f32.xlu0 %v1494
    %v1496 = vpop.xlane.xlu0 %1495
    %v1497 = vsel %vm569, %v543, inf
    %1498 = vmin.xlane.f32.xlu0 %v1497
    %v1499 = vpop.xlane.xlu0 %1498
    %v1500 = vsel %vm569, %v545, inf
    %1501 = vmin.xlane.f32.xlu0 %v1500
    %v1502 = vpop.xlane.xlu0 %1501
    %v1503 = vsel %vm569, %v547, inf
    %1504 = vmin.xlane.f32.xlu0 %v1503
    %v1505 = vpop.xlane.xlu0 %1504
    %v1506 = vsel %vm569, %v549, inf
    %1507 = vmin.xlane.f32.xlu0 %v1506
    %v1508 = vpop.xlane.xlu0 %1507
    %v1509 = vsel %vm569, %v551, inf
    %1510 = vmin.xlane.f32.xlu0 %v1509
    %v1511 = vpop.xlane.xlu0 %1510
    %v1512 = vsel %vm569, %v553, inf
    %1513 = vmin.xlane.f32.xlu0 %v1512
    %v1514 = vpop.xlane.xlu0 %1513
    %v1515 = vsel %vm569, %v555, inf
    %1516 = vmin.xlane.f32.xlu0 %v1515
    %v1517 = vpop.xlane.xlu0 %1516
    %v1518 = vsel %vm569, %v557, inf
    %1519 = vmin.xlane.f32.xlu0 %v1518
    %v1520 = vpop.xlane.xlu0 %1519
    %v1521 = vsel %vm569, %v559, inf
    %1522 = vmin.xlane.f32.xlu0 %v1521
    %v1523 = vpop.xlane.xlu0 %1522
    %v1524 = vsel %vm569, %v561, inf
    %1525 = vmin.xlane.f32.xlu0 %v1524
    %v1526 = vpop.xlane.xlu0 %1525
    %v1527 = vsel %vm569, %v563, inf
    %1528 = vmin.xlane.f32.xlu0 %v1527
    %v1529 = vpop.xlane.xlu0 %1528
    %v1530 = vsel %vm569, %v565, inf
    %1531 = vmin.xlane.f32.xlu0 %v1530
    %v1532 = vpop.xlane.xlu0 %1531
    %vm1533 = vcmp.eq.f32.partialorder %v535, %v1487
    %vm1534 = vcmp.eq.f32.partialorder %v537, %v1490
    %vm1535 = vcmp.eq.f32.partialorder %v539, %v1493
    %vm1536 = vcmp.eq.f32.partialorder %v541, %v1496
    %vm1537 = vcmp.eq.f32.partialorder %v543, %v1499
    %vm1538 = vcmp.eq.f32.partialorder %v545, %v1502
    %vm1539 = vcmp.eq.f32.partialorder %v547, %v1505
    %vm1540 = vcmp.eq.f32.partialorder %v549, %v1508
    %vm1541 = vcmp.eq.f32.partialorder %v551, %v1511
    %vm1542 = vcmp.eq.f32.partialorder %v553, %v1514
    %vm1543 = vcmp.eq.f32.partialorder %v555, %v1517
    %vm1544 = vcmp.eq.f32.partialorder %v557, %v1520
    %vm1545 = vcmp.eq.f32.partialorder %v559, %v1523
    %vm1546 = vcmp.eq.f32.partialorder %v561, %v1526
    %vm1547 = vcmp.eq.f32.partialorder %v563, %v1529
    %vm1548 = vcmp.eq.f32.partialorder %v565, %v1532
    %v1549 = vsel %vm1533, %v567, 64
    %v1550 = vsel %vm1534, %v567, 64
    %v1551 = vsel %vm1535, %v567, 64
    %v1552 = vsel %vm1536, %v567, 64
    %v1553 = vsel %vm1537, %v567, 64
    %v1554 = vsel %vm1538, %v567, 64
    %v1555 = vsel %vm1539, %v567, 64
    %v1556 = vsel %vm1540, %v567, 64
    %v1557 = vsel %vm1541, %v567, 64
    %v1558 = vsel %vm1542, %v567, 64
    %v1559 = vsel %vm1543, %v567, 64
    %v1560 = vsel %vm1544, %v567, 64
    %v1561 = vsel %vm1545, %v567, 64
    %v1562 = vsel %vm1546, %v567, 64
    %v1563 = vsel %vm1547, %v567, 64
    %v1564 = vsel %vm1548, %v567, 64
    %v1565 = vsel %vm569, %v1549, 2147483647
    %v1566 = vand.u32 %v1565, 65535
    %v1567 = vshra.s32 %v1565, 16
    %v1568 = vcvt.s32.f32 %v1566
    %v1569 = vcvt.s32.f32 %v1567
    %1570 = vmin.xlane.f32.xlu0 %v1569
    %v1571 = vpop.xlane.xlu0 %1570
    %vm1572 = vcmp.eq.f32.partialorder %v1569, %v1571
    %v1573 = vsel %vm1572, %v1568, inf
    %1574 = vmin.xlane.f32.xlu0 %v1573
    %v1575 = vpop.xlane.xlu0 %1574
    %v1576 = vcvt.f32.s32 %v1575
    %v1577 = vcvt.f32.s32 %v1571
    %v1578 = vshll.u32 %v1577, 16
    %v1579 = vadd.s32 %v1578, %v1576
    %v1580 = vsel %vm569, %v1550, 2147483647
    %v1581 = vand.u32 %v1580, 65535
    %v1582 = vshra.s32 %v1580, 16
    %v1583 = vcvt.s32.f32 %v1581
    %v1584 = vcvt.s32.f32 %v1582
    %1585 = vmin.xlane.f32.xlu0 %v1584
    %v1586 = vpop.xlane.xlu0 %1585
    %vm1587 = vcmp.eq.f32.partialorder %v1584, %v1586
    %v1588 = vsel %vm1587, %v1583, inf
    %1589 = vmin.xlane.f32.xlu0 %v1588
    %v1590 = vpop.xlane.xlu0 %1589
    %v1591 = vcvt.f32.s32 %v1590
    %v1592 = vcvt.f32.s32 %v1586
    %v1593 = vshll.u32 %v1592, 16
    %v1594 = vadd.s32 %v1593, %v1591
    %v1595 = vsel %vm569, %v1551, 2147483647
    %v1596 = vand.u32 %v1595, 65535
    %v1597 = vshra.s32 %v1595, 16
    %v1598 = vcvt.s32.f32 %v1596
    %v1599 = vcvt.s32.f32 %v1597
    %1600 = vmin.xlane.f32.xlu0 %v1599
    %v1601 = vpop.xlane.xlu0 %1600
    %vm1602 = vcmp.eq.f32.partialorder %v1599, %v1601
    %v1603 = vsel %vm1602, %v1598, inf
    %1604 = vmin.xlane.f32.xlu0 %v1603
    %v1605 = vpop.xlane.xlu0 %1604
    %v1606 = vcvt.f32.s32 %v1605
    %v1607 = vcvt.f32.s32 %v1601
    %v1608 = vshll.u32 %v1607, 16
    %v1609 = vadd.s32 %v1608, %v1606
    %v1610 = vsel %vm569, %v1552, 2147483647
    %v1611 = vand.u32 %v1610, 65535
    %v1612 = vshra.s32 %v1610, 16
    %v1613 = vcvt.s32.f32 %v1611
    %v1614 = vcvt.s32.f32 %v1612
    %1615 = vmin.xlane.f32.xlu0 %v1614
    %v1616 = vpop.xlane.xlu0 %1615
    %vm1617 = vcmp.eq.f32.partialorder %v1614, %v1616
    %v1618 = vsel %vm1617, %v1613, inf
    %1619 = vmin.xlane.f32.xlu0 %v1618
    %v1620 = vpop.xlane.xlu0 %1619
    %v1621 = vcvt.f32.s32 %v1620
    %v1622 = vcvt.f32.s32 %v1616
    %v1623 = vshll.u32 %v1622, 16
    %v1624 = vadd.s32 %v1623, %v1621
    %v1625 = vsel %vm569, %v1553, 2147483647
    %v1626 = vand.u32 %v1625, 65535
    %v1627 = vshra.s32 %v1625, 16
    %v1628 = vcvt.s32.f32 %v1626
    %v1629 = vcvt.s32.f32 %v1627
    %1630 = vmin.xlane.f32.xlu0 %v1629
    %v1631 = vpop.xlane.xlu0 %1630
    %vm1632 = vcmp.eq.f32.partialorder %v1629, %v1631
    %v1633 = vsel %vm1632, %v1628, inf
    %1634 = vmin.xlane.f32.xlu0 %v1633
    %v1635 = vpop.xlane.xlu0 %1634
    %v1636 = vcvt.f32.s32 %v1635
    %v1637 = vcvt.f32.s32 %v1631
    %v1638 = vshll.u32 %v1637, 16
    %v1639 = vadd.s32 %v1638, %v1636
    %v1640 = vsel %vm569, %v1554, 2147483647
    %v1641 = vand.u32 %v1640, 65535
    %v1642 = vshra.s32 %v1640, 16
    %v1643 = vcvt.s32.f32 %v1641
    %v1644 = vcvt.s32.f32 %v1642
    %1645 = vmin.xlane.f32.xlu0 %v1644
    %v1646 = vpop.xlane.xlu0 %1645
    %vm1647 = vcmp.eq.f32.partialorder %v1644, %v1646
    %v1648 = vsel %vm1647, %v1643, inf
    %1649 = vmin.xlane.f32.xlu0 %v1648
    %v1650 = vpop.xlane.xlu0 %1649
    %v1651 = vcvt.f32.s32 %v1650
    %v1652 = vcvt.f32.s32 %v1646
    %v1653 = vshll.u32 %v1652, 16
    %v1654 = vadd.s32 %v1653, %v1651
    %v1655 = vsel %vm569, %v1555, 2147483647
    %v1656 = vand.u32 %v1655, 65535
    %v1657 = vshra.s32 %v1655, 16
    %v1658 = vcvt.s32.f32 %v1656
    %v1659 = vcvt.s32.f32 %v1657
    %1660 = vmin.xlane.f32.xlu0 %v1659
    %v1661 = vpop.xlane.xlu0 %1660
    %vm1662 = vcmp.eq.f32.partialorder %v1659, %v1661
    %v1663 = vsel %vm1662, %v1658, inf
    %1664 = vmin.xlane.f32.xlu0 %v1663
    %v1665 = vpop.xlane.xlu0 %1664
    %v1666 = vcvt.f32.s32 %v1665
    %v1667 = vcvt.f32.s32 %v1661
    %v1668 = vshll.u32 %v1667, 16
    %v1669 = vadd.s32 %v1668, %v1666
    %v1670 = vsel %vm569, %v1556, 2147483647
    %v1671 = vand.u32 %v1670, 65535
    %v1672 = vshra.s32 %v1670, 16
    %v1673 = vcvt.s32.f32 %v1671
    %v1674 = vcvt.s32.f32 %v1672
    %1675 = vmin.xlane.f32.xlu0 %v1674
    %v1676 = vpop.xlane.xlu0 %1675
    %vm1677 = vcmp.eq.f32.partialorder %v1674, %v1676
    %v1678 = vsel %vm1677, %v1673, inf
    %1679 = vmin.xlane.f32.xlu0 %v1678
    %v1680 = vpop.xlane.xlu0 %1679
    %v1681 = vcvt.f32.s32 %v1680
    %v1682 = vcvt.f32.s32 %v1676
    %v1683 = vshll.u32 %v1682, 16
    %v1684 = vadd.s32 %v1683, %v1681
    %v1685 = vsel %vm569, %v1557, 2147483647
    %v1686 = vand.u32 %v1685, 65535
    %v1687 = vshra.s32 %v1685, 16
    %v1688 = vcvt.s32.f32 %v1686
    %v1689 = vcvt.s32.f32 %v1687
    %1690 = vmin.xlane.f32.xlu0 %v1689
    %v1691 = vpop.xlane.xlu0 %1690
    %vm1692 = vcmp.eq.f32.partialorder %v1689, %v1691
    %v1693 = vsel %vm1692, %v1688, inf
    %1694 = vmin.xlane.f32.xlu0 %v1693
    %v1695 = vpop.xlane.xlu0 %1694
    %v1696 = vcvt.f32.s32 %v1695
    %v1697 = vcvt.f32.s32 %v1691
    %v1698 = vshll.u32 %v1697, 16
    %v1699 = vadd.s32 %v1698, %v1696
    %v1700 = vsel %vm569, %v1558, 2147483647
    %v1701 = vand.u32 %v1700, 65535
    %v1702 = vshra.s32 %v1700, 16
    %v1703 = vcvt.s32.f32 %v1701
    %v1704 = vcvt.s32.f32 %v1702
    %1705 = vmin.xlane.f32.xlu0 %v1704
    %v1706 = vpop.xlane.xlu0 %1705
    %vm1707 = vcmp.eq.f32.partialorder %v1704, %v1706
    %v1708 = vsel %vm1707, %v1703, inf
    %1709 = vmin.xlane.f32.xlu0 %v1708
    %v1710 = vpop.xlane.xlu0 %1709
    %v1711 = vcvt.f32.s32 %v1710
    %v1712 = vcvt.f32.s32 %v1706
    %v1713 = vshll.u32 %v1712, 16
    %v1714 = vadd.s32 %v1713, %v1711
    %v1715 = vsel %vm569, %v1559, 2147483647
    %v1716 = vand.u32 %v1715, 65535
    %v1717 = vshra.s32 %v1715, 16
    %v1718 = vcvt.s32.f32 %v1716
    %v1719 = vcvt.s32.f32 %v1717
    %1720 = vmin.xlane.f32.xlu0 %v1719
    %v1721 = vpop.xlane.xlu0 %1720
    %vm1722 = vcmp.eq.f32.partialorder %v1719, %v1721
    %v1723 = vsel %vm1722, %v1718, inf
    %1724 = vmin.xlane.f32.xlu0 %v1723
    %v1725 = vpop.xlane.xlu0 %1724
    %v1726 = vcvt.f32.s32 %v1725
    %v1727 = vcvt.f32.s32 %v1721
    %v1728 = vshll.u32 %v1727, 16
    %v1729 = vadd.s32 %v1728, %v1726
    %v1730 = vsel %vm569, %v1560, 2147483647
    %v1731 = vand.u32 %v1730, 65535
    %v1732 = vshra.s32 %v1730, 16
    %v1733 = vcvt.s32.f32 %v1731
    %v1734 = vcvt.s32.f32 %v1732
    %1735 = vmin.xlane.f32.xlu0 %v1734
    %v1736 = vpop.xlane.xlu0 %1735
    %vm1737 = vcmp.eq.f32.partialorder %v1734, %v1736
    %v1738 = vsel %vm1737, %v1733, inf
    %1739 = vmin.xlane.f32.xlu0 %v1738
    %v1740 = vpop.xlane.xlu0 %1739
    %v1741 = vcvt.f32.s32 %v1740
    %v1742 = vcvt.f32.s32 %v1736
    %v1743 = vshll.u32 %v1742, 16
    %v1744 = vadd.s32 %v1743, %v1741
    %v1745 = vsel %vm569, %v1561, 2147483647
    %v1746 = vand.u32 %v1745, 65535
    %v1747 = vshra.s32 %v1745, 16
    %v1748 = vcvt.s32.f32 %v1746
    %v1749 = vcvt.s32.f32 %v1747
    %1750 = vmin.xlane.f32.xlu0 %v1749
    %v1751 = vpop.xlane.xlu0 %1750
    %vm1752 = vcmp.eq.f32.partialorder %v1749, %v1751
    %v1753 = vsel %vm1752, %v1748, inf
    %1754 = vmin.xlane.f32.xlu0 %v1753
    %v1755 = vpop.xlane.xlu0 %1754
    %v1756 = vcvt.f32.s32 %v1755
    %v1757 = vcvt.f32.s32 %v1751
    %v1758 = vshll.u32 %v1757, 16
    %v1759 = vadd.s32 %v1758, %v1756
    %v1760 = vsel %vm569, %v1562, 2147483647
    %v1761 = vand.u32 %v1760, 65535
    %v1762 = vshra.s32 %v1760, 16
    %v1763 = vcvt.s32.f32 %v1761
    %v1764 = vcvt.s32.f32 %v1762
    %1765 = vmin.xlane.f32.xlu0 %v1764
    %v1766 = vpop.xlane.xlu0 %1765
    %vm1767 = vcmp.eq.f32.partialorder %v1764, %v1766
    %v1768 = vsel %vm1767, %v1763, inf
    %1769 = vmin.xlane.f32.xlu0 %v1768
    %v1770 = vpop.xlane.xlu0 %1769
    %v1771 = vcvt.f32.s32 %v1770
    %v1772 = vcvt.f32.s32 %v1766
    %v1773 = vshll.u32 %v1772, 16
    %v1774 = vadd.s32 %v1773, %v1771
    %v1775 = vsel %vm569, %v1563, 2147483647
    %v1776 = vand.u32 %v1775, 65535
    %v1777 = vshra.s32 %v1775, 16
    %v1778 = vcvt.s32.f32 %v1776
    %v1779 = vcvt.s32.f32 %v1777
    %1780 = vmin.xlane.f32.xlu0 %v1779
    %v1781 = vpop.xlane.xlu0 %1780
    %vm1782 = vcmp.eq.f32.partialorder %v1779, %v1781
    %v1783 = vsel %vm1782, %v1778, inf
    %1784 = vmin.xlane.f32.xlu0 %v1783
    %v1785 = vpop.xlane.xlu0 %1784
    %v1786 = vcvt.f32.s32 %v1785
    %v1787 = vcvt.f32.s32 %v1781
    %v1788 = vshll.u32 %v1787, 16
    %v1789 = vadd.s32 %v1788, %v1786
    %v1790 = vsel %vm569, %v1564, 2147483647
    %v1791 = vand.u32 %v1790, 65535
    %v1792 = vshra.s32 %v1790, 16
    %v1793 = vcvt.s32.f32 %v1791
    %v1794 = vcvt.s32.f32 %v1792
    %1795 = vmin.xlane.f32.xlu0 %v1794
    %v1796 = vpop.xlane.xlu0 %1795
    %vm1797 = vcmp.eq.f32.partialorder %v1794, %v1796
    %v1798 = vsel %vm1797, %v1793, inf
    %1799 = vmin.xlane.f32.xlu0 %v1798
    %v1800 = vpop.xlane.xlu0 %1799
    %v1801 = vcvt.f32.s32 %v1800
    %v1802 = vcvt.f32.s32 %v1796
    %v1803 = vshll.u32 %v1802, 16
    %v1804 = vadd.s32 %v1803, %v1801
    %v1805 = vadd.s32 %v1579, 128
    %v1806 = vadd.s32 %v1594, 128
    %v1807 = vadd.s32 %v1609, 128
    %v1808 = vadd.s32 %v1624, 128
    %v1809 = vadd.s32 %v1639, 128
    %v1810 = vadd.s32 %v1654, 128
    %v1811 = vadd.s32 %v1669, 128
    %v1812 = vadd.s32 %v1684, 128
    %v1813 = vadd.s32 %v1699, 128
    %v1814 = vadd.s32 %v1714, 128
    %v1815 = vadd.s32 %v1729, 128
    %v1816 = vadd.s32 %v1744, 128
    %v1817 = vadd.s32 %v1759, 128
    %v1818 = vadd.s32 %v1774, 128
    %v1819 = vadd.s32 %v1789, 128
    %v1820 = vadd.s32 %v1804, 128
    %vm1821 = vcmp.eq.s32.totalorder %v567, %v1805
    %vm1822 = vcmp.eq.s32.totalorder %v568, %v1805
    %vm1823 = vcmp.eq.s32.totalorder %v567, %v1806
    %vm1824 = vcmp.eq.s32.totalorder %v568, %v1806
    %vm1825 = vcmp.eq.s32.totalorder %v567, %v1807
    %vm1826 = vcmp.eq.s32.totalorder %v568, %v1807
    %vm1827 = vcmp.eq.s32.totalorder %v567, %v1808
    %vm1828 = vcmp.eq.s32.totalorder %v568, %v1808
    %vm1829 = vcmp.eq.s32.totalorder %v567, %v1809
    %vm1830 = vcmp.eq.s32.totalorder %v568, %v1809
    %vm1831 = vcmp.eq.s32.totalorder %v567, %v1810
    %vm1832 = vcmp.eq.s32.totalorder %v568, %v1810
    %vm1833 = vcmp.eq.s32.totalorder %v567, %v1811
    %vm1834 = vcmp.eq.s32.totalorder %v568, %v1811
    %vm1835 = vcmp.eq.s32.totalorder %v567, %v1812
    %vm1836 = vcmp.eq.s32.totalorder %v568, %v1812
    %vm1837 = vcmp.eq.s32.totalorder %v567, %v1813
    %vm1838 = vcmp.eq.s32.totalorder %v568, %v1813
    %vm1839 = vcmp.eq.s32.totalorder %v567, %v1814
    %vm1840 = vcmp.eq.s32.totalorder %v568, %v1814
    %vm1841 = vcmp.eq.s32.totalorder %v567, %v1815
    %vm1842 = vcmp.eq.s32.totalorder %v568, %v1815
    %vm1843 = vcmp.eq.s32.totalorder %v567, %v1816
    %vm1844 = vcmp.eq.s32.totalorder %v568, %v1816
    %vm1845 = vcmp.eq.s32.totalorder %v567, %v1817
    %vm1846 = vcmp.eq.s32.totalorder %v568, %v1817
    %vm1847 = vcmp.eq.s32.totalorder %v567, %v1818
    %vm1848 = vcmp.eq.s32.totalorder %v568, %v1818
    %vm1849 = vcmp.eq.s32.totalorder %v567, %v1819
    %vm1850 = vcmp.eq.s32.totalorder %v568, %v1819
    %vm1851 = vcmp.eq.s32.totalorder %v567, %v1820
    %vm1852 = vcmp.eq.s32.totalorder %v568, %v1820
    %v1853 = vsel %vm1821, 1, 0
    %v1854 = vsel %vm1822, 1, 0
    %v1855 = vsel %vm1823, 1, 0
    %v1856 = vsel %vm1824, 1, 0
    %v1857 = vsel %vm1825, 1, 0
    %v1858 = vsel %vm1826, 1, 0
    %v1859 = vsel %vm1827, 1, 0
    %v1860 = vsel %vm1828, 1, 0
    %v1861 = vsel %vm1829, 1, 0
    %v1862 = vsel %vm1830, 1, 0
    %v1863 = vsel %vm1831, 1, 0
    %v1864 = vsel %vm1832, 1, 0
    %v1865 = vsel %vm1833, 1, 0
    %v1866 = vsel %vm1834, 1, 0
    %v1867 = vsel %vm1835, 1, 0
    %v1868 = vsel %vm1836, 1, 0
    %v1869 = vsel %vm1837, 1, 0
    %v1870 = vsel %vm1838, 1, 0
    %v1871 = vsel %vm1839, 1, 0
    %v1872 = vsel %vm1840, 1, 0
    %v1873 = vsel %vm1841, 1, 0
    %v1874 = vsel %vm1842, 1, 0
    %v1875 = vsel %vm1843, 1, 0
    %v1876 = vsel %vm1844, 1, 0
    %v1877 = vsel %vm1845, 1, 0
    %v1878 = vsel %vm1846, 1, 0
    %v1879 = vsel %vm1847, 1, 0
    %v1880 = vsel %vm1848, 1, 0
    %v1881 = vsel %vm1849, 1, 0
    %v1882 = vsel %vm1850, 1, 0
    %v1883 = vsel %vm1851, 1, 0
    %v1884 = vsel %vm1852, 1, 0
    %v1885 = vcvt.s32.f32 %v1853
    %v1886 = vcvt.s32.f32 %v1854
    %v1887 = vcvt.s32.f32 %v1855
    %v1888 = vcvt.s32.f32 %v1856
    %v1889 = vcvt.s32.f32 %v1857
    %v1890 = vcvt.s32.f32 %v1858
    %v1891 = vcvt.s32.f32 %v1859
    %v1892 = vcvt.s32.f32 %v1860
    %v1893 = vcvt.s32.f32 %v1861
    %v1894 = vcvt.s32.f32 %v1862
    %v1895 = vcvt.s32.f32 %v1863
    %v1896 = vcvt.s32.f32 %v1864
    %v1897 = vcvt.s32.f32 %v1865
    %v1898 = vcvt.s32.f32 %v1866
    %v1899 = vcvt.s32.f32 %v1867
    %v1900 = vcvt.s32.f32 %v1868
    %v1901 = vcvt.s32.f32 %v1869
    %v1902 = vcvt.s32.f32 %v1870
    %v1903 = vcvt.s32.f32 %v1871
    %v1904 = vcvt.s32.f32 %v1872
    %v1905 = vcvt.s32.f32 %v1873
    %v1906 = vcvt.s32.f32 %v1874
    %v1907 = vcvt.s32.f32 %v1875
    %v1908 = vcvt.s32.f32 %v1876
    %v1909 = vcvt.s32.f32 %v1877
    %v1910 = vcvt.s32.f32 %v1878
    %v1911 = vcvt.s32.f32 %v1879
    %v1912 = vcvt.s32.f32 %v1880
    %v1913 = vcvt.s32.f32 %v1881
    %v1914 = vcvt.s32.f32 %v1882
    %v1915 = vcvt.s32.f32 %v1883
    %v1916 = vcvt.s32.f32 %v1884
    %v1917 = vadd.f32 %v1453, %v1885
    %v1918 = vadd.f32 %v1454, %v1886
    %v1919 = vadd.f32 %v1455, %v1887
    %v1920 = vadd.f32 %v1456, %v1888
    %v1921 = vadd.f32 %v1457, %v1889
    %v1922 = vadd.f32 %v1458, %v1890
    %v1923 = vadd.f32 %v1459, %v1891
    %v1924 = vadd.f32 %v1460, %v1892
    %v1925 = vadd.f32 %v1461, %v1893
    %v1926 = vadd.f32 %v1462, %v1894
    %v1927 = vadd.f32 %v1463, %v1895
    %v1928 = vadd.f32 %v1464, %v1896
    %v1929 = vadd.f32 %v1465, %v1897
    %v1930 = vadd.f32 %v1466, %v1898
    %v1931 = vadd.f32 %v1467, %v1899
    %v1932 = vadd.f32 %v1468, %v1900
    %v1933 = vadd.f32 %v1469, %v1901
    %v1934 = vadd.f32 %v1470, %v1902
    %v1935 = vadd.f32 %v1471, %v1903
    %v1936 = vadd.f32 %v1472, %v1904
    %v1937 = vadd.f32 %v1473, %v1905
    %v1938 = vadd.f32 %v1474, %v1906
    %v1939 = vadd.f32 %v1475, %v1907
    %v1940 = vadd.f32 %v1476, %v1908
    %v1941 = vadd.f32 %v1477, %v1909
    %v1942 = vadd.f32 %v1478, %v1910
    %v1943 = vadd.f32 %v1479, %v1911
    %v1944 = vadd.f32 %v1480, %v1912
    %v1945 = vadd.f32 %v1481, %v1913
    %v1946 = vadd.f32 %v1482, %v1914
    %v1947 = vadd.f32 %v1483, %v1915
    %v1948 = vadd.f32 %v1484, %v1916
    %v1949 = vsel %vm1018, %v535, inf
    %1950 = vmin.xlane.f32.xlu0 %v1949
    %v1951 = vpop.xlane.xlu0 %1950
    %v1952 = vsel %vm1018, %v537, inf
    %1953 = vmin.xlane.f32.xlu0 %v1952
    %v1954 = vpop.xlane.xlu0 %1953
    %v1955 = vsel %vm1018, %v539, inf
    %1956 = vmin.xlane.f32.xlu0 %v1955
    %v1957 = vpop.xlane.xlu0 %1956
    %v1958 = vsel %vm1018, %v541, inf
    %1959 = vmin.xlane.f32.xlu0 %v1958
    %v1960 = vpop.xlane.xlu0 %1959
    %v1961 = vsel %vm1018, %v543, inf
    %1962 = vmin.xlane.f32.xlu0 %v1961
    %v1963 = vpop.xlane.xlu0 %1962
    %v1964 = vsel %vm1018, %v545, inf
    %1965 = vmin.xlane.f32.xlu0 %v1964
    %v1966 = vpop.xlane.xlu0 %1965
    %v1967 = vsel %vm1018, %v547, inf
    %1968 = vmin.xlane.f32.xlu0 %v1967
    %v1969 = vpop.xlane.xlu0 %1968
    %v1970 = vsel %vm1018, %v549, inf
    %1971 = vmin.xlane.f32.xlu0 %v1970
    %v1972 = vpop.xlane.xlu0 %1971
    %v1973 = vsel %vm1018, %v551, inf
    %1974 = vmin.xlane.f32.xlu0 %v1973
    %v1975 = vpop.xlane.xlu0 %1974
    %v1976 = vsel %vm1018, %v553, inf
    %1977 = vmin.xlane.f32.xlu0 %v1976
    %v1978 = vpop.xlane.xlu0 %1977
    %v1979 = vsel %vm1018, %v555, inf
    %1980 = vmin.xlane.f32.xlu0 %v1979
    %v1981 = vpop.xlane.xlu0 %1980
    %v1982 = vsel %vm1018, %v557, inf
    %1983 = vmin.xlane.f32.xlu0 %v1982
    %v1984 = vpop.xlane.xlu0 %1983
    %v1985 = vsel %vm1018, %v559, inf
    %1986 = vmin.xlane.f32.xlu0 %v1985
    %v1987 = vpop.xlane.xlu0 %1986
    %v1988 = vsel %vm1018, %v561, inf
    %1989 = vmin.xlane.f32.xlu0 %v1988
    %v1990 = vpop.xlane.xlu0 %1989
    %v1991 = vsel %vm1018, %v563, inf
    %1992 = vmin.xlane.f32.xlu0 %v1991
    %v1993 = vpop.xlane.xlu0 %1992
    %v1994 = vsel %vm1018, %v565, inf
    %1995 = vmin.xlane.f32.xlu0 %v1994
    %v1996 = vpop.xlane.xlu0 %1995
    %vm1997 = vcmp.eq.f32.partialorder %v535, %v1951
    %vm1998 = vcmp.eq.f32.partialorder %v537, %v1954
    %vm1999 = vcmp.eq.f32.partialorder %v539, %v1957
    %vm2000 = vcmp.eq.f32.partialorder %v541, %v1960
    %vm2001 = vcmp.eq.f32.partialorder %v543, %v1963
    %vm2002 = vcmp.eq.f32.partialorder %v545, %v1966
    %vm2003 = vcmp.eq.f32.partialorder %v547, %v1969
    %vm2004 = vcmp.eq.f32.partialorder %v549, %v1972
    %vm2005 = vcmp.eq.f32.partialorder %v551, %v1975
    %vm2006 = vcmp.eq.f32.partialorder %v553, %v1978
    %vm2007 = vcmp.eq.f32.partialorder %v555, %v1981
    %vm2008 = vcmp.eq.f32.partialorder %v557, %v1984
    %vm2009 = vcmp.eq.f32.partialorder %v559, %v1987
    %vm2010 = vcmp.eq.f32.partialorder %v561, %v1990
    %vm2011 = vcmp.eq.f32.partialorder %v563, %v1993
    %vm2012 = vcmp.eq.f32.partialorder %v565, %v1996
    %v2013 = vsel %vm1997, %v1084, 64
    %v2014 = vsel %vm1998, %v1084, 64
    %v2015 = vsel %vm1999, %v1084, 64
    %v2016 = vsel %vm2000, %v1084, 64
    %v2017 = vsel %vm2001, %v1084, 64
    %v2018 = vsel %vm2002, %v1084, 64
    %v2019 = vsel %vm2003, %v1084, 64
    %v2020 = vsel %vm2004, %v1084, 64
    %v2021 = vsel %vm2005, %v1084, 64
    %v2022 = vsel %vm2006, %v1084, 64
    %v2023 = vsel %vm2007, %v1084, 64
    %v2024 = vsel %vm2008, %v1084, 64
    %v2025 = vsel %vm2009, %v1084, 64
    %v2026 = vsel %vm2010, %v1084, 64
    %v2027 = vsel %vm2011, %v1084, 64
    %v2028 = vsel %vm2012, %v1084, 64
    %v2029 = vsel %vm1018, %v2013, 2147483647
    %v2030 = vand.u32 %v2029, 65535
    %v2031 = vshra.s32 %v2029, 16
    %v2032 = vcvt.s32.f32 %v2030
    %v2033 = vcvt.s32.f32 %v2031
    %2034 = vmin.xlane.f32.xlu0 %v2033
    %v2035 = vpop.xlane.xlu0 %2034
    %vm2036 = vcmp.eq.f32.partialorder %v2033, %v2035
    %v2037 = vsel %vm2036, %v2032, inf
    %2038 = vmin.xlane.f32.xlu0 %v2037
    %v2039 = vpop.xlane.xlu0 %2038
    %v2040 = vcvt.f32.s32 %v2039
    %v2041 = vcvt.f32.s32 %v2035
    %v2042 = vshll.u32 %v2041, 16
    %v2043 = vadd.s32 %v2042, %v2040
    %v2044 = vsel %vm1018, %v2014, 2147483647
    %v2045 = vand.u32 %v2044, 65535
    %v2046 = vshra.s32 %v2044, 16
    %v2047 = vcvt.s32.f32 %v2045
    %v2048 = vcvt.s32.f32 %v2046
    %2049 = vmin.xlane.f32.xlu0 %v2048
    %v2050 = vpop.xlane.xlu0 %2049
    %vm2051 = vcmp.eq.f32.partialorder %v2048, %v2050
    %v2052 = vsel %vm2051, %v2047, inf
    %2053 = vmin.xlane.f32.xlu0 %v2052
    %v2054 = vpop.xlane.xlu0 %2053
    %v2055 = vcvt.f32.s32 %v2054
    %v2056 = vcvt.f32.s32 %v2050
    %v2057 = vshll.u32 %v2056, 16
    %v2058 = vadd.s32 %v2057, %v2055
    %v2059 = vsel %vm1018, %v2015, 2147483647
    %v2060 = vand.u32 %v2059, 65535
    %v2061 = vshra.s32 %v2059, 16
    %v2062 = vcvt.s32.f32 %v2060
    %v2063 = vcvt.s32.f32 %v2061
    %2064 = vmin.xlane.f32.xlu0 %v2063
    %v2065 = vpop.xlane.xlu0 %2064
    %vm2066 = vcmp.eq.f32.partialorder %v2063, %v2065
    %v2067 = vsel %vm2066, %v2062, inf
    %2068 = vmin.xlane.f32.xlu0 %v2067
    %v2069 = vpop.xlane.xlu0 %2068
    %v2070 = vcvt.f32.s32 %v2069
    %v2071 = vcvt.f32.s32 %v2065
    %v2072 = vshll.u32 %v2071, 16
    %v2073 = vadd.s32 %v2072, %v2070
    %v2074 = vsel %vm1018, %v2016, 2147483647
    %v2075 = vand.u32 %v2074, 65535
    %v2076 = vshra.s32 %v2074, 16
    %v2077 = vcvt.s32.f32 %v2075
    %v2078 = vcvt.s32.f32 %v2076
    %2079 = vmin.xlane.f32.xlu0 %v2078
    %v2080 = vpop.xlane.xlu0 %2079
    %vm2081 = vcmp.eq.f32.partialorder %v2078, %v2080
    %v2082 = vsel %vm2081, %v2077, inf
    %2083 = vmin.xlane.f32.xlu0 %v2082
    %v2084 = vpop.xlane.xlu0 %2083
    %v2085 = vcvt.f32.s32 %v2084
    %v2086 = vcvt.f32.s32 %v2080
    %v2087 = vshll.u32 %v2086, 16
    %v2088 = vadd.s32 %v2087, %v2085
    %v2089 = vsel %vm1018, %v2017, 2147483647
    %v2090 = vand.u32 %v2089, 65535
    %v2091 = vshra.s32 %v2089, 16
    %v2092 = vcvt.s32.f32 %v2090
    %v2093 = vcvt.s32.f32 %v2091
    %2094 = vmin.xlane.f32.xlu0 %v2093
    %v2095 = vpop.xlane.xlu0 %2094
    %vm2096 = vcmp.eq.f32.partialorder %v2093, %v2095
    %v2097 = vsel %vm2096, %v2092, inf
    %2098 = vmin.xlane.f32.xlu0 %v2097
    %v2099 = vpop.xlane.xlu0 %2098
    %v2100 = vcvt.f32.s32 %v2099
    %v2101 = vcvt.f32.s32 %v2095
    %v2102 = vshll.u32 %v2101, 16
    %v2103 = vadd.s32 %v2102, %v2100
    %v2104 = vsel %vm1018, %v2018, 2147483647
    %v2105 = vand.u32 %v2104, 65535
    %v2106 = vshra.s32 %v2104, 16
    %v2107 = vcvt.s32.f32 %v2105
    %v2108 = vcvt.s32.f32 %v2106
    %2109 = vmin.xlane.f32.xlu0 %v2108
    %v2110 = vpop.xlane.xlu0 %2109
    %vm2111 = vcmp.eq.f32.partialorder %v2108, %v2110
    %v2112 = vsel %vm2111, %v2107, inf
    %2113 = vmin.xlane.f32.xlu0 %v2112
    %v2114 = vpop.xlane.xlu0 %2113
    %v2115 = vcvt.f32.s32 %v2114
    %v2116 = vcvt.f32.s32 %v2110
    %v2117 = vshll.u32 %v2116, 16
    %v2118 = vadd.s32 %v2117, %v2115
    %v2119 = vsel %vm1018, %v2019, 2147483647
    %v2120 = vand.u32 %v2119, 65535
    %v2121 = vshra.s32 %v2119, 16
    %v2122 = vcvt.s32.f32 %v2120
    %v2123 = vcvt.s32.f32 %v2121
    %2124 = vmin.xlane.f32.xlu0 %v2123
    %v2125 = vpop.xlane.xlu0 %2124
    %vm2126 = vcmp.eq.f32.partialorder %v2123, %v2125
    %v2127 = vsel %vm2126, %v2122, inf
    %2128 = vmin.xlane.f32.xlu0 %v2127
    %v2129 = vpop.xlane.xlu0 %2128
    %v2130 = vcvt.f32.s32 %v2129
    %v2131 = vcvt.f32.s32 %v2125
    %v2132 = vshll.u32 %v2131, 16
    %v2133 = vadd.s32 %v2132, %v2130
    %v2134 = vsel %vm1018, %v2020, 2147483647
    %v2135 = vand.u32 %v2134, 65535
    %v2136 = vshra.s32 %v2134, 16
    %v2137 = vcvt.s32.f32 %v2135
    %v2138 = vcvt.s32.f32 %v2136
    %2139 = vmin.xlane.f32.xlu0 %v2138
    %v2140 = vpop.xlane.xlu0 %2139
    %vm2141 = vcmp.eq.f32.partialorder %v2138, %v2140
    %v2142 = vsel %vm2141, %v2137, inf
    %2143 = vmin.xlane.f32.xlu0 %v2142
    %v2144 = vpop.xlane.xlu0 %2143
    %v2145 = vcvt.f32.s32 %v2144
    %v2146 = vcvt.f32.s32 %v2140
    %v2147 = vshll.u32 %v2146, 16
    %v2148 = vadd.s32 %v2147, %v2145
    %v2149 = vsel %vm1018, %v2021, 2147483647
    %v2150 = vand.u32 %v2149, 65535
    %v2151 = vshra.s32 %v2149, 16
    %v2152 = vcvt.s32.f32 %v2150
    %v2153 = vcvt.s32.f32 %v2151
    %2154 = vmin.xlane.f32.xlu0 %v2153
    %v2155 = vpop.xlane.xlu0 %2154
    %vm2156 = vcmp.eq.f32.partialorder %v2153, %v2155
    %v2157 = vsel %vm2156, %v2152, inf
    %2158 = vmin.xlane.f32.xlu0 %v2157
    %v2159 = vpop.xlane.xlu0 %2158
    %v2160 = vcvt.f32.s32 %v2159
    %v2161 = vcvt.f32.s32 %v2155
    %v2162 = vshll.u32 %v2161, 16
    %v2163 = vadd.s32 %v2162, %v2160
    %v2164 = vsel %vm1018, %v2022, 2147483647
    %v2165 = vand.u32 %v2164, 65535
    %v2166 = vshra.s32 %v2164, 16
    %v2167 = vcvt.s32.f32 %v2165
    %v2168 = vcvt.s32.f32 %v2166
    %2169 = vmin.xlane.f32.xlu0 %v2168
    %v2170 = vpop.xlane.xlu0 %2169
    %vm2171 = vcmp.eq.f32.partialorder %v2168, %v2170
    %v2172 = vsel %vm2171, %v2167, inf
    %2173 = vmin.xlane.f32.xlu0 %v2172
    %v2174 = vpop.xlane.xlu0 %2173
    %v2175 = vcvt.f32.s32 %v2174
    %v2176 = vcvt.f32.s32 %v2170
    %v2177 = vshll.u32 %v2176, 16
    %v2178 = vadd.s32 %v2177, %v2175
    %v2179 = vsel %vm1018, %v2023, 2147483647
    %v2180 = vand.u32 %v2179, 65535
    %v2181 = vshra.s32 %v2179, 16
    %v2182 = vcvt.s32.f32 %v2180
    %v2183 = vcvt.s32.f32 %v2181
    %2184 = vmin.xlane.f32.xlu0 %v2183
    %v2185 = vpop.xlane.xlu0 %2184
    %vm2186 = vcmp.eq.f32.partialorder %v2183, %v2185
    %v2187 = vsel %vm2186, %v2182, inf
    %2188 = vmin.xlane.f32.xlu0 %v2187
    %v2189 = vpop.xlane.xlu0 %2188
    %v2190 = vcvt.f32.s32 %v2189
    %v2191 = vcvt.f32.s32 %v2185
    %v2192 = vshll.u32 %v2191, 16
    %v2193 = vadd.s32 %v2192, %v2190
    %v2194 = vsel %vm1018, %v2024, 2147483647
    %v2195 = vand.u32 %v2194, 65535
    %v2196 = vshra.s32 %v2194, 16
    %v2197 = vcvt.s32.f32 %v2195
    %v2198 = vcvt.s32.f32 %v2196
    %2199 = vmin.xlane.f32.xlu0 %v2198
    %v2200 = vpop.xlane.xlu0 %2199
    %vm2201 = vcmp.eq.f32.partialorder %v2198, %v2200
    %v2202 = vsel %vm2201, %v2197, inf
    %2203 = vmin.xlane.f32.xlu0 %v2202
    %v2204 = vpop.xlane.xlu0 %2203
    %v2205 = vcvt.f32.s32 %v2204
    %v2206 = vcvt.f32.s32 %v2200
    %v2207 = vshll.u32 %v2206, 16
    %v2208 = vadd.s32 %v2207, %v2205
    %v2209 = vsel %vm1018, %v2025, 2147483647
    %v2210 = vand.u32 %v2209, 65535
    %v2211 = vshra.s32 %v2209, 16
    %v2212 = vcvt.s32.f32 %v2210
    %v2213 = vcvt.s32.f32 %v2211
    %2214 = vmin.xlane.f32.xlu0 %v2213
    %v2215 = vpop.xlane.xlu0 %2214
    %vm2216 = vcmp.eq.f32.partialorder %v2213, %v2215
    %v2217 = vsel %vm2216, %v2212, inf
    %2218 = vmin.xlane.f32.xlu0 %v2217
    %v2219 = vpop.xlane.xlu0 %2218
    %v2220 = vcvt.f32.s32 %v2219
    %v2221 = vcvt.f32.s32 %v2215
    %v2222 = vshll.u32 %v2221, 16
    %v2223 = vadd.s32 %v2222, %v2220
    %v2224 = vsel %vm1018, %v2026, 2147483647
    %v2225 = vand.u32 %v2224, 65535
    %v2226 = vshra.s32 %v2224, 16
    %v2227 = vcvt.s32.f32 %v2225
    %v2228 = vcvt.s32.f32 %v2226
    %2229 = vmin.xlane.f32.xlu0 %v2228
    %v2230 = vpop.xlane.xlu0 %2229
    %vm2231 = vcmp.eq.f32.partialorder %v2228, %v2230
    %v2232 = vsel %vm2231, %v2227, inf
    %2233 = vmin.xlane.f32.xlu0 %v2232
    %v2234 = vpop.xlane.xlu0 %2233
    %v2235 = vcvt.f32.s32 %v2234
    %v2236 = vcvt.f32.s32 %v2230
    %v2237 = vshll.u32 %v2236, 16
    %v2238 = vadd.s32 %v2237, %v2235
    %v2239 = vsel %vm1018, %v2027, 2147483647
    %v2240 = vand.u32 %v2239, 65535
    %v2241 = vshra.s32 %v2239, 16
    %v2242 = vcvt.s32.f32 %v2240
    %v2243 = vcvt.s32.f32 %v2241
    %2244 = vmin.xlane.f32.xlu0 %v2243
    %v2245 = vpop.xlane.xlu0 %2244
    %vm2246 = vcmp.eq.f32.partialorder %v2243, %v2245
    %v2247 = vsel %vm2246, %v2242, inf
    %2248 = vmin.xlane.f32.xlu0 %v2247
    %v2249 = vpop.xlane.xlu0 %2248
    %v2250 = vcvt.f32.s32 %v2249
    %v2251 = vcvt.f32.s32 %v2245
    %v2252 = vshll.u32 %v2251, 16
    %v2253 = vadd.s32 %v2252, %v2250
    %v2254 = vsel %vm1018, %v2028, 2147483647
    %v2255 = vand.u32 %v2254, 65535
    %v2256 = vshra.s32 %v2254, 16
    %v2257 = vcvt.s32.f32 %v2255
    %v2258 = vcvt.s32.f32 %v2256
    %2259 = vmin.xlane.f32.xlu0 %v2258
    %v2260 = vpop.xlane.xlu0 %2259
    %vm2261 = vcmp.eq.f32.partialorder %v2258, %v2260
    %v2262 = vsel %vm2261, %v2257, inf
    %2263 = vmin.xlane.f32.xlu0 %v2262
    %v2264 = vpop.xlane.xlu0 %2263
    %v2265 = vcvt.f32.s32 %v2264
    %v2266 = vcvt.f32.s32 %v2260
    %v2267 = vshll.u32 %v2266, 16
    %v2268 = vadd.s32 %v2267, %v2265
    %v2269 = vadd.s32 %v2043, 192
    %v2270 = vadd.s32 %v2058, 192
    %v2271 = vadd.s32 %v2073, 192
    %v2272 = vadd.s32 %v2088, 192
    %v2273 = vadd.s32 %v2103, 192
    %v2274 = vadd.s32 %v2118, 192
    %v2275 = vadd.s32 %v2133, 192
    %v2276 = vadd.s32 %v2148, 192
    %v2277 = vadd.s32 %v2163, 192
    %v2278 = vadd.s32 %v2178, 192
    %v2279 = vadd.s32 %v2193, 192
    %v2280 = vadd.s32 %v2208, 192
    %v2281 = vadd.s32 %v2223, 192
    %v2282 = vadd.s32 %v2238, 192
    %v2283 = vadd.s32 %v2253, 192
    %v2284 = vadd.s32 %v2268, 192
    %vm2285 = vcmp.eq.s32.totalorder %v567, %v2269
    %vm2286 = vcmp.eq.s32.totalorder %v568, %v2269
    %vm2287 = vcmp.eq.s32.totalorder %v567, %v2270
    %vm2288 = vcmp.eq.s32.totalorder %v568, %v2270
    %vm2289 = vcmp.eq.s32.totalorder %v567, %v2271
    %vm2290 = vcmp.eq.s32.totalorder %v568, %v2271
    %vm2291 = vcmp.eq.s32.totalorder %v567, %v2272
    %vm2292 = vcmp.eq.s32.totalorder %v568, %v2272
    %vm2293 = vcmp.eq.s32.totalorder %v567, %v2273
    %vm2294 = vcmp.eq.s32.totalorder %v568, %v2273
    %vm2295 = vcmp.eq.s32.totalorder %v567, %v2274
    %vm2296 = vcmp.eq.s32.totalorder %v568, %v2274
    %vm2297 = vcmp.eq.s32.totalorder %v567, %v2275
    %vm2298 = vcmp.eq.s32.totalorder %v568, %v2275
    %vm2299 = vcmp.eq.s32.totalorder %v567, %v2276
    %vm2300 = vcmp.eq.s32.totalorder %v568, %v2276
    %vm2301 = vcmp.eq.s32.totalorder %v567, %v2277
    %vm2302 = vcmp.eq.s32.totalorder %v568, %v2277
    %vm2303 = vcmp.eq.s32.totalorder %v567, %v2278
    %vm2304 = vcmp.eq.s32.totalorder %v568, %v2278
    %vm2305 = vcmp.eq.s32.totalorder %v567, %v2279
    %vm2306 = vcmp.eq.s32.totalorder %v568, %v2279
    %vm2307 = vcmp.eq.s32.totalorder %v567, %v2280
    %vm2308 = vcmp.eq.s32.totalorder %v568, %v2280
    %vm2309 = vcmp.eq.s32.totalorder %v567, %v2281
    %vm2310 = vcmp.eq.s32.totalorder %v568, %v2281
    %vm2311 = vcmp.eq.s32.totalorder %v567, %v2282
    %vm2312 = vcmp.eq.s32.totalorder %v568, %v2282
    %vm2313 = vcmp.eq.s32.totalorder %v567, %v2283
    %vm2314 = vcmp.eq.s32.totalorder %v568, %v2283
    %vm2315 = vcmp.eq.s32.totalorder %v567, %v2284
    %vm2316 = vcmp.eq.s32.totalorder %v568, %v2284
    %v2317 = vsel %vm2285, 1, 0
    %v2318 = vsel %vm2286, 1, 0
    %v2319 = vsel %vm2287, 1, 0
    %v2320 = vsel %vm2288, 1, 0
    %v2321 = vsel %vm2289, 1, 0
    %v2322 = vsel %vm2290, 1, 0
    %v2323 = vsel %vm2291, 1, 0
    %v2324 = vsel %vm2292, 1, 0
    %v2325 = vsel %vm2293, 1, 0
    %v2326 = vsel %vm2294, 1, 0
    %v2327 = vsel %vm2295, 1, 0
    %v2328 = vsel %vm2296, 1, 0
    %v2329 = vsel %vm2297, 1, 0
    %v2330 = vsel %vm2298, 1, 0
    %v2331 = vsel %vm2299, 1, 0
    %v2332 = vsel %vm2300, 1, 0
    %v2333 = vsel %vm2301, 1, 0
    %v2334 = vsel %vm2302, 1, 0
    %v2335 = vsel %vm2303, 1, 0
    %v2336 = vsel %vm2304, 1, 0
    %v2337 = vsel %vm2305, 1, 0
    %v2338 = vsel %vm2306, 1, 0
    %v2339 = vsel %vm2307, 1, 0
    %v2340 = vsel %vm2308, 1, 0
    %v2341 = vsel %vm2309, 1, 0
    %v2342 = vsel %vm2310, 1, 0
    %v2343 = vsel %vm2311, 1, 0
    %v2344 = vsel %vm2312, 1, 0
    %v2345 = vsel %vm2313, 1, 0
    %v2346 = vsel %vm2314, 1, 0
    %v2347 = vsel %vm2315, 1, 0
    %v2348 = vsel %vm2316, 1, 0
    %v2349 = vcvt.s32.f32 %v2317
    %v2350 = vcvt.s32.f32 %v2318
    %v2351 = vcvt.s32.f32 %v2319
    %v2352 = vcvt.s32.f32 %v2320
    %v2353 = vcvt.s32.f32 %v2321
    %v2354 = vcvt.s32.f32 %v2322
    %v2355 = vcvt.s32.f32 %v2323
    %v2356 = vcvt.s32.f32 %v2324
    %v2357 = vcvt.s32.f32 %v2325
    %v2358 = vcvt.s32.f32 %v2326
    %v2359 = vcvt.s32.f32 %v2327
    %v2360 = vcvt.s32.f32 %v2328
    %v2361 = vcvt.s32.f32 %v2329
    %v2362 = vcvt.s32.f32 %v2330
    %v2363 = vcvt.s32.f32 %v2331
    %v2364 = vcvt.s32.f32 %v2332
    %v2365 = vcvt.s32.f32 %v2333
    %v2366 = vcvt.s32.f32 %v2334
    %v2367 = vcvt.s32.f32 %v2335
    %v2368 = vcvt.s32.f32 %v2336
    %v2369 = vcvt.s32.f32 %v2337
    %v2370 = vcvt.s32.f32 %v2338
    %v2371 = vcvt.s32.f32 %v2339
    %v2372 = vcvt.s32.f32 %v2340
    %v2373 = vcvt.s32.f32 %v2341
    %v2374 = vcvt.s32.f32 %v2342
    %v2375 = vcvt.s32.f32 %v2343
    %v2376 = vcvt.s32.f32 %v2344
    %v2377 = vcvt.s32.f32 %v2345
    %v2378 = vcvt.s32.f32 %v2346
    %v2379 = vcvt.s32.f32 %v2347
    %v2380 = vcvt.s32.f32 %v2348
    %v2381 = vadd.f32 %v1917, %v2349
    %v2382 = vadd.f32 %v1918, %v2350
    %v2383 = vadd.f32 %v1919, %v2351
    %v2384 = vadd.f32 %v1920, %v2352
    %v2385 = vadd.f32 %v1921, %v2353
    %v2386 = vadd.f32 %v1922, %v2354
    %v2387 = vadd.f32 %v1923, %v2355
    %v2388 = vadd.f32 %v1924, %v2356
    %v2389 = vadd.f32 %v1925, %v2357
    %v2390 = vadd.f32 %v1926, %v2358
    %v2391 = vadd.f32 %v1927, %v2359
    %v2392 = vadd.f32 %v1928, %v2360
    %v2393 = vadd.f32 %v1929, %v2361
    %v2394 = vadd.f32 %v1930, %v2362
    %v2395 = vadd.f32 %v1931, %v2363
    %v2396 = vadd.f32 %v1932, %v2364
    %v2397 = vadd.f32 %v1933, %v2365
    %v2398 = vadd.f32 %v1934, %v2366
    %v2399 = vadd.f32 %v1935, %v2367
    %v2400 = vadd.f32 %v1936, %v2368
    %v2401 = vadd.f32 %v1937, %v2369
    %v2402 = vadd.f32 %v1938, %v2370
    %v2403 = vadd.f32 %v1939, %v2371
    %v2404 = vadd.f32 %v1940, %v2372
    %v2405 = vadd.f32 %v1941, %v2373
    %v2406 = vadd.f32 %v1942, %v2374
    %v2407 = vadd.f32 %v1943, %v2375
    %v2408 = vadd.f32 %v1944, %v2376
    %v2409 = vadd.f32 %v1945, %v2377
    %v2410 = vadd.f32 %v1946, %v2378
    %v2411 = vadd.f32 %v1947, %v2379
    %v2412 = vadd.f32 %v1948, %v2380
    %v2413 = vperm.slane %v664, %v567
    %v2414 = vadd.s32 %v567, 4294967288
    %v2415 = vperm.slane %v679, %v2414
    %vm2416 = vcmask 130112
    %v2417 = vsel %vm2416, %v2415, %v2413
    %v2418 = vadd.s32 %v567, 4294967280
    %v2419 = vperm.slane %v694, %v2418
    %vm2420 = vcmask 195712
    %v2421 = vsel %vm2420, %v2419, %v2417
    %v2422 = vadd.s32 %v567, 4294967272
    %v2423 = vperm.slane %v709, %v2422
    %vm2424 = vcmask 261312
    %v2425 = vsel %vm2424, %v2423, %v2421
    %v2426 = vadd.s32 %v567, 4294967264
    %v2427 = vperm.slane %v724, %v2426
    %vm2428 = vcmask 326912
    %v2429 = vsel %vm2428, %v2427, %v2425
    %v2430 = vadd.s32 %v567, 4294967256
    %v2431 = vperm.slane %v739, %v2430
    %vm2432 = vcmask 392512
    %v2433 = vsel %vm2432, %v2431, %v2429
    %v2434 = vadd.s32 %v567, 4294967248
    %v2435 = vperm.slane %v754, %v2434
    %vm2436 = vcmask 458112
    %v2437 = vsel %vm2436, %v2435, %v2433
    %v2438 = vadd.s32 %v567, 4294967240
    %v2439 = vperm.slane %v769, %v2438
    %vm2440 = vcmask 523712
    %v2441 = vsel %vm2440, %v2439, %v2437
    %v2442 = vadd.s32 %v567, 4294967232
    %v2443 = vperm.slane %v784, %v2442
    %vm2444 = vcmask 589312
    %v2445 = vsel %vm2444, %v2443, %v2441
    %v2446 = vadd.s32 %v567, 4294967224
    %v2447 = vperm.slane %v799, %v2446
    %vm2448 = vcmask 654912
    %v2449 = vsel %vm2448, %v2447, %v2445
    %v2450 = vadd.s32 %v567, 4294967216
    %v2451 = vperm.slane %v814, %v2450
    %vm2452 = vcmask 720512
    %v2453 = vsel %vm2452, %v2451, %v2449
    %v2454 = vadd.s32 %v567, 4294967208
    %v2455 = vperm.slane %v829, %v2454
    %vm2456 = vcmask 786112
    %v2457 = vsel %vm2456, %v2455, %v2453
    %v2458 = vadd.s32 %v567, 4294967200
    %v2459 = vperm.slane %v844, %v2458
    %vm2460 = vcmask 851712
    %v2461 = vsel %vm2460, %v2459, %v2457
    %v2462 = vadd.s32 %v567, 4294967192
    %v2463 = vperm.slane %v859, %v2462
    %vm2464 = vcmask 917312
    %v2465 = vsel %vm2464, %v2463, %v2461
    %v2466 = vadd.s32 %v567, 4294967184
    %v2467 = vperm.slane %v874, %v2466
    %vm2468 = vcmask 982912
    %v2469 = vsel %vm2468, %v2467, %v2465
    %v2470 = vadd.s32 %v567, 4294967176
    %v2471 = vperm.slane %v889, %v2470
    %vm2472 = vcmask 1048512
    %v2473 = vsel %vm2472, %v2471, %v2469
    %v2474 = vperm.slane %v1115, %v567
    %v2475 = vperm.slane %v1130, %v2414
    %v2476 = vsel %vm2416, %v2475, %v2474
    %v2477 = vperm.slane %v1145, %v2418
    %v2478 = vsel %vm2420, %v2477, %v2476
    %v2479 = vperm.slane %v1160, %v2422
    %v2480 = vsel %vm2424, %v2479, %v2478
    %v2481 = vperm.slane %v1175, %v2426
    %v2482 = vsel %vm2428, %v2481, %v2480
    %v2483 = vperm.slane %v1190, %v2430
    %v2484 = vsel %vm2432, %v2483, %v2482
    %v2485 = vperm.slane %v1205, %v2434
    %v2486 = vsel %vm2436, %v2485, %v2484
    %v2487 = vperm.slane %v1220, %v2438
    %v2488 = vsel %vm2440, %v2487, %v2486
    %v2489 = vperm.slane %v1235, %v2442
    %v2490 = vsel %vm2444, %v2489, %v2488
    %v2491 = vperm.slane %v1250, %v2446
    %v2492 = vsel %vm2448, %v2491, %v2490
    %v2493 = vperm.slane %v1265, %v2450
    %v2494 = vsel %vm2452, %v2493, %v2492
    %v2495 = vperm.slane %v1280, %v2454
    %v2496 = vsel %vm2456, %v2495, %v2494
    %v2497 = vperm.slane %v1295, %v2458
    %v2498 = vsel %vm2460, %v2497, %v2496
    %v2499 = vperm.slane %v1310, %v2462
    %v2500 = vsel %vm2464, %v2499, %v2498
    %v2501 = vperm.slane %v1325, %v2466
    %v2502 = vsel %vm2468, %v2501, %v2500
    %v2503 = vperm.slane %v1340, %v2470
    %v2504 = vsel %vm2472, %v2503, %v2502
    %v2505 = vperm.slane %v1579, %v567
    %v2506 = vperm.slane %v1594, %v2414
    %v2507 = vsel %vm2416, %v2506, %v2505
    %v2508 = vperm.slane %v1609, %v2418
    %v2509 = vsel %vm2420, %v2508, %v2507
    %v2510 = vperm.slane %v1624, %v2422
    %v2511 = vsel %vm2424, %v2510, %v2509
    %v2512 = vperm.slane %v1639, %v2426
    %v2513 = vsel %vm2428, %v2512, %v2511
    %v2514 = vperm.slane %v1654, %v2430
    %v2515 = vsel %vm2432, %v2514, %v2513
    %v2516 = vperm.slane %v1669, %v2434
    %v2517 = vsel %vm2436, %v2516, %v2515
    %v2518 = vperm.slane %v1684, %v2438
    %v2519 = vsel %vm2440, %v2518, %v2517
    %v2520 = vperm.slane %v1699, %v2442
    %v2521 = vsel %vm2444, %v2520, %v2519
    %v2522 = vperm.slane %v1714, %v2446
    %v2523 = vsel %vm2448, %v2522, %v2521
    %v2524 = vperm.slane %v1729, %v2450
    %v2525 = vsel %vm2452, %v2524, %v2523
    %v2526 = vperm.slane %v1744, %v2454
    %v2527 = vsel %vm2456, %v2526, %v2525
    %v2528 = vperm.slane %v1759, %v2458
    %v2529 = vsel %vm2460, %v2528, %v2527
    %v2530 = vperm.slane %v1774, %v2462
    %v2531 = vsel %vm2464, %v2530, %v2529
    %v2532 = vperm.slane %v1789, %v2466
    %v2533 = vsel %vm2468, %v2532, %v2531
    %v2534 = vperm.slane %v1804, %v2470
    %v2535 = vsel %vm2472, %v2534, %v2533
    %v2536 = vperm.slane %v2043, %v567
    %v2537 = vperm.slane %v2058, %v2414
    %v2538 = vsel %vm2416, %v2537, %v2536
    %v2539 = vperm.slane %v2073, %v2418
    %v2540 = vsel %vm2420, %v2539, %v2538
    %v2541 = vperm.slane %v2088, %v2422
    %v2542 = vsel %vm2424, %v2541, %v2540
    %v2543 = vperm.slane %v2103, %v2426
    %v2544 = vsel %vm2428, %v2543, %v2542
    %v2545 = vperm.slane %v2118, %v2430
    %v2546 = vsel %vm2432, %v2545, %v2544
    %v2547 = vperm.slane %v2133, %v2434
    %v2548 = vsel %vm2436, %v2547, %v2546
    %v2549 = vperm.slane %v2148, %v2438
    %v2550 = vsel %vm2440, %v2549, %v2548
    %v2551 = vperm.slane %v2163, %v2442
    %v2552 = vsel %vm2444, %v2551, %v2550
    %v2553 = vperm.slane %v2178, %v2446
    %v2554 = vsel %vm2448, %v2553, %v2552
    %v2555 = vperm.slane %v2193, %v2450
    %v2556 = vsel %vm2452, %v2555, %v2554
    %v2557 = vperm.slane %v2208, %v2454
    %v2558 = vsel %vm2456, %v2557, %v2556
    %v2559 = vperm.slane %v2223, %v2458
    %v2560 = vsel %vm2460, %v2559, %v2558
    %v2561 = vperm.slane %v2238, %v2462
    %v2562 = vsel %vm2464, %v2561, %v2560
    %v2563 = vperm.slane %v2253, %v2466
    %v2564 = vsel %vm2468, %v2563, %v2562
    %v2565 = vperm.slane %v2268, %v2470
    %v2566 = vsel %vm2472, %v2565, %v2564
    %vm2567 = vcmask 1040384
    %v2568 = vsel %vm2567, %v2473, %v2504
    %vm2569 = vcmask 1041408
    %v2570 = vsel %vm2569, %v2568, %v2535
    %vm2571 = vcmask 1042432
    %v2572 = vsel %vm2571, %v2570, %v2566
    %2573 = vst [vmem:[#allocation2] sm:$0xf] %v2572
    %v2574 = vld [vmem:[%s3] sm:$0xff]
    %v2575 = vld [vmem:[%s3 + $0x8] sm:$0xff]
    %v2576 = vld [vmem:[%s3 + $0x10] sm:$0xff]
    %v2577 = vld [vmem:[%s3 + $0x18] sm:$0xff]
    %v2578 = vld [vmem:[%s3 + $0x20] sm:$0xff]
    %v2579 = vld [vmem:[%s3 + $0x28] sm:$0xff]
    %v2580 = vld [vmem:[%s3 + $0x30] sm:$0xff]
    %v2581 = vld [vmem:[%s3 + $0x38] sm:$0xff]
    %v2582 = vld [vmem:[%s3 + $0x40] sm:$0xff]
    %v2583 = vld [vmem:[%s3 + $0x48] sm:$0xff]
    %v2584 = vld [vmem:[%s3 + $0x50] sm:$0xff]
    %v2585 = vld [vmem:[%s3 + $0x58] sm:$0xff]
    %v2586 = vld [vmem:[%s3 + $0x60] sm:$0xff]
    %v2587 = vld [vmem:[%s3 + $0x68] sm:$0xff]
    %v2588 = vld [vmem:[%s3 + $0x70] sm:$0xff]
    %v2589 = vld [vmem:[%s3 + $0x78] sm:$0xff]
    %v2590 = vld [vmem:[%s3 + $0x80] sm:$0xff]
    %v2591 = vld [vmem:[%s3 + $0x88] sm:$0xff]
    %v2592 = vld [vmem:[%s3 + $0x90] sm:$0xff]
    %v2593 = vld [vmem:[%s3 + $0x98] sm:$0xff]
    %v2594 = vld [vmem:[%s3 + $0xa0] sm:$0xff]
    %v2595 = vld [vmem:[%s3 + $0xa8] sm:$0xff]
    %v2596 = vld [vmem:[%s3 + $0xb0] sm:$0xff]
    %v2597 = vld [vmem:[%s3 + $0xb8] sm:$0xff]
    %v2598 = vld [vmem:[%s3 + $0xc0] sm:$0xff]
    %v2599 = vld [vmem:[%s3 + $0xc8] sm:$0xff]
    %v2600 = vld [vmem:[%s3 + $0xd0] sm:$0xff]
    %v2601 = vld [vmem:[%s3 + $0xd8] sm:$0xff]
    %v2602 = vld [vmem:[%s3 + $0xe0] sm:$0xff]
    %v2603 = vld [vmem:[%s3 + $0xe8] sm:$0xff]
    %v2604 = vld [vmem:[%s3 + $0xf0] sm:$0xff]
    %v2605 = vld [vmem:[%s3 + $0xf8] sm:$0xff]
    %2606 = vmatpush.msra.mxu0 %v2589
    %2607 = vmatpush.msra.mxu0 %v2588
    %2608 = vmatpush.msra.mxu0 %v2587
    %2609 = vmatpush.msra.mxu0 %v2586
    %2610 = vmatpush.msra.mxu0 %v2585
    %2611 = vmatpush.msra.mxu0 %v2584
    %2612 = vmatpush.msra.mxu0 %v2583
    %2613 = vmatpush.msra.mxu0 %v2582
    %2614 = vmatpush.msra.mxu0 %v2581
    %2615 = vmatpush.msra.mxu0 %v2580
    %2616 = vmatpush.msra.mxu0 %v2579
    %2617 = vmatpush.msra.mxu0 %v2578
    %2618 = vmatpush.msra.mxu0 %v2577
    %2619 = vmatpush.msra.mxu0 %v2576
    %2620 = vmatpush.msra.mxu0 %v2575
    %2621 = vmatpush.msra.mxu0 %v2574
    %2622 = vmatmul.f32.gmra.mxu0 %v2381
    %v2623 = vpop.f32.mrf.mxu0
    %v2624 = vadd.f32 0.0, %v2623
    %2625 = vmatmul.f32.gmra.mxu0 %v2383
    %v2626 = vpop.f32.mrf.mxu0
    %v2627 = vadd.f32 0.0, %v2626
    %2628 = vmatmul.f32.gmra.mxu0 %v2385
    %v2629 = vpop.f32.mrf.mxu0
    %v2630 = vadd.f32 0.0, %v2629
    %2631 = vmatmul.f32.gmra.mxu0 %v2387
    %v2632 = vpop.f32.mrf.mxu0
    %v2633 = vadd.f32 0.0, %v2632
    %2634 = vmatmul.f32.gmra.mxu0 %v2389
    %v2635 = vpop.f32.mrf.mxu0
    %v2636 = vadd.f32 0.0, %v2635
    %2637 = vmatmul.f32.gmra.mxu0 %v2391
    %v2638 = vpop.f32.mrf.mxu0
    %v2639 = vadd.f32 0.0, %v2638
    %2640 = vmatmul.f32.gmra.mxu0 %v2393
    %v2641 = vpop.f32.mrf.mxu0
    %v2642 = vadd.f32 0.0, %v2641
    %2643 = vmatmul.f32.gmra.mxu0 %v2395
    %v2644 = vpop.f32.mrf.mxu0
    %v2645 = vadd.f32 0.0, %v2644
    %2646 = vmatmul.f32.gmra.mxu0 %v2397
    %v2647 = vpop.f32.mrf.mxu0
    %v2648 = vadd.f32 0.0, %v2647
    %2649 = vmatmul.f32.gmra.mxu0 %v2399
    %v2650 = vpop.f32.mrf.mxu0
    %v2651 = vadd.f32 0.0, %v2650
    %2652 = vmatmul.f32.gmra.mxu0 %v2401
    %v2653 = vpop.f32.mrf.mxu0
    %v2654 = vadd.f32 0.0, %v2653
    %2655 = vmatmul.f32.gmra.mxu0 %v2403
    %v2656 = vpop.f32.mrf.mxu0
    %v2657 = vadd.f32 0.0, %v2656
    %2658 = vmatmul.f32.gmra.mxu0 %v2405
    %v2659 = vpop.f32.mrf.mxu0
    %v2660 = vadd.f32 0.0, %v2659
    %2661 = vmatmul.f32.gmra.mxu0 %v2407
    %v2662 = vpop.f32.mrf.mxu0
    %v2663 = vadd.f32 0.0, %v2662
    %2664 = vmatmul.f32.gmra.mxu0 %v2409
    %v2665 = vpop.f32.mrf.mxu0
    %v2666 = vadd.f32 0.0, %v2665
    %2667 = vmatmul.f32.gmra.mxu0 %v2411
    %v2668 = vpop.f32.mrf.mxu0
    %v2669 = vadd.f32 0.0, %v2668
    %2670 = vdwg.mxu0
    %2671 = vmatpush.msra.mxu0 %v2605
    %2672 = vmatpush.msra.mxu0 %v2604
    %2673 = vmatpush.msra.mxu0 %v2603
    %2674 = vmatpush.msra.mxu0 %v2602
    %2675 = vmatpush.msra.mxu0 %v2601
    %2676 = vmatpush.msra.mxu0 %v2600
    %2677 = vmatpush.msra.mxu0 %v2599
    %2678 = vmatpush.msra.mxu0 %v2598
    %2679 = vmatpush.msra.mxu0 %v2597
    %2680 = vmatpush.msra.mxu0 %v2596
    %2681 = vmatpush.msra.mxu0 %v2595
    %2682 = vmatpush.msra.mxu0 %v2594
    %2683 = vmatpush.msra.mxu0 %v2593
    %2684 = vmatpush.msra.mxu0 %v2592
    %2685 = vmatpush.msra.mxu0 %v2591
    %2686 = vmatpush.msra.mxu0 %v2590
    %2687 = vmatmul.f32.gmra.mxu0 %v2382
    %v2688 = vpop.f32.mrf.mxu0
    %v2689 = vadd.f32 %v2624, %v2688
    %2690 = vmatmul.f32.gmra.mxu0 %v2384
    %v2691 = vpop.f32.mrf.mxu0
    %v2692 = vadd.f32 %v2627, %v2691
    %2693 = vmatmul.f32.gmra.mxu0 %v2386
    %v2694 = vpop.f32.mrf.mxu0
    %v2695 = vadd.f32 %v2630, %v2694
    %2696 = vmatmul.f32.gmra.mxu0 %v2388
    %v2697 = vpop.f32.mrf.mxu0
    %v2698 = vadd.f32 %v2633, %v2697
    %2699 = vmatmul.f32.gmra.mxu0 %v2390
    %v2700 = vpop.f32.mrf.mxu0
    %v2701 = vadd.f32 %v2636, %v2700
    %2702 = vmatmul.f32.gmra.mxu0 %v2392
    %v2703 = vpop.f32.mrf.mxu0
    %v2704 = vadd.f32 %v2639, %v2703
    %2705 = vmatmul.f32.gmra.mxu0 %v2394
    %v2706 = vpop.f32.mrf.mxu0
    %v2707 = vadd.f32 %v2642, %v2706
    %2708 = vmatmul.f32.gmra.mxu0 %v2396
    %v2709 = vpop.f32.mrf.mxu0
    %v2710 = vadd.f32 %v2645, %v2709
    %2711 = vmatmul.f32.gmra.mxu0 %v2398
    %v2712 = vpop.f32.mrf.mxu0
    %v2713 = vadd.f32 %v2648, %v2712
    %2714 = vmatmul.f32.gmra.mxu0 %v2400
    %v2715 = vpop.f32.mrf.mxu0
    %v2716 = vadd.f32 %v2651, %v2715
    %2717 = vmatmul.f32.gmra.mxu0 %v2402
    %v2718 = vpop.f32.mrf.mxu0
    %v2719 = vadd.f32 %v2654, %v2718
    %2720 = vmatmul.f32.gmra.mxu0 %v2404
    %v2721 = vpop.f32.mrf.mxu0
    %v2722 = vadd.f32 %v2657, %v2721
    %2723 = vmatmul.f32.gmra.mxu0 %v2406
    %v2724 = vpop.f32.mrf.mxu0
    %v2725 = vadd.f32 %v2660, %v2724
    %2726 = vmatmul.f32.gmra.mxu0 %v2408
    %v2727 = vpop.f32.mrf.mxu0
    %v2728 = vadd.f32 %v2663, %v2727
    %2729 = vmatmul.f32.gmra.mxu0 %v2410
    %v2730 = vpop.f32.mrf.mxu0
    %v2731 = vadd.f32 %v2666, %v2730
    %2732 = vmatmul.f32.gmra.mxu0 %v2412
    %v2733 = vpop.f32.mrf.mxu0
    %v2734 = vadd.f32 %v2669, %v2733
    %2735 = vdwg.mxu0
    %v2736 = vmul.f32 %v2689, %v2689
    %v2737 = vmul.f32 %v2692, %v2692
    %v2738 = vmul.f32 %v2695, %v2695
    %v2739 = vmul.f32 %v2698, %v2698
    %v2740 = vmul.f32 %v2701, %v2701
    %v2741 = vmul.f32 %v2704, %v2704
    %v2742 = vmul.f32 %v2707, %v2707
    %v2743 = vmul.f32 %v2710, %v2710
    %v2744 = vmul.f32 %v2713, %v2713
    %v2745 = vmul.f32 %v2716, %v2716
    %v2746 = vmul.f32 %v2719, %v2719
    %v2747 = vmul.f32 %v2722, %v2722
    %v2748 = vmul.f32 %v2725, %v2725
    %v2749 = vmul.f32 %v2728, %v2728
    %v2750 = vmul.f32 %v2731, %v2731
    %v2751 = vmul.f32 %v2734, %v2734
    %v2752 = vsel %vm58, %v2736, 0.0
    %2753 = vadd.xlane.f32.xlu0 %v2752
    %v2754 = vpop.xlane.xlu0 %2753
    %v2755 = vsel %vm58, %v2737, 0.0
    %2756 = vadd.xlane.f32.xlu0 %v2755
    %v2757 = vpop.xlane.xlu0 %2756
    %v2758 = vsel %vm58, %v2738, 0.0
    %2759 = vadd.xlane.f32.xlu0 %v2758
    %v2760 = vpop.xlane.xlu0 %2759
    %v2761 = vsel %vm58, %v2739, 0.0
    %2762 = vadd.xlane.f32.xlu0 %v2761
    %v2763 = vpop.xlane.xlu0 %2762
    %v2764 = vsel %vm58, %v2740, 0.0
    %2765 = vadd.xlane.f32.xlu0 %v2764
    %v2766 = vpop.xlane.xlu0 %2765
    %v2767 = vsel %vm58, %v2741, 0.0
    %2768 = vadd.xlane.f32.xlu0 %v2767
    %v2769 = vpop.xlane.xlu0 %2768
    %v2770 = vsel %vm58, %v2742, 0.0
    %2771 = vadd.xlane.f32.xlu0 %v2770
    %v2772 = vpop.xlane.xlu0 %2771
    %v2773 = vsel %vm58, %v2743, 0.0
    %2774 = vadd.xlane.f32.xlu0 %v2773
    %v2775 = vpop.xlane.xlu0 %2774
    %v2776 = vsel %vm58, %v2744, 0.0
    %2777 = vadd.xlane.f32.xlu0 %v2776
    %v2778 = vpop.xlane.xlu0 %2777
    %v2779 = vsel %vm58, %v2745, 0.0
    %2780 = vadd.xlane.f32.xlu0 %v2779
    %v2781 = vpop.xlane.xlu0 %2780
    %v2782 = vsel %vm58, %v2746, 0.0
    %2783 = vadd.xlane.f32.xlu0 %v2782
    %v2784 = vpop.xlane.xlu0 %2783
    %v2785 = vsel %vm58, %v2747, 0.0
    %2786 = vadd.xlane.f32.xlu0 %v2785
    %v2787 = vpop.xlane.xlu0 %2786
    %v2788 = vsel %vm58, %v2748, 0.0
    %2789 = vadd.xlane.f32.xlu0 %v2788
    %v2790 = vpop.xlane.xlu0 %2789
    %v2791 = vsel %vm58, %v2749, 0.0
    %2792 = vadd.xlane.f32.xlu0 %v2791
    %v2793 = vpop.xlane.xlu0 %2792
    %v2794 = vsel %vm58, %v2750, 0.0
    %2795 = vadd.xlane.f32.xlu0 %v2794
    %v2796 = vpop.xlane.xlu0 %2795
    %v2797 = vsel %vm58, %v2751, 0.0
    %2798 = vadd.xlane.f32.xlu0 %v2797
    %v2799 = vpop.xlane.xlu0 %2798
    %v2800 = vmul.f32 %v2754, %v113
    %v2801 = vmul.f32 %v2757, %v113
    %v2802 = vmul.f32 %v2760, %v113
    %v2803 = vmul.f32 %v2763, %v113
    %v2804 = vmul.f32 %v2766, %v113
    %v2805 = vmul.f32 %v2769, %v113
    %v2806 = vmul.f32 %v2772, %v113
    %v2807 = vmul.f32 %v2775, %v113
    %v2808 = vmul.f32 %v2778, %v113
    %v2809 = vmul.f32 %v2781, %v113
    %v2810 = vmul.f32 %v2784, %v113
    %v2811 = vmul.f32 %v2787, %v113
    %v2812 = vmul.f32 %v2790, %v113
    %v2813 = vmul.f32 %v2793, %v113
    %v2814 = vmul.f32 %v2796, %v113
    %v2815 = vmul.f32 %v2799, %v113
    %v2816 = vadd.f32 %v2800, 1e-06
    %v2817 = vadd.f32 %v2801, 1e-06
    %v2818 = vadd.f32 %v2802, 1e-06
    %v2819 = vadd.f32 %v2803, 1e-06
    %v2820 = vadd.f32 %v2804, 1e-06
    %v2821 = vadd.f32 %v2805, 1e-06
    %v2822 = vadd.f32 %v2806, 1e-06
    %v2823 = vadd.f32 %v2807, 1e-06
    %v2824 = vadd.f32 %v2808, 1e-06
    %v2825 = vadd.f32 %v2809, 1e-06
    %v2826 = vadd.f32 %v2810, 1e-06
    %v2827 = vadd.f32 %v2811, 1e-06
    %v2828 = vadd.f32 %v2812, 1e-06
    %v2829 = vadd.f32 %v2813, 1e-06
    %v2830 = vadd.f32 %v2814, 1e-06
    %v2831 = vadd.f32 %v2815, 1e-06
    %v2832 = vrsqrt.pop %v2816
    %v2833 = vmul.f32 %v2832, %v2816
    %v2834 = vmul.f32 %v2833, %v2832
    %v2835 = vmul.f32 0.5, %v2834
    %v2836 = vsub.f32 1.5, %v2835
    %v2837 = vmul.f32 %v2832, %v2836
    %vm2838 = vweird.f32 %v2816
    %vm2839 = vweird.f32 %v2832
    %vm2840 = vmor %vm2838, %vm2839
    %v2841 = vsel %vm2840, %v2832, %v2837
    %v2842 = vrsqrt.pop %v2817
    %v2843 = vmul.f32 %v2842, %v2817
    %v2844 = vmul.f32 %v2843, %v2842
    %v2845 = vmul.f32 0.5, %v2844
    %v2846 = vsub.f32 1.5, %v2845
    %v2847 = vmul.f32 %v2842, %v2846
    %vm2848 = vweird.f32 %v2817
    %vm2849 = vweird.f32 %v2842
    %vm2850 = vmor %vm2848, %vm2849
    %v2851 = vsel %vm2850, %v2842, %v2847
    %v2852 = vrsqrt.pop %v2818
    %v2853 = vmul.f32 %v2852, %v2818
    %v2854 = vmul.f32 %v2853, %v2852
    %v2855 = vmul.f32 0.5, %v2854
    %v2856 = vsub.f32 1.5, %v2855
    %v2857 = vmul.f32 %v2852, %v2856
    %vm2858 = vweird.f32 %v2818
    %vm2859 = vweird.f32 %v2852
    %vm2860 = vmor %vm2858, %vm2859
    %v2861 = vsel %vm2860, %v2852, %v2857
    %v2862 = vrsqrt.pop %v2819
    %v2863 = vmul.f32 %v2862, %v2819
    %v2864 = vmul.f32 %v2863, %v2862
    %v2865 = vmul.f32 0.5, %v2864
    %v2866 = vsub.f32 1.5, %v2865
    %v2867 = vmul.f32 %v2862, %v2866
    %vm2868 = vweird.f32 %v2819
    %vm2869 = vweird.f32 %v2862
    %vm2870 = vmor %vm2868, %vm2869
    %v2871 = vsel %vm2870, %v2862, %v2867
    %v2872 = vrsqrt.pop %v2820
    %v2873 = vmul.f32 %v2872, %v2820
    %v2874 = vmul.f32 %v2873, %v2872
    %v2875 = vmul.f32 0.5, %v2874
    %v2876 = vsub.f32 1.5, %v2875
    %v2877 = vmul.f32 %v2872, %v2876
    %vm2878 = vweird.f32 %v2820
    %vm2879 = vweird.f32 %v2872
    %vm2880 = vmor %vm2878, %vm2879
    %v2881 = vsel %vm2880, %v2872, %v2877
    %v2882 = vrsqrt.pop %v2821
    %v2883 = vmul.f32 %v2882, %v2821
    %v2884 = vmul.f32 %v2883, %v2882
    %v2885 = vmul.f32 0.5, %v2884
    %v2886 = vsub.f32 1.5, %v2885
    %v2887 = vmul.f32 %v2882, %v2886
    %vm2888 = vweird.f32 %v2821
    %vm2889 = vweird.f32 %v2882
    %vm2890 = vmor %vm2888, %vm2889
    %v2891 = vsel %vm2890, %v2882, %v2887
    %v2892 = vrsqrt.pop %v2822
    %v2893 = vmul.f32 %v2892, %v2822
    %v2894 = vmul.f32 %v2893, %v2892
    %v2895 = vmul.f32 0.5, %v2894
    %v2896 = vsub.f32 1.5, %v2895
    %v2897 = vmul.f32 %v2892, %v2896
    %vm2898 = vweird.f32 %v2822
    %vm2899 = vweird.f32 %v2892
    %vm2900 = vmor %vm2898, %vm2899
    %v2901 = vsel %vm2900, %v2892, %v2897
    %v2902 = vrsqrt.pop %v2823
    %v2903 = vmul.f32 %v2902, %v2823
    %v2904 = vmul.f32 %v2903, %v2902
    %v2905 = vmul.f32 0.5, %v2904
    %v2906 = vsub.f32 1.5, %v2905
    %v2907 = vmul.f32 %v2902, %v2906
    %vm2908 = vweird.f32 %v2823
    %vm2909 = vweird.f32 %v2902
    %vm2910 = vmor %vm2908, %vm2909
    %v2911 = vsel %vm2910, %v2902, %v2907
    %v2912 = vrsqrt.pop %v2824
    %v2913 = vmul.f32 %v2912, %v2824
    %v2914 = vmul.f32 %v2913, %v2912
    %v2915 = vmul.f32 0.5, %v2914
    %v2916 = vsub.f32 1.5, %v2915
    %v2917 = vmul.f32 %v2912, %v2916
    %vm2918 = vweird.f32 %v2824
    %vm2919 = vweird.f32 %v2912
    %vm2920 = vmor %vm2918, %vm2919
    %v2921 = vsel %vm2920, %v2912, %v2917
    %v2922 = vrsqrt.pop %v2825
    %v2923 = vmul.f32 %v2922, %v2825
    %v2924 = vmul.f32 %v2923, %v2922
    %v2925 = vmul.f32 0.5, %v2924
    %v2926 = vsub.f32 1.5, %v2925
    %v2927 = vmul.f32 %v2922, %v2926
    %vm2928 = vweird.f32 %v2825
    %vm2929 = vweird.f32 %v2922
    %vm2930 = vmor %vm2928, %vm2929
    %v2931 = vsel %vm2930, %v2922, %v2927
    %v2932 = vrsqrt.pop %v2826
    %v2933 = vmul.f32 %v2932, %v2826
    %v2934 = vmul.f32 %v2933, %v2932
    %v2935 = vmul.f32 0.5, %v2934
    %v2936 = vsub.f32 1.5, %v2935
    %v2937 = vmul.f32 %v2932, %v2936
    %vm2938 = vweird.f32 %v2826
    %vm2939 = vweird.f32 %v2932
    %vm2940 = vmor %vm2938, %vm2939
    %v2941 = vsel %vm2940, %v2932, %v2937
    %v2942 = vrsqrt.pop %v2827
    %v2943 = vmul.f32 %v2942, %v2827
    %v2944 = vmul.f32 %v2943, %v2942
    %v2945 = vmul.f32 0.5, %v2944
    %v2946 = vsub.f32 1.5, %v2945
    %v2947 = vmul.f32 %v2942, %v2946
    %vm2948 = vweird.f32 %v2827
    %vm2949 = vweird.f32 %v2942
    %vm2950 = vmor %vm2948, %vm2949
    %v2951 = vsel %vm2950, %v2942, %v2947
    %v2952 = vrsqrt.pop %v2828
    %v2953 = vmul.f32 %v2952, %v2828
    %v2954 = vmul.f32 %v2953, %v2952
    %v2955 = vmul.f32 0.5, %v2954
    %v2956 = vsub.f32 1.5, %v2955
    %v2957 = vmul.f32 %v2952, %v2956
    %vm2958 = vweird.f32 %v2828
    %vm2959 = vweird.f32 %v2952
    %vm2960 = vmor %vm2958, %vm2959
    %v2961 = vsel %vm2960, %v2952, %v2957
    %v2962 = vrsqrt.pop %v2829
    %v2963 = vmul.f32 %v2962, %v2829
    %v2964 = vmul.f32 %v2963, %v2962
    %v2965 = vmul.f32 0.5, %v2964
    %v2966 = vsub.f32 1.5, %v2965
    %v2967 = vmul.f32 %v2962, %v2966
    %vm2968 = vweird.f32 %v2829
    %vm2969 = vweird.f32 %v2962
    %vm2970 = vmor %vm2968, %vm2969
    %v2971 = vsel %vm2970, %v2962, %v2967
    %v2972 = vrsqrt.pop %v2830
    %v2973 = vmul.f32 %v2972, %v2830
    %v2974 = vmul.f32 %v2973, %v2972
    %v2975 = vmul.f32 0.5, %v2974
    %v2976 = vsub.f32 1.5, %v2975
    %v2977 = vmul.f32 %v2972, %v2976
    %vm2978 = vweird.f32 %v2830
    %vm2979 = vweird.f32 %v2972
    %vm2980 = vmor %vm2978, %vm2979
    %v2981 = vsel %vm2980, %v2972, %v2977
    %v2982 = vrsqrt.pop %v2831
    %v2983 = vmul.f32 %v2982, %v2831
    %v2984 = vmul.f32 %v2983, %v2982
    %v2985 = vmul.f32 0.5, %v2984
    %v2986 = vsub.f32 1.5, %v2985
    %v2987 = vmul.f32 %v2982, %v2986
    %vm2988 = vweird.f32 %v2831
    %vm2989 = vweird.f32 %v2982
    %vm2990 = vmor %vm2988, %vm2989
    %v2991 = vsel %vm2990, %v2982, %v2987
    %v2992 = vmul.f32 %v2689, %v2841
    %v2993 = vmul.f32 %v2692, %v2851
    %v2994 = vmul.f32 %v2695, %v2861
    %v2995 = vmul.f32 %v2698, %v2871
    %v2996 = vmul.f32 %v2701, %v2881
    %v2997 = vmul.f32 %v2704, %v2891
    %v2998 = vmul.f32 %v2707, %v2901
    %v2999 = vmul.f32 %v2710, %v2911
    %v3000 = vmul.f32 %v2713, %v2921
    %v3001 = vmul.f32 %v2716, %v2931
    %v3002 = vmul.f32 %v2719, %v2941
    %v3003 = vmul.f32 %v2722, %v2951
    %v3004 = vmul.f32 %v2725, %v2961
    %v3005 = vmul.f32 %v2728, %v2971
    %v3006 = vmul.f32 %v2731, %v2981
    %v3007 = vmul.f32 %v2734, %v2991
    %v3008 = vld [vmem:[%s5] sm:$0x1]
    %v3010 = vperm.slane %v3008, 0
    %v3012 = vmul.f32 %v2992, %v3010
    %v3013 = vmul.f32 %v2993, %v3010
    %v3014 = vmul.f32 %v2994, %v3010
    %v3015 = vmul.f32 %v2995, %v3010
    %v3016 = vmul.f32 %v2996, %v3010
    %v3017 = vmul.f32 %v2997, %v3010
    %v3018 = vmul.f32 %v2998, %v3010
    %v3019 = vmul.f32 %v2999, %v3010
    %v3020 = vmul.f32 %v3000, %v3010
    %v3021 = vmul.f32 %v3001, %v3010
    %v3022 = vmul.f32 %v3002, %v3010
    %v3023 = vmul.f32 %v3003, %v3010
    %v3024 = vmul.f32 %v3004, %v3010
    %v3025 = vmul.f32 %v3005, %v3010
    %v3026 = vmul.f32 %v3006, %v3010
    %v3027 = vmul.f32 %v3007, %v3010
    %3028 = vst.msk [vmem:[%s6] sm:$0xff] %vm58, %v3012
    %3029 = vst.msk [vmem:[%s6 + $0x8] sm:$0xff] %vm58, %v3013
    %3030 = vst.msk [vmem:[%s6 + $0x10] sm:$0xff] %vm58, %v3014
    %3031 = vst.msk [vmem:[%s6 + $0x18] sm:$0xff] %vm58, %v3015
    %3032 = vst.msk [vmem:[%s6 + $0x20] sm:$0xff] %vm58, %v3016
    %3033 = vst.msk [vmem:[%s6 + $0x28] sm:$0xff] %vm58, %v3017
    %3034 = vst.msk [vmem:[%s6 + $0x30] sm:$0xff] %vm58, %v3018
    %3035 = vst.msk [vmem:[%s6 + $0x38] sm:$0xff] %vm58, %v3019
    %3036 = vst.msk [vmem:[%s6 + $0x40] sm:$0xff] %vm58, %v3020
    %3037 = vst.msk [vmem:[%s6 + $0x48] sm:$0xff] %vm58, %v3021
    %3038 = vst.msk [vmem:[%s6 + $0x50] sm:$0xff] %vm58, %v3022
    %3039 = vst.msk [vmem:[%s6 + $0x58] sm:$0xff] %vm58, %v3023
    %3040 = vst.msk [vmem:[%s6 + $0x60] sm:$0xff] %vm58, %v3024
    %3041 = vst.msk [vmem:[%s6 + $0x68] sm:$0xff] %vm58, %v3025
    %3042 = vst.msk [vmem:[%s6 + $0x70] sm:$0xff] %vm58, %v3026
    %3043 = vst.msk [vmem:[%s6 + $0x78] sm:$0xff] %vm58, %v3027
    // Predicated region
    $region26: #{tpu_custom_call.1} parent=1 // pred_check
      _
    $region27: #{tpu_custom_call.1} parent=1 // pred_check_branch
      %3045 = sbr.rel (0) target = $region29
    $region28: #{tpu_custom_call.1} parent=1 // pred_region
      _
    $region29: #{tpu_custom_call.1} parent=1 // pred_fallthru
      _
    // Predicated region
    $region30: #{tpu_custom_call.1} parent=1 // pred_check
      _
    $region31: #{tpu_custom_call.1} parent=1 // pred_check_branch
      %3047 = sbr.rel (0) target = $region33
    $region32: #{tpu_custom_call.1} parent=1 // pred_region
      %3049 = vsyncadd [#allocation3], 0
      %s3051 = sshll.u32 [#allocation2], 4
      %s3052 = int_to_ptr.vmem [resolvable:$true] %s3051
      %s3053 = sshll.u32 %s7, 4
      %s3054 = int_to_ptr.hbm [resolvable:$true] %s3053
      %3056 = dma.vmem_to_hbm [thread:$0]  %s3052, 64, %s3054, [#allocation3]
    $region33: #{tpu_custom_call.1} parent=1 // pred_fallthru
      _
    // Predicated region
    $region34: #{tpu_custom_call.1} parent=1 // pred_check
      _
    $region35: #{tpu_custom_call.1} parent=1 // pred_check_branch
      %3058 = sbr.rel (0) target = $region37
    $region36: #{tpu_custom_call.1} parent=1 // pred_region
      _
    $region37: #{tpu_custom_call.1} parent=1 // pred_fallthru
      _
    // Predicated region
    $region38: #{tpu_custom_call.1} parent=1 // pred_check
      _
    $region39: #{tpu_custom_call.1} parent=1 // pred_check_branch
      %3060 = sbr.rel (0) target = $region41
    $region40: #{tpu_custom_call.1} parent=1 // pred_region
      %3062 = dma.done [#allocation3], 64
    $region41: #{tpu_custom_call.1} parent=1 // pred_fallthru
      _
    %3063 = vsyncpa [#allocation3], 1

</llo_original>
